<compile_context>
chip_gen: v7x
topology: tpu7x:2x2x1
jax: 0.10.0
libtpu: 0.0.40
codegen_flags: <defaults>
</compile_context>

<pallas_src>
import math

import jax
import jax.numpy as jnp
from jax.experimental import pallas as pl
from jax.experimental.pallas import tpu as pltpu

_MXU_DTYPE = jnp.bfloat16
_PADL = 8          # left halo columns in the padded scratch (keeps the data store aligned)
_BN_EPS = 1e-5


def _round_up(x, m):
    return (x + m - 1) // m * m


def _pick_row_block(h):
    for hb in (8, 4, 2, 1):
        if h % hb == 0:
            return hb
    return 1


def _vmem_limit_bytes():
    try:
        return int(pltpu.get_tpu_info().vmem_capacity_bytes * 3 // 4)
    except Exception:  # fall back to the compiler default budget
        return None


_VMEM_LIMIT = _vmem_limit_bytes()


# ----------------------- conv (+pool / +BN-ReLU) kernel -----------------------

def _make_conv_kernel(*, B, Cin, Cout, H, W, Wp, pool, hb, apply_act):
    """One row block of: [maxpool] -> [BN+ReLU] -> zero-pad -> 3x3 conv -> partial stats."""
    Mb = B * hb * Wp

    def kernel(*refs):
        if apply_act:
            x_ref, s_ref, b_ref, w_ref, z_ref, st_ref, pb_ref, col_ref = refs
        else:
            x_ref, w_ref, z_ref, st_ref, pb_ref, col_ref = refs
            s_ref = b_ref = None

        r0 = pl.program_id(0) * hb

        def load_rows(pr, n):
            """Pooled (and, for conv2, normalised+ReLU'd) input rows [pr, pr+n), width W."""
            if pool == 1:
                v = x_ref[:, pl.ds(pr, n), 0:W, :]
            else:
                base = pr * pool
                v = x_ref[:, pl.ds(base, n * pool), pl.ds(0, W, stride=pool), :]
                for k in range(1, pool):
                    v = jnp.maximum(
                        v, x_ref[:, pl.ds(base, n * pool), pl.ds(k, W, stride=pool), :])
                v = jnp.max(v.reshape(B, n, pool, W, Cin), axis=2)
            v = v.astype(jnp.float32)
            if apply_act:
                scale = s_ref[...].reshape(1, 1, 1, Cin)
                bias = b_ref[...].reshape(1, 1, 1, Cin)
                v = jnp.maximum(v * scale + bias, 0.0)
            return v.astype(_MXU_DTYPE)

        # Zero-padded input block (bf16) in VMEM scratch: 1 halo row top/bottom,
        # _PADL zero columns left (aligned data store), >= 1 zero column right.
        pb_ref[...] = jnp.zeros(pb_ref.shape, pb_ref.dtype)
        pb_ref[:, 1:hb + 1, _PADL:_PADL + W, :] = load_rows(r0, hb)

        @pl.when(r0 > 0)
        def _():
            pb_ref[:, 0:1, _PADL:_PADL + W, :] = load_rows(r0 - 1, 1)

        @pl.when(r0 + hb < H)
        def _():
            pb_ref[:, hb + 1:hb + 2, _PADL:_PADL + W, :] = load_rows(r0 + hb, 1)

        # im2col into a (Mb, 9*Cin) bf16 scratch, tap-major to match the weight slab.
        for dy in range(3):
            for dx in range(3):
                t = dy * 3 + dx
                tap = pb_ref[:, dy:dy + hb, _PADL - 1 + dx:_PADL - 1 + dx + Wp, :]
                col_ref[:, t * Cin:(t + 1) * Cin] = tap.reshape(Mb, Cin)

        # Single MXU matmul per conv (K = 9*Cin), f32 accumulation.
        acc = jnp.dot(col_ref[...], w_ref[...], preferred_element_type=jnp.float32)

        # Only column W of the Wp-padded width can be non-zero garbage; zero it so the
        # statistics and the stored pre-activation stay exact.
        if Wp != W:
            col_id = jax.lax.broadcasted_iota(jnp.int32, (B, hb, Wp, 1), 2).reshape(Mb, 1)
            acc = acc * (col_id < W).astype(jnp.float32)

        # Per-block BatchNorm partial statistics (sum, sum of squares).
        st_ref[:, 0:1, :] = jnp.sum(acc, axis=0, keepdims=True).reshape(1, 1, Cout)
        st_ref[:, 1:2, :] = jnp.sum(acc * acc, axis=0, keepdims=True).reshape(1, 1, Cout)

        # Pre-BN conv output for the next pass (bf16).
        z_ref[...] = acc.reshape(B, hb, Wp, Cout).astype(z_ref.dtype)

    return kernel


def _conv_call(x, w, *, pool, apply_act, scale, bias,
               B, H, W, Wp, hb, nb, Cin, Cout):
    kernel = _make_conv_kernel(B=B, Cin=Cin, Cout=Cout, H=H, W=W, Wp=Wp,
                               pool=pool, hb=hb, apply_act=apply_act)
    Ws = _PADL + Wp + 1
    Mb = B * hb * Wp
    hin, win = x.shape[1], x.shape[2]

    in_arrays = [x]
    in_specs = [pl.BlockSpec((B, hin, win, Cin), lambda i: (0, 0, 0, 0))]
    if apply_act:
        in_arrays += [scale, bias]
        in_specs += [pl.BlockSpec((1, Cin), lambda i: (0, 0)),
                     pl.BlockSpec((1, Cin), lambda i: (0, 0))]
    in_arrays.append(w)
    in_specs.append(pl.BlockSpec((9 * Cin, Cout), lambda i: (0, 0)))

    z, st = pl.pallas_call(
        kernel,
        grid=(nb,),
        in_specs=in_specs,
        out_specs=(pl.BlockSpec((B, hb, Wp, Cout), lambda i: (0, i, 0, 0)),
                   pl.BlockSpec((1, 2, Cout), lambda i: (i, 0, 0))),
        out_shape=(jax.ShapeDtypeStruct((B, H, Wp, Cout), jnp.bfloat16),
                   jax.ShapeDtypeStruct((nb, 2, Cout), jnp.float32)),
        scratch_shapes=[pltpu.VMEM((B, hb + 2, Ws, Cin), _MXU_DTYPE),
                        pltpu.VMEM((Mb, 9 * Cin), _MXU_DTYPE)],
        compiler_params=pltpu.CompilerParams(
            dimension_semantics=("parallel",),
            vmem_limit_bytes=_VMEM_LIMIT),
    )(*in_arrays)
    return z, st


# --------------------------- final BN + ReLU kernel ---------------------------

def _make_bn_relu_kernel(W, C):
    def kernel(z_ref, s_ref, b_ref, o_ref):
        v = z_ref[...].astype(jnp.float32)
        y = jnp.maximum(v * s_ref[...].reshape(1, 1, 1, C) + b_ref[...].reshape(1, 1, 1, C),
                        0.0)
        o_ref[...] = y[:, :, 0:W, :]
    return kernel


def _bn_relu_call(z, scale, bias, *, B, H, W, Wp, hb, nb, C):
    return pl.pallas_call(
        _make_bn_relu_kernel(W, C),
        grid=(nb,),
        in_specs=[pl.BlockSpec((B, hb, Wp, C), lambda i: (0, i, 0, 0)),
                  pl.BlockSpec((1, C), lambda i: (0, 0)),
                  pl.BlockSpec((1, C), lambda i: (0, 0))],
        out_specs=pl.BlockSpec((B, hb, W, C), lambda i: (0, i, 0, 0)),
        out_shape=jax.ShapeDtypeStruct((B, H, W, C), jnp.float32),
        compiler_params=pltpu.CompilerParams(
            dimension_semantics=("parallel",),
            vmem_limit_bytes=_VMEM_LIMIT),
    )(z, scale, bias)


# ------------------------------ stage / encoder ------------------------------

def _fold_bn(partials, gamma, beta, n_valid):
    """Fold per-block (sum, sumsq) into affine scale/bias (training-mode BN, eps=1e-5)."""
    tot = jnp.sum(partials, axis=0)                       # (2, C)
    mean = tot[0] / n_valid
    var = jnp.maximum(tot[1] / n_valid - mean * mean, 0.0)
    inv = jax.lax.rsqrt(var + _BN_EPS)
    scale = gamma * inv
    bias = beta - mean * scale
    return scale.reshape(1, -1), bias.reshape(1, -1)


def stage_forward(x, stage_params, pool):
    """One encoder stage: [MaxPool2d(pool)] -> DoubleConv, as three row-parallel kernels."""
    (w1, g1, b1), (w2, g2, b2) = stage_params
    B, hin, win, Cin = x.shape
    Cout = w1.shape[1]
    H, W = hin // pool, win // pool
    Wp = _round_up(W, 8)
    hb = _pick_row_block(H)
    nb = H // hb
    n_valid = float(B * H * W)

    z1, p1 = _conv_call(x, w1, pool=pool, apply_act=False, scale=None, bias=None,
                        B=B, H=H, W=W, Wp=Wp, hb=hb, nb=nb, Cin=Cin, Cout=Cout)
    s1, t1 = _fold_bn(p1, g1, b1, n_valid)
    z2, p2 = _conv_call(z1, w2, pool=1, apply_act=True, scale=s1, bias=t1,
                        B=B, H=H, W=W, Wp=Wp, hb=hb, nb=nb, Cin=Cout, Cout=Cout)
    s2, t2 = _fold_bn(p2, g2, b2, n_valid)
    return _bn_relu_call(z2, s2, t2, B=B, H=H, W=W, Wp=Wp, hb=hb, nb=nb, C=Cout)


def encoder_unet_forward(x_nchw, stages):
    """x_nchw: (B, C, H, W) as in PyTorch; returns (x, resi) in NCHW."""
    x = jnp.transpose(x_nchw, (0, 2, 3, 1)).astype(jnp.float32)   # NCHW -> NHWC
    resi = []
    n = len(stages)
    for i, (pool, params) in enumerate(stages):
        x = stage_forward(x, params, pool)
        if i != n - 1:
            resi.append(jnp.transpose(x, (0, 3, 1, 2)))           # NHWC -> NCHW
    return jnp.transpose(x, (0, 3, 1, 2)), resi


def init_encoder_params(key, n_channels, init_features, res):
    kit = iter(jax.random.split(key, 128))

    def conv_bn(cin, cout):
        w = jax.random.normal(next(kit), (3, 3, cin, cout), jnp.float32)
        w = w * (1.0 / math.sqrt(9.0 * cin))
        w2d = w.reshape(9 * cin, cout).astype(jnp.bfloat16)        # tap-major bf16 slab
        g = 1.0 + 0.1 * jax.random.normal(next(kit), (cout,), jnp.float32)
        b = 0.1 * jax.random.normal(next(kit), (cout,), jnp.float32)
        return (w2d, g, b)

    def dc_params(cin, cout):
        return [conv_bn(cin, cout), conv_bn(cout, cout)]

    # Mirrors encoder_unet.__init__
    stages = [(1, dc_params(n_channels, init_features))]           # DoubleConv
    in_ch = init_features
    for _ in range(int(math.log(res // 2, 4))):
        out_ch = 2 * in_ch
        stages.append((4, dc_params(in_ch, out_ch)))               # Down = MaxPool(4) + DoubleConv
        in_ch = out_ch
    if res == 64 or res == 256:
        out_ch = 2 * in_ch
        stages.append((2, dc_params(in_ch, out_ch)))               # Downi = MaxPool(2) + DoubleConv
    return stages


# ----------------------------- pure-JAX reference -----------------------------

def _reference_forward(x_nchw, stages):
    x = jnp.transpose(x_nchw, (0, 2, 3, 1)).astype(jnp.float32)
    resi = []
    n = len(stages)
    for i, (pool, params) in enumerate(stages):
        if pool > 1:
            b, h, w, c = x.shape
            x = jnp.max(x.reshape(b, h // pool, pool, w // pool, pool, c), axis=(2, 4))
        for (w2d, g, beta) in params:
            cin = w2d.shape[0] // 9
            cout = w2d.shape[1]
            wf = w2d.astype(jnp.float32).reshape(3, 3, cin, cout)
            z = jax.lax.conv_general_dilated(
                x, wf, window_strides=(1, 1), padding="SAME",
                dimension_numbers=("NHWC", "HWIO", "NHWC"))
            mean = jnp.mean(z, axis=(0, 1, 2))
            var = jnp.mean((z - mean) ** 2, axis=(0, 1, 2))
            x = jnp.maximum((z - mean) * jax.lax.rsqrt(var + _BN_EPS) * g + beta, 0.0)
        if i != n - 1:
            resi.append(jnp.transpose(x, (0, 3, 1, 2)))
    return jnp.transpose(x, (0, 3, 1, 2)), resi


if __name__ == "__main__":
    n_channels, init_features, res, batch = 4, 8, 16, 2
    key = jax.random.PRNGKey(0)
    kx, kp = jax.random.split(key)
    x = jax.random.normal(kx, (batch, n_channels, res, res), jnp.float32)
    stages = init_encoder_params(kp, n_channels, init_features, res)

    out, resi = encoder_unet_forward(x, stages)
    out = jax.block_until_ready(out)
    resi = [jax.block_until_ready(r) for r in resi]

    # Shape sanity (matches the PyTorch module for res=16, init_features=8).
    assert out.shape == (batch, 2 * init_features, res // 4, res // 4), out.shape
    assert len(resi) == 1 and resi[0].shape == (batch, init_features, res, res)
    assert bool(jnp.all(jnp.isfinite(out)))

    # Loose numerical check against a pure-JAX f32 reference (the kernels use bf16 MXU
    # operands, so small differences are expected).
    ref_out, ref_resi = _reference_forward(x, stages)
    for got, want in ((out, ref_out), (resi[0], ref_resi[0])):
        err = jnp.abs(got - want)
        assert float(jnp.max(err)) < 0.35 and float(jnp.mean(err)) < 0.05, (
            float(jnp.max(err)), float(jnp.mean(err)))

    print("KERNEL_OK")
</pallas_src>

<mosaic_0001>
module attributes {stable_mosaic.version = 11 : i64} {
  func.func @kernel(%arg0: i32, %arg1: memref<2x16x16x4xf32, #tpu.memory_space<vmem>>, %arg2: memref<36x8xbf16, #tpu.memory_space<vmem>>, %arg3: memref<2x8x16x8xbf16, #tpu.memory_space<vmem>>, %arg4: memref<1x2x8xf32, #tpu.memory_space<vmem>>, %arg5: memref<2x10x25x4xbf16, #tpu.memory_space<vmem>>, %arg6: memref<256x36xbf16, #tpu.memory_space<vmem>>) attributes {dimension_semantics = [#tpu.dimension_semantics<parallel>], iteration_bounds = array<i64: 2>, scalar_prefetch = 0 : i64, scratch_operands = 2 : i64, tpu.core_type = #tpu.core_type<tc>, window_params = [{pipeline_mode = #tpu.pipeline_mode<synchronous>, transform_indices = @transform_0, window_bounds = array<i64: 2, 16, 16, 4>}, {pipeline_mode = #tpu.pipeline_mode<synchronous>, transform_indices = @transform_1, window_bounds = array<i64: 36, 8>}, {transform_indices = @transform_2, window_bounds = array<i64: 2, 8, 16, 8>}, {transform_indices = @transform_3, window_bounds = array<i64: 1, 2, 8>}]} {
    %c8_i32 = arith.constant 8 : i32
    %0 = arith.muli %arg0, %c8_i32 : i32
    %cst = arith.constant 0.000000e+00 : bf16
    %1 = vector.broadcast %cst : bf16 to vector<2x10x25x4xbf16>
    %c0 = arith.constant 0 : index
    %c0_0 = arith.constant 0 : index
    %c0_1 = arith.constant 0 : index
    %c0_2 = arith.constant 0 : index
    %2 = vector.load %arg5[%c0, %c0_0, %c0_1, %c0_2] : memref<2x10x25x4xbf16, #tpu.memory_space<vmem>>, vector<2x10x25x4xbf16>
    tpu.vector_store %arg5[%c0, %c0_0, %c0_1, %c0_2], %1 {strides = array<i32>} : memref<2x10x25x4xbf16, #tpu.memory_space<vmem>>, vector<2x10x25x4xbf16>,
    %c0_3 = arith.constant 0 : index
    %3 = arith.index_cast %0 : i32 to index
    %c0_4 = arith.constant 0 : index
    %c0_5 = arith.constant 0 : index
    %4 = vector.load %arg1[%c0_3, %3, %c0_4, %c0_5] : memref<2x16x16x4xf32, #tpu.memory_space<vmem>>, vector<2x8x16x4xf32>
    %5 = arith.truncf %4 : vector<2x8x16x4xf32> to vector<2x8x16x4xbf16>
    %c0_6 = arith.constant 0 : index
    %c1 = arith.constant 1 : index
    %c8 = arith.constant 8 : index
    %c0_7 = arith.constant 0 : index
    %6 = vector.load %arg5[%c0_6, %c1, %c8, %c0_7] : memref<2x10x25x4xbf16, #tpu.memory_space<vmem>>, vector<2x8x16x4xbf16>
    tpu.vector_store %arg5[%c0_6, %c1, %c8, %c0_7], %5 {strides = array<i32>} : memref<2x10x25x4xbf16, #tpu.memory_space<vmem>>, vector<2x8x16x4xbf16>,
    %c0_i32 = arith.constant 0 : i32
    %7 = arith.cmpi sgt, %0, %c0_i32 : i32
    %8 = arith.extui %7 : i1 to i32
    %c0_i32_8 = arith.constant 0 : i32
    %9 = arith.cmpi ne, %8, %c0_i32_8 : i32
    scf.if %9 {
      %c1_i32 = arith.constant 1 : i32
      %56 = arith.subi %0, %c1_i32 : i32
      %c0_72 = arith.constant 0 : index
      %57 = arith.index_cast %56 : i32 to index
      %c0_73 = arith.constant 0 : index
      %c0_74 = arith.constant 0 : index
      %58 = vector.load %arg1[%c0_72, %57, %c0_73, %c0_74] : memref<2x16x16x4xf32, #tpu.memory_space<vmem>>, vector<2x1x16x4xf32>
      %59 = arith.truncf %58 : vector<2x1x16x4xf32> to vector<2x1x16x4xbf16>
      %c0_75 = arith.constant 0 : index
      %c0_76 = arith.constant 0 : index
      %c8_77 = arith.constant 8 : index
      %c0_78 = arith.constant 0 : index
      %60 = vector.load %arg5[%c0_75, %c0_76, %c8_77, %c0_78] : memref<2x10x25x4xbf16, #tpu.memory_space<vmem>>, vector<2x1x16x4xbf16>
      tpu.vector_store %arg5[%c0_75, %c0_76, %c8_77, %c0_78], %59 {strides = array<i32>} : memref<2x10x25x4xbf16, #tpu.memory_space<vmem>>, vector<2x1x16x4xbf16>,
    } else {
    }
    %c8_i32_9 = arith.constant 8 : i32
    %10 = arith.addi %0, %c8_i32_9 : i32
    %c16_i32 = arith.constant 16 : i32
    %11 = arith.cmpi slt, %10, %c16_i32 : i32
    %12 = arith.extui %11 : i1 to i32
    %c0_i32_10 = arith.constant 0 : i32
    %13 = arith.cmpi ne, %12, %c0_i32_10 : i32
    scf.if %13 {
      %c8_i32_72 = arith.constant 8 : i32
      %56 = arith.addi %0, %c8_i32_72 : i32
      %c0_73 = arith.constant 0 : index
      %57 = arith.index_cast %56 : i32 to index
      %c0_74 = arith.constant 0 : index
      %c0_75 = arith.constant 0 : index
      %58 = vector.load %arg1[%c0_73, %57, %c0_74, %c0_75] : memref<2x16x16x4xf32, #tpu.memory_space<vmem>>, vector<2x1x16x4xf32>
      %59 = arith.truncf %58 : vector<2x1x16x4xf32> to vector<2x1x16x4xbf16>
      %c0_76 = arith.constant 0 : index
      %c9_77 = arith.constant 9 : index
      %c8_78 = arith.constant 8 : index
      %c0_79 = arith.constant 0 : index
      %60 = vector.load %arg5[%c0_76, %c9_77, %c8_78, %c0_79] : memref<2x10x25x4xbf16, #tpu.memory_space<vmem>>, vector<2x1x16x4xbf16>
      tpu.vector_store %arg5[%c0_76, %c9_77, %c8_78, %c0_79], %59 {strides = array<i32>} : memref<2x10x25x4xbf16, #tpu.memory_space<vmem>>, vector<2x1x16x4xbf16>,
    } else {
    }
    %c0_11 = arith.constant 0 : index
    %c0_12 = arith.constant 0 : index
    %c7 = arith.constant 7 : index
    %c0_13 = arith.constant 0 : index
    %14 = vector.load %arg5[%c0_11, %c0_12, %c7, %c0_13] : memref<2x10x25x4xbf16, #tpu.memory_space<vmem>>, vector<2x8x16x4xbf16>
    %15 = vector.shape_cast %14 : vector<2x8x16x4xbf16> to vector<256x4xbf16>
    %c0_14 = arith.constant 0 : index
    %c0_15 = arith.constant 0 : index
    %16 = vector.load %arg6[%c0_14, %c0_15] : memref<256x36xbf16, #tpu.memory_space<vmem>>, vector<256x4xbf16>
    tpu.vector_store %arg6[%c0_14, %c0_15], %15 {strides = array<i32>} : memref<256x36xbf16, #tpu.memory_space<vmem>>, vector<256x4xbf16>,
    %c0_16 = arith.constant 0 : index
    %c0_17 = arith.constant 0 : index
    %c8_18 = arith.constant 8 : index
    %c0_19 = arith.constant 0 : index
    %17 = vector.load %arg5[%c0_16, %c0_17, %c8_18, %c0_19] : memref<2x10x25x4xbf16, #tpu.memory_space<vmem>>, vector<2x8x16x4xbf16>
    %18 = vector.shape_cast %17 : vector<2x8x16x4xbf16> to vector<256x4xbf16>
    %c0_20 = arith.constant 0 : index
    %c4 = arith.constant 4 : index
    %19 = vector.load %arg6[%c0_20, %c4] : memref<256x36xbf16, #tpu.memory_space<vmem>>, vector<256x4xbf16>
    tpu.vector_store %arg6[%c0_20, %c4], %18 {strides = array<i32>} : memref<256x36xbf16, #tpu.memory_space<vmem>>, vector<256x4xbf16>,
    %c0_21 = arith.constant 0 : index
    %c0_22 = arith.constant 0 : index
    %c9 = arith.constant 9 : index
    %c0_23 = arith.constant 0 : index
    %20 = vector.load %arg5[%c0_21, %c0_22, %c9, %c0_23] : memref<2x10x25x4xbf16, #tpu.memory_space<vmem>>, vector<2x8x16x4xbf16>
    %21 = vector.shape_cast %20 : vector<2x8x16x4xbf16> to vector<256x4xbf16>
    %c0_24 = arith.constant 0 : index
    %c8_25 = arith.constant 8 : index
    %22 = vector.load %arg6[%c0_24, %c8_25] : memref<256x36xbf16, #tpu.memory_space<vmem>>, vector<256x4xbf16>
    tpu.vector_store %arg6[%c0_24, %c8_25], %21 {strides = array<i32>} : memref<256x36xbf16, #tpu.memory_space<vmem>>, vector<256x4xbf16>,
    %c0_26 = arith.constant 0 : index
    %c1_27 = arith.constant 1 : index
    %c7_28 = arith.constant 7 : index
    %c0_29 = arith.constant 0 : index
    %23 = vector.load %arg5[%c0_26, %c1_27, %c7_28, %c0_29] : memref<2x10x25x4xbf16, #tpu.memory_space<vmem>>, vector<2x8x16x4xbf16>
    %24 = vector.shape_cast %23 : vector<2x8x16x4xbf16> to vector<256x4xbf16>
    %c0_30 = arith.constant 0 : index
    %c12 = arith.constant 12 : index
    %25 = vector.load %arg6[%c0_30, %c12] : memref<256x36xbf16, #tpu.memory_space<vmem>>, vector<256x4xbf16>
    tpu.vector_store %arg6[%c0_30, %c12], %24 {strides = array<i32>} : memref<256x36xbf16, #tpu.memory_space<vmem>>, vector<256x4xbf16>,
    %c0_31 = arith.constant 0 : index
    %c1_32 = arith.constant 1 : index
    %c8_33 = arith.constant 8 : index
    %c0_34 = arith.constant 0 : index
    %26 = vector.load %arg5[%c0_31, %c1_32, %c8_33, %c0_34] : memref<2x10x25x4xbf16, #tpu.memory_space<vmem>>, vector<2x8x16x4xbf16>
    %27 = vector.shape_cast %26 : vector<2x8x16x4xbf16> to vector<256x4xbf16>
    %c0_35 = arith.constant 0 : index
    %c16 = arith.constant 16 : index
    %28 = vector.load %arg6[%c0_35, %c16] : memref<256x36xbf16, #tpu.memory_space<vmem>>, vector<256x4xbf16>
    tpu.vector_store %arg6[%c0_35, %c16], %27 {strides = array<i32>} : memref<256x36xbf16, #tpu.memory_space<vmem>>, vector<256x4xbf16>,
    %c0_36 = arith.constant 0 : index
    %c1_37 = arith.constant 1 : index
    %c9_38 = arith.constant 9 : index
    %c0_39 = arith.constant 0 : index
    %29 = vector.load %arg5[%c0_36, %c1_37, %c9_38, %c0_39] : memref<2x10x25x4xbf16, #tpu.memory_space<vmem>>, vector<2x8x16x4xbf16>
    %30 = vector.shape_cast %29 : vector<2x8x16x4xbf16> to vector<256x4xbf16>
    %c0_40 = arith.constant 0 : index
    %c20 = arith.constant 20 : index
    %31 = vector.load %arg6[%c0_40, %c20] : memref<256x36xbf16, #tpu.memory_space<vmem>>, vector<256x4xbf16>
    tpu.vector_store %arg6[%c0_40, %c20], %30 {strides = array<i32>} : memref<256x36xbf16, #tpu.memory_space<vmem>>, vector<256x4xbf16>,
    %c0_41 = arith.constant 0 : index
    %c2 = arith.constant 2 : index
    %c7_42 = arith.constant 7 : index
    %c0_43 = arith.constant 0 : index
    %32 = vector.load %arg5[%c0_41, %c2, %c7_42, %c0_43] : memref<2x10x25x4xbf16, #tpu.memory_space<vmem>>, vector<2x8x16x4xbf16>
    %33 = vector.shape_cast %32 : vector<2x8x16x4xbf16> to vector<256x4xbf16>
    %c0_44 = arith.constant 0 : index
    %c24 = arith.constant 24 : index
    %34 = vector.load %arg6[%c0_44, %c24] : memref<256x36xbf16, #tpu.memory_space<vmem>>, vector<256x4xbf16>
    tpu.vector_store %arg6[%c0_44, %c24], %33 {strides = array<i32>} : memref<256x36xbf16, #tpu.memory_space<vmem>>, vector<256x4xbf16>,
    %c0_45 = arith.constant 0 : index
    %c2_46 = arith.constant 2 : index
    %c8_47 = arith.constant 8 : index
    %c0_48 = arith.constant 0 : index
    %35 = vector.load %arg5[%c0_45, %c2_46, %c8_47, %c0_48] : memref<2x10x25x4xbf16, #tpu.memory_space<vmem>>, vector<2x8x16x4xbf16>
    %36 = vector.shape_cast %35 : vector<2x8x16x4xbf16> to vector<256x4xbf16>
    %c0_49 = arith.constant 0 : index
    %c28 = arith.constant 28 : index
    %37 = vector.load %arg6[%c0_49, %c28] : memref<256x36xbf16, #tpu.memory_space<vmem>>, vector<256x4xbf16>
    tpu.vector_store %arg6[%c0_49, %c28], %36 {strides = array<i32>} : memref<256x36xbf16, #tpu.memory_space<vmem>>, vector<256x4xbf16>,
    %c0_50 = arith.constant 0 : index
    %c2_51 = arith.constant 2 : index
    %c9_52 = arith.constant 9 : index
    %c0_53 = arith.constant 0 : index
    %38 = vector.load %arg5[%c0_50, %c2_51, %c9_52, %c0_53] : memref<2x10x25x4xbf16, #tpu.memory_space<vmem>>, vector<2x8x16x4xbf16>
    %39 = vector.shape_cast %38 : vector<2x8x16x4xbf16> to vector<256x4xbf16>
    %c0_54 = arith.constant 0 : index
    %c32 = arith.constant 32 : index
    %40 = vector.load %arg6[%c0_54, %c32] : memref<256x36xbf16, #tpu.memory_space<vmem>>, vector<256x4xbf16>
    tpu.vector_store %arg6[%c0_54, %c32], %39 {strides = array<i32>} : memref<256x36xbf16, #tpu.memory_space<vmem>>, vector<256x4xbf16>,
    %c0_55 = arith.constant 0 : index
    %c0_56 = arith.constant 0 : index
    %41 = vector.load %arg6[%c0_55, %c0_56] : memref<256x36xbf16, #tpu.memory_space<vmem>>, vector<256x36xbf16>
    %c0_57 = arith.constant 0 : index
    %c0_58 = arith.constant 0 : index
    %42 = vector.load %arg2[%c0_57, %c0_58] : memref<36x8xbf16, #tpu.memory_space<vmem>>, vector<36x8xbf16>
    %cst_59 = arith.constant dense<0.000000e+00> : vector<256x8xf32>
    %43 = tpu.matmul %41, %42, %cst_59 {dimension_numbers = #tpu.dot_dimension_numbers<[1], [0], [0], [1], [0, 0, 1, 1], [], []>} : vector<256x36xbf16>, vector<36x8xbf16>, vector<256x8xf32> -> vector<256x8xf32>
    %cst_60 = arith.constant dense<0.000000e+00> : vector<8xf32>
    %44 = vector.multi_reduction <add>, %43, %cst_60 [0] : vector<256x8xf32> to vector<8xf32>
    %45 = vector.shape_cast %44 : vector<8xf32> to vector<1x8xf32>
    %46 = vector.shape_cast %45 : vector<1x8xf32> to vector<1x1x8xf32>
    %c0_61 = arith.constant 0 : index
    %c0_62 = arith.constant 0 : index
    %c0_63 = arith.constant 0 : index
    %47 = vector.load %arg4[%c0_61, %c0_62, %c0_63] : memref<1x2x8xf32, #tpu.memory_space<vmem>>, vector<1x1x8xf32>
    tpu.vector_store %arg4[%c0_61, %c0_62, %c0_63], %46 {strides = array<i32>} : memref<1x2x8xf32, #tpu.memory_space<vmem>>, vector<1x1x8xf32>,
    %48 = arith.mulf %43, %43 : vector<256x8xf32>
    %cst_64 = arith.constant dense<0.000000e+00> : vector<8xf32>
    %49 = vector.multi_reduction <add>, %48, %cst_64 [0] : vector<256x8xf32> to vector<8xf32>
    %50 = vector.shape_cast %49 : vector<8xf32> to vector<1x8xf32>
    %51 = vector.shape_cast %50 : vector<1x8xf32> to vector<1x1x8xf32>
    %c0_65 = arith.constant 0 : index
    %c1_66 = arith.constant 1 : index
    %c0_67 = arith.constant 0 : index
    %52 = vector.load %arg4[%c0_65, %c1_66, %c0_67] : memref<1x2x8xf32, #tpu.memory_space<vmem>>, vector<1x1x8xf32>
    tpu.vector_store %arg4[%c0_65, %c1_66, %c0_67], %51 {strides = array<i32>} : memref<1x2x8xf32, #tpu.memory_space<vmem>>, vector<1x1x8xf32>,
    %53 = vector.shape_cast %43 : vector<256x8xf32> to vector<2x8x16x8xf32>
    %54 = arith.truncf %53 : vector<2x8x16x8xf32> to vector<2x8x16x8xbf16>
    %c0_68 = arith.constant 0 : index
    %c0_69 = arith.constant 0 : index
    %c0_70 = arith.constant 0 : index
    %c0_71 = arith.constant 0 : index
    %55 = vector.load %arg3[%c0_68, %c0_69, %c0_70, %c0_71] : memref<2x8x16x8xbf16, #tpu.memory_space<vmem>>, vector<2x8x16x8xbf16>
    tpu.vector_store %arg3[%c0_68, %c0_69, %c0_70, %c0_71], %54 {strides = array<i32>} : memref<2x8x16x8xbf16, #tpu.memory_space<vmem>>, vector<2x8x16x8xbf16>,
    return
  }
  func.func @transform_0(%arg0: i32) -> (i32, i32, i32, i32) {
    %c0_i32 = arith.constant 0 : i32
    %c0_i32_0 = arith.constant 0 : i32
    %c0_i32_1 = arith.constant 0 : i32
    %c0_i32_2 = arith.constant 0 : i32
    %c0_i32_3 = arith.constant 0 : i32
    return %c0_i32, %c0_i32_0, %c0_i32_1, %c0_i32_2 : i32, i32, i32, i32
  }
  func.func @transform_1(%arg0: i32) -> (i32, i32) {
    %c0_i32 = arith.constant 0 : i32
    %c0_i32_0 = arith.constant 0 : i32
    %c0_i32_1 = arith.constant 0 : i32
    return %c0_i32, %c0_i32_0 : i32, i32
  }
  func.func @transform_2(%arg0: i32) -> (i32, i32, i32, i32) {
    %c0_i32 = arith.constant 0 : i32
    %c0_i32_0 = arith.constant 0 : i32
    %c0_i32_1 = arith.constant 0 : i32
    %c0_i32_2 = arith.constant 0 : i32
    return %c0_i32, %arg0, %c0_i32_0, %c0_i32_1 : i32, i32, i32, i32
  }
  func.func @transform_3(%arg0: i32) -> (i32, i32, i32) {
    %c0_i32 = arith.constant 0 : i32
    %c0_i32_0 = arith.constant 0 : i32
    %c0_i32_1 = arith.constant 0 : i32
    return %arg0, %c0_i32, %c0_i32_0 : i32, i32, i32
  }
}

</mosaic_0001>

<llo_original>
// kernel: tpu_custom_call.1
$region0: #{tpu_custom_call.1}
  #allocation0 [shape = 'u32[]', space=smem, size = 0x4, offset = 0x4, fixed_abs, tag = 'smem constant byte address 0x4 - core index']
  #allocation1 [shape = 'u32[144,128]{1,0:T(1,128)}', space=vmem, size = 0x12000, scoped, tag = 'internal scratch']
  #allocation2 [shape = 'bf16[2,10,25,4]{3,2,1,0:T(8,128)(2,1)}', space=vmem, size = 0x28000, scoped, tag = 'scratch operand']
  #allocation3 [shape = 'bf16[256,36]{1,0:T(16,128)(2,1)}', space=vmem, size = 0x10000, scoped, tag = 'scratch operand']
  %s0 = inlined_call_operand.vmem [shape: f32[2,16,16,4], index: 0, kind: input, shape index: {}]
  %s1 = inlined_call_operand.vmem [shape: bf16[36,8], index: 1, kind: input, shape index: {}]
  %s2 = inlined_call_operand.vmem [shape: bf16[2,16,16,8], index: 2, kind: output, shape index: {0}]
  %s3 = inlined_call_operand.hbm [shape: f32[2,2,8], index: 3, kind: output, shape index: {1}]
  %4 = xla_tuple %s2, %s3
  %s5 = sld [smem:[#allocation0]]
  $region94: #{tpu_custom_call.1} parent=0
    _
  %s7 = ssub.s32 1, %s5
  %s8 = scalar_select 0, %s7, %s5
  $region1: #{tpu_custom_call.1} parent=0
    #allocation4 [shape = 'u8[131072]{0}', space=vmem, size = 0x20000, scoped, tag = 'output window, operand 0']
    #allocation5 [shape = 'u8[2048]{0}', space=vmem, size = 0x800, scoped, tag = 'output window, operand 1']
    #allocation6 [shape = 's32[2]{0}', space=sflag, size = 0x8, scoped, tag = 'scoped memory for tpu_custom_call.1']
    %9 = vsyncpa [#allocation6], 0
    %s10 = scalar_lea.sflag [#allocation6], 1
    %11 = vsyncpa %s10, 0
    loop: start=0, step=1, limit=4
    $region2: #{tpu_custom_call.1} parent=1 // loop_pre_header
      _
    $region3: #{tpu_custom_call.1} parent=1 // loop_header
      %s13 = sphi 0, %s17
      %p14 = scmp.ge.s32.totalorder %s13, 4
      %s21 = sphi 0, %s21
      %s23 = sphi 0, %s21
      %s24 = sphi 0, %s23
      %s38 = sphi 0, %s24
      %s42 = sphi 0, %s42
      %s44 = sphi 0, %s42
      %s45 = sphi 0, %s44
      %s59 = sphi 0, %s45
      %s65 = sphi 0, %s67
      %s68 = sphi 0, %s65
      %s69 = sphi 0, %s68
      %s85 = sphi 0, %s69
      %s91 = sphi 0, %s93
      %s94 = sphi 0, %s91
      %s95 = sphi 0, %s94
      %s111 = sphi 0, %s95
    $region4: #{tpu_custom_call.1} parent=1 // loop_header_branch
      %16 = sbr.rel (%p14) target = $region8
    $region5: #{tpu_custom_call.1} parent=1 // loop_body
      %s18 = ssub.s32 %s13, 1
      %s19 = ssub.s32 %s13, 2
      %s20 = sadd.s32 %s13, 1
      %s22 = sadd.s32 %s21, 1
      %p25 = scmp.eq.s32.totalorder %s13, 1
      %p26 = scmp.ne.s32.totalorder %s21, %s23
      %p27 = scmp.eq.s32.totalorder %s13, 0
      %p28 = por %p26, %p27
      %p29 = scmp.ne.s32.totalorder %s21, %s23
      %p30 = scmp.eq.s32.totalorder %s18, 1
      %p31 = por %p29, %p30
      %p32 = scmp.ne.s32.totalorder %s23, %s24
      %p33 = scmp.eq.s32.totalorder %s18, 0
      %p34 = por %p32, %p33
      %p35 = scmp.ne.s32.totalorder %s23, %s24
      %p36 = scmp.eq.s32.totalorder %s19, 1
      %p37 = por %p35, %p36
      %p39 = scmp.ne.s32.totalorder %s24, %s38
      %p40 = scmp.eq.s32.totalorder %s19, 0
      %p41 = por %p39, %p40
      %s43 = sadd.s32 %s42, 1
      %p46 = scmp.eq.s32.totalorder %s13, 1
      %p47 = scmp.ne.s32.totalorder %s42, %s44
      %p48 = scmp.eq.s32.totalorder %s13, 0
      %p49 = por %p47, %p48
      %p50 = scmp.ne.s32.totalorder %s42, %s44
      %p51 = scmp.eq.s32.totalorder %s18, 1
      %p52 = por %p50, %p51
      %p53 = scmp.ne.s32.totalorder %s44, %s45
      %p54 = scmp.eq.s32.totalorder %s18, 0
      %p55 = por %p53, %p54
      %p56 = scmp.ne.s32.totalorder %s44, %s45
      %p57 = scmp.eq.s32.totalorder %s19, 1
      %p58 = por %p56, %p57
      %p60 = scmp.ne.s32.totalorder %s45, %s59
      %p61 = scmp.eq.s32.totalorder %s19, 0
      %p62 = por %p60, %p61
      %s63 = ssub.s32 %s13, %s20
      %p64 = scmp.eq.s32.totalorder %s63, 0
      %s66 = sadd.s32 %s65, 1
      %s67 = scalar_select %p64, %s65, %s66
      %p70 = pneg %p64
      %p71 = scmp.eq.s32.totalorder %s13, 1
      %p72 = por %p70, %p71
      %p73 = scmp.ne.s32.totalorder %s65, %s68
      %p74 = scmp.eq.s32.totalorder %s13, 0
      %p75 = por %p73, %p74
      %p76 = scmp.ne.s32.totalorder %s65, %s68
      %p77 = scmp.eq.s32.totalorder %s18, 1
      %p78 = por %p76, %p77
      %p79 = scmp.ne.s32.totalorder %s68, %s69
      %p80 = scmp.eq.s32.totalorder %s18, 0
      %p81 = por %p79, %p80
      %p82 = scmp.ne.s32.totalorder %s68, %s69
      %p83 = scmp.eq.s32.totalorder %s19, 1
      %p84 = por %p82, %p83
      %p86 = scmp.ne.s32.totalorder %s69, %s85
      %p87 = scmp.eq.s32.totalorder %s19, 0
      %p88 = por %p86, %p87
      %s89 = ssub.s32 %s13, %s20
      %p90 = scmp.eq.s32.totalorder %s89, 0
      %s92 = sadd.s32 %s91, 1
      %s93 = scalar_select %p90, %s91, %s92
      %p96 = pneg %p90
      %p97 = scmp.eq.s32.totalorder %s13, 1
      %p98 = por %p96, %p97
      %p99 = scmp.ne.s32.totalorder %s91, %s94
      %p100 = scmp.eq.s32.totalorder %s13, 0
      %p101 = por %p99, %p100
      %p102 = scmp.ne.s32.totalorder %s91, %s94
      %p103 = scmp.eq.s32.totalorder %s18, 1
      %p104 = por %p102, %p103
      %p105 = scmp.ne.s32.totalorder %s94, %s95
      %p106 = scmp.eq.s32.totalorder %s18, 0
      %p107 = por %p105, %p106
      %p108 = scmp.ne.s32.totalorder %s94, %s95
      %p109 = scmp.eq.s32.totalorder %s19, 1
      %p110 = por %p108, %p109
      %p112 = scmp.ne.s32.totalorder %s95, %s111
      %p113 = scmp.eq.s32.totalorder %s19, 0
      %p114 = por %p112, %p113
      %p115 = scmp.le.s32.totalorder 1, %s13
      %p116 = scmp.lt.s32.totalorder %s13, 3
      %p117 = pnand %p115, %p116
      %p118 = pneg %p117
      // Predicated region
      $region9: #{tpu_custom_call.1} parent=5 // pred_check
        _
      $region10: #{tpu_custom_call.1} parent=5 // pred_check_branch
        %120 = sbr.rel (%p117) target = $region12
      $region11: #{tpu_custom_call.1} parent=5 // pred_region
        %s121 = ssub.s32 %s13, 1
        // Predicated region
        $region13: #{tpu_custom_call.1} parent=11 // pred_check
          %p122 = pneg %p34
        $region14: #{tpu_custom_call.1} parent=11 // pred_check_branch
          %124 = sbr.rel (%p122) target = $region16
        $region15: #{tpu_custom_call.1} parent=11 // pred_region
          _
        $region16: #{tpu_custom_call.1} parent=11 // pred_fallthru
          _
        // Predicated region
        $region17: #{tpu_custom_call.1} parent=11 // pred_check
          %p125 = pneg %p55
        $region18: #{tpu_custom_call.1} parent=11 // pred_check_branch
          %127 = sbr.rel (%p125) target = $region20
        $region19: #{tpu_custom_call.1} parent=11 // pred_region
          _
        $region20: #{tpu_custom_call.1} parent=11 // pred_fallthru
          _
      $region12: #{tpu_custom_call.1} parent=5 // pred_fallthru
        _
      %p128 = scmp.lt.s32.totalorder %s13, 2
      // Predicated region
      $region21: #{tpu_custom_call.1} parent=5 // pred_check
        %p129 = pneg %p128
      $region22: #{tpu_custom_call.1} parent=5 // pred_check_branch
        %131 = sbr.rel (%p129) target = $region24
      $region23: #{tpu_custom_call.1} parent=5 // pred_region
        _
      $region24: #{tpu_custom_call.1} parent=5 // pred_fallthru
        _
      %p132 = scmp.le.s32.totalorder 1, %s13
      %p133 = scmp.lt.s32.totalorder %s13, 3
      %p134 = pnand %p132, %p133
      %p135 = pneg %p134
      // Predicated region
      $region25: #{tpu_custom_call.1} parent=5 // pred_check
        _
      $region26: #{tpu_custom_call.1} parent=5 // pred_check_branch
        %137 = sbr.rel (%p134) target = $region28
      $region27: #{tpu_custom_call.1} parent=5 // pred_region
        %s138 = ssub.s32 %s13, 1
        %p139 = pneg %p34
        %p140 = pneg %p31
        %p141 = pneg %p55
        %p142 = pneg %p52
        %p143 = pneg %p81
        %p144 = pneg %p78
        %s145 = sand.u32 %s68, 1
        %s146 = sand.u32 %s68, 1
        %s147 = smul.addr %s146, 128
        %s148 = scalar_lea.vmem [#allocation4], %s147
        %p149 = pneg %p107
        %p150 = pneg %p104
        %s151 = sand.u32 %s94, 1
        %s152 = scalar_lea.sflag [#allocation6], %s151
        %s153 = sand.u32 %s94, 1
        %s154 = smul.addr %s153, 2
        %s155 = scalar_lea.vmem [#allocation5], %s154
        %s156 = smul.u32 8, %s18
        %s158 = smul.u32 %s18, 8
        %vm159 = vcmask 27648
        %160 = vst.msk [vmem:[#allocation2] sm:$0xf] %vm159, 0
        %161 = vst.msk [vmem:[#allocation2 + $0x4] sm:$0xf] %vm159, 0
        %162 = vst.msk [vmem:[#allocation2 + $0x8] sm:$0xf] %vm159, 0
        %vm163 = vcmask 24576
        %vm164 = vsmask.f32 256
        %vm165 = vmand %vm163, %vm164
        %v166 = vld [vmem:[#allocation2 + $0xc] sm:$0x1]
        %v167 = vsel %vm165, 0, %v166
        %168 = vst [vmem:[#allocation2 + $0xc] sm:$0x1] %v167
        %169 = vst.msk [vmem:[#allocation2 + $0x10] sm:$0xf] %vm159, 0
        %170 = vst.msk [vmem:[#allocation2 + $0x14] sm:$0xf] %vm159, 0
        %171 = vst.msk [vmem:[#allocation2 + $0x18] sm:$0xf] %vm159, 0
        %v172 = vld [vmem:[#allocation2 + $0x1c] sm:$0x1]
        %v173 = vsel %vm165, 0, %v172
        %174 = vst [vmem:[#allocation2 + $0x1c] sm:$0x1] %v173
        %175 = vst.msk [vmem:[#allocation2 + $0x20] sm:$0xf] %vm159, 0
        %176 = vst.msk [vmem:[#allocation2 + $0x24] sm:$0xf] %vm159, 0
        %177 = vst.msk [vmem:[#allocation2 + $0x28] sm:$0xf] %vm159, 0
        %v178 = vld [vmem:[#allocation2 + $0x2c] sm:$0x1]
        %v179 = vsel %vm165, 0, %v178
        %180 = vst [vmem:[#allocation2 + $0x2c] sm:$0x1] %v179
        %181 = vst.msk [vmem:[#allocation2 + $0x30] sm:$0xf] %vm159, 0
        %182 = vst.msk [vmem:[#allocation2 + $0x34] sm:$0xf] %vm159, 0
        %183 = vst.msk [vmem:[#allocation2 + $0x38] sm:$0xf] %vm159, 0
        %v184 = vld [vmem:[#allocation2 + $0x3c] sm:$0x1]
        %v185 = vsel %vm165, 0, %v184
        %186 = vst [vmem:[#allocation2 + $0x3c] sm:$0x1] %v185
        %187 = vst.msk [vmem:[#allocation2 + $0x40] sm:$0xf] %vm159, 0
        %188 = vst.msk [vmem:[#allocation2 + $0x44] sm:$0xf] %vm159, 0
        %189 = vst.msk [vmem:[#allocation2 + $0x48] sm:$0xf] %vm159, 0
        %v190 = vld [vmem:[#allocation2 + $0x4c] sm:$0x1]
        %v191 = vsel %vm165, 0, %v190
        %192 = vst [vmem:[#allocation2 + $0x4c] sm:$0x1] %v191
        %193 = vst.msk [vmem:[#allocation2 + $0x50] sm:$0xf] %vm159, 0
        %194 = vst.msk [vmem:[#allocation2 + $0x54] sm:$0xf] %vm159, 0
        %195 = vst.msk [vmem:[#allocation2 + $0x58] sm:$0xf] %vm159, 0
        %v196 = vld [vmem:[#allocation2 + $0x5c] sm:$0x1]
        %v197 = vsel %vm165, 0, %v196
        %198 = vst [vmem:[#allocation2 + $0x5c] sm:$0x1] %v197
        %199 = vst.msk [vmem:[#allocation2 + $0x60] sm:$0xf] %vm159, 0
        %200 = vst.msk [vmem:[#allocation2 + $0x64] sm:$0xf] %vm159, 0
        %201 = vst.msk [vmem:[#allocation2 + $0x68] sm:$0xf] %vm159, 0
        %v202 = vld [vmem:[#allocation2 + $0x6c] sm:$0x1]
        %v203 = vsel %vm165, 0, %v202
        %204 = vst [vmem:[#allocation2 + $0x6c] sm:$0x1] %v203
        %205 = vst.msk [vmem:[#allocation2 + $0x70] sm:$0xf] %vm159, 0
        %206 = vst.msk [vmem:[#allocation2 + $0x74] sm:$0xf] %vm159, 0
        %207 = vst.msk [vmem:[#allocation2 + $0x78] sm:$0xf] %vm159, 0
        %v208 = vld [vmem:[#allocation2 + $0x7c] sm:$0x1]
        %v209 = vsel %vm165, 0, %v208
        %210 = vst [vmem:[#allocation2 + $0x7c] sm:$0x1] %v209
        %211 = vst.msk [vmem:[#allocation2 + $0x80] sm:$0xf] %vm159, 0
        %212 = vst.msk [vmem:[#allocation2 + $0x84] sm:$0xf] %vm159, 0
        %213 = vst.msk [vmem:[#allocation2 + $0x88] sm:$0xf] %vm159, 0
        %v214 = vld [vmem:[#allocation2 + $0x8c] sm:$0x1]
        %v215 = vsel %vm165, 0, %v214
        %216 = vst [vmem:[#allocation2 + $0x8c] sm:$0x1] %v215
        %217 = vst.msk [vmem:[#allocation2 + $0x90] sm:$0xf] %vm159, 0
        %218 = vst.msk [vmem:[#allocation2 + $0x94] sm:$0xf] %vm159, 0
        %219 = vst.msk [vmem:[#allocation2 + $0x98] sm:$0xf] %vm159, 0
        %v220 = vld [vmem:[#allocation2 + $0x9c] sm:$0x1]
        %v221 = vsel %vm165, 0, %v220
        %222 = vst [vmem:[#allocation2 + $0x9c] sm:$0x1] %v221
        %223 = vst.msk [vmem:[#allocation2 + $0xa0] sm:$0xf] %vm159, 0
        %224 = vst.msk [vmem:[#allocation2 + $0xa4] sm:$0xf] %vm159, 0
        %225 = vst.msk [vmem:[#allocation2 + $0xa8] sm:$0xf] %vm159, 0
        %v226 = vld [vmem:[#allocation2 + $0xac] sm:$0x1]
        %v227 = vsel %vm165, 0, %v226
        %228 = vst [vmem:[#allocation2 + $0xac] sm:$0x1] %v227
        %229 = vst.msk [vmem:[#allocation2 + $0xb0] sm:$0xf] %vm159, 0
        %230 = vst.msk [vmem:[#allocation2 + $0xb4] sm:$0xf] %vm159, 0
        %231 = vst.msk [vmem:[#allocation2 + $0xb8] sm:$0xf] %vm159, 0
        %v232 = vld [vmem:[#allocation2 + $0xbc] sm:$0x1]
        %v233 = vsel %vm165, 0, %v232
        %234 = vst [vmem:[#allocation2 + $0xbc] sm:$0x1] %v233
        %235 = vst.msk [vmem:[#allocation2 + $0xc0] sm:$0xf] %vm159, 0
        %236 = vst.msk [vmem:[#allocation2 + $0xc4] sm:$0xf] %vm159, 0
        %237 = vst.msk [vmem:[#allocation2 + $0xc8] sm:$0xf] %vm159, 0
        %v238 = vld [vmem:[#allocation2 + $0xcc] sm:$0x1]
        %v239 = vsel %vm165, 0, %v238
        %240 = vst [vmem:[#allocation2 + $0xcc] sm:$0x1] %v239
        %241 = vst.msk [vmem:[#allocation2 + $0xd0] sm:$0xf] %vm159, 0
        %242 = vst.msk [vmem:[#allocation2 + $0xd4] sm:$0xf] %vm159, 0
        %243 = vst.msk [vmem:[#allocation2 + $0xd8] sm:$0xf] %vm159, 0
        %v244 = vld [vmem:[#allocation2 + $0xdc] sm:$0x1]
        %v245 = vsel %vm165, 0, %v244
        %246 = vst [vmem:[#allocation2 + $0xdc] sm:$0x1] %v245
        %247 = vst.msk [vmem:[#allocation2 + $0xe0] sm:$0xf] %vm159, 0
        %248 = vst.msk [vmem:[#allocation2 + $0xe4] sm:$0xf] %vm159, 0
        %249 = vst.msk [vmem:[#allocation2 + $0xe8] sm:$0xf] %vm159, 0
        %v250 = vld [vmem:[#allocation2 + $0xec] sm:$0x1]
        %v251 = vsel %vm165, 0, %v250
        %252 = vst [vmem:[#allocation2 + $0xec] sm:$0x1] %v251
        %253 = vst.msk [vmem:[#allocation2 + $0xf0] sm:$0xf] %vm159, 0
        %254 = vst.msk [vmem:[#allocation2 + $0xf4] sm:$0xf] %vm159, 0
        %255 = vst.msk [vmem:[#allocation2 + $0xf8] sm:$0xf] %vm159, 0
        %v256 = vld [vmem:[#allocation2 + $0xfc] sm:$0x1]
        %v257 = vsel %vm165, 0, %v256
        %258 = vst [vmem:[#allocation2 + $0xfc] sm:$0x1] %v257
        %259 = vst.msk [vmem:[#allocation2 + $0x100] sm:$0xf] %vm159, 0
        %260 = vst.msk [vmem:[#allocation2 + $0x104] sm:$0xf] %vm159, 0
        %261 = vst.msk [vmem:[#allocation2 + $0x108] sm:$0xf] %vm159, 0
        %v262 = vld [vmem:[#allocation2 + $0x10c] sm:$0x1]
        %v263 = vsel %vm165, 0, %v262
        %264 = vst [vmem:[#allocation2 + $0x10c] sm:$0x1] %v263
        %265 = vst.msk [vmem:[#allocation2 + $0x110] sm:$0xf] %vm159, 0
        %266 = vst.msk [vmem:[#allocation2 + $0x114] sm:$0xf] %vm159, 0
        %267 = vst.msk [vmem:[#allocation2 + $0x118] sm:$0xf] %vm159, 0
        %v268 = vld [vmem:[#allocation2 + $0x11c] sm:$0x1]
        %v269 = vsel %vm165, 0, %v268
        %270 = vst [vmem:[#allocation2 + $0x11c] sm:$0x1] %v269
        %271 = vst.msk [vmem:[#allocation2 + $0x120] sm:$0xf] %vm159, 0
        %272 = vst.msk [vmem:[#allocation2 + $0x124] sm:$0xf] %vm159, 0
        %273 = vst.msk [vmem:[#allocation2 + $0x128] sm:$0xf] %vm159, 0
        %v274 = vld [vmem:[#allocation2 + $0x12c] sm:$0x1]
        %v275 = vsel %vm165, 0, %v274
        %276 = vst [vmem:[#allocation2 + $0x12c] sm:$0x1] %v275
        %277 = vst.msk [vmem:[#allocation2 + $0x130] sm:$0xf] %vm159, 0
        %278 = vst.msk [vmem:[#allocation2 + $0x134] sm:$0xf] %vm159, 0
        %279 = vst.msk [vmem:[#allocation2 + $0x138] sm:$0xf] %vm159, 0
        %v280 = vld [vmem:[#allocation2 + $0x13c] sm:$0x1]
        %v281 = vsel %vm165, 0, %v280
        %282 = vst [vmem:[#allocation2 + $0x13c] sm:$0x1] %v281
        %s283 = smul.u32 %s158, 16
        %s284 = scalar_lea.vmem %s0, %s283
        %v285 = vld [vmem:[%s284] sm:$0xff]
        %v286 = vld [vmem:[%s284 + $0x8] sm:$0xff]
        %v287 = vld [vmem:[%s284 + $0x10] sm:$0xff]
        %v288 = vld [vmem:[%s284 + $0x18] sm:$0xff]
        %v289 = vld [vmem:[%s284 + $0x20] sm:$0xff]
        %v290 = vld [vmem:[%s284 + $0x28] sm:$0xff]
        %v291 = vld [vmem:[%s284 + $0x30] sm:$0xff]
        %v292 = vld [vmem:[%s284 + $0x38] sm:$0xff]
        %v293 = vld [vmem:[%s284 + $0x40] sm:$0xff]
        %v294 = vld [vmem:[%s284 + $0x48] sm:$0xff]
        %v295 = vld [vmem:[%s284 + $0x50] sm:$0xff]
        %v296 = vld [vmem:[%s284 + $0x58] sm:$0xff]
        %v297 = vld [vmem:[%s284 + $0x60] sm:$0xff]
        %v298 = vld [vmem:[%s284 + $0x68] sm:$0xff]
        %v299 = vld [vmem:[%s284 + $0x70] sm:$0xff]
        %v300 = vld [vmem:[%s284 + $0x78] sm:$0xff]
        %v301 = vld [vmem:[%s284 + $0x100] sm:$0xff]
        %v302 = vld [vmem:[%s284 + $0x108] sm:$0xff]
        %v303 = vld [vmem:[%s284 + $0x110] sm:$0xff]
        %v304 = vld [vmem:[%s284 + $0x118] sm:$0xff]
        %v305 = vld [vmem:[%s284 + $0x120] sm:$0xff]
        %v306 = vld [vmem:[%s284 + $0x128] sm:$0xff]
        %v307 = vld [vmem:[%s284 + $0x130] sm:$0xff]
        %v308 = vld [vmem:[%s284 + $0x138] sm:$0xff]
        %v309 = vld [vmem:[%s284 + $0x140] sm:$0xff]
        %v310 = vld [vmem:[%s284 + $0x148] sm:$0xff]
        %v311 = vld [vmem:[%s284 + $0x150] sm:$0xff]
        %v312 = vld [vmem:[%s284 + $0x158] sm:$0xff]
        %v313 = vld [vmem:[%s284 + $0x160] sm:$0xff]
        %v314 = vld [vmem:[%s284 + $0x168] sm:$0xff]
        %v315 = vld [vmem:[%s284 + $0x170] sm:$0xff]
        %v316 = vld [vmem:[%s284 + $0x178] sm:$0xff]
        %v317 = vpack.c.bf16 %v286, %v285
        %v318 = vpack.c.bf16 %v288, %v287
        %v319 = vpack.c.bf16 %v290, %v289
        %v320 = vpack.c.bf16 %v292, %v291
        %v321 = vpack.c.bf16 %v294, %v293
        %v322 = vpack.c.bf16 %v296, %v295
        %v323 = vpack.c.bf16 %v298, %v297
        %v324 = vpack.c.bf16 %v300, %v299
        %v325 = vpack.c.bf16 %v302, %v301
        %v326 = vpack.c.bf16 %v304, %v303
        %v327 = vpack.c.bf16 %v306, %v305
        %v328 = vpack.c.bf16 %v308, %v307
        %v329 = vpack.c.bf16 %v310, %v309
        %v330 = vpack.c.bf16 %v312, %v311
        %v331 = vpack.c.bf16 %v314, %v313
        %v332 = vpack.c.bf16 %v316, %v315
        %v349 = vunpack.c.l.b16 %v317
        %v350 = vunpack.c.h.b16 %v317
        %v351 = vunpack.c.l.b16 %v318
        %v352 = vunpack.c.h.b16 %v318
        %v353 = vunpack.c.l.b16 %v319
        %v354 = vunpack.c.h.b16 %v319
        %v355 = vunpack.c.l.b16 %v320
        %v356 = vunpack.c.h.b16 %v320
        %v357 = vunpack.c.l.b16 %v321
        %v358 = vunpack.c.h.b16 %v321
        %v359 = vunpack.c.l.b16 %v322
        %v360 = vunpack.c.h.b16 %v322
        %v361 = vunpack.c.l.b16 %v323
        %v362 = vunpack.c.h.b16 %v323
        %v363 = vunpack.c.l.b16 %v324
        %v364 = vunpack.c.h.b16 %v324
        %v365 = vunpack.c.l.b16 %v325
        %v366 = vunpack.c.h.b16 %v325
        %v367 = vunpack.c.l.b16 %v326
        %v368 = vunpack.c.h.b16 %v326
        %v369 = vunpack.c.l.b16 %v327
        %v370 = vunpack.c.h.b16 %v327
        %v371 = vunpack.c.l.b16 %v328
        %v372 = vunpack.c.h.b16 %v328
        %v373 = vunpack.c.l.b16 %v329
        %v374 = vunpack.c.h.b16 %v329
        %v375 = vunpack.c.l.b16 %v330
        %v376 = vunpack.c.h.b16 %v330
        %v377 = vunpack.c.l.b16 %v331
        %v378 = vunpack.c.h.b16 %v331
        %v379 = vunpack.c.l.b16 %v332
        %v380 = vunpack.c.h.b16 %v332
        %v381 = vpack.c.b16 %v349, %v349
        %v382 = vpack.c.b16 %v350, %v350
        %v383 = vpack.c.b16 %v351, %v351
        %v384 = vpack.c.b16 %v352, %v352
        %v385 = vpack.c.b16 %v353, %v353
        %v386 = vpack.c.b16 %v354, %v354
        %v387 = vpack.c.b16 %v355, %v355
        %v388 = vpack.c.b16 %v356, %v356
        %v389 = vpack.c.b16 %v357, %v357
        %v390 = vpack.c.b16 %v358, %v358
        %v391 = vpack.c.b16 %v359, %v359
        %v392 = vpack.c.b16 %v360, %v360
        %v393 = vpack.c.b16 %v361, %v361
        %v394 = vpack.c.b16 %v362, %v362
        %v395 = vpack.c.b16 %v363, %v363
        %v396 = vpack.c.b16 %v364, %v364
        %v397 = vpack.c.b16 %v365, %v365
        %v398 = vpack.c.b16 %v366, %v366
        %v399 = vpack.c.b16 %v367, %v367
        %v400 = vpack.c.b16 %v368, %v368
        %v401 = vpack.c.b16 %v369, %v369
        %v402 = vpack.c.b16 %v370, %v370
        %v403 = vpack.c.b16 %v371, %v371
        %v404 = vpack.c.b16 %v372, %v372
        %v405 = vpack.c.b16 %v373, %v373
        %v406 = vpack.c.b16 %v374, %v374
        %v407 = vpack.c.b16 %v375, %v375
        %v408 = vpack.c.b16 %v376, %v376
        %v409 = vpack.c.b16 %v377, %v377
        %v410 = vpack.c.b16 %v378, %v378
        %v411 = vpack.c.b16 %v379, %v379
        %v412 = vpack.c.b16 %v380, %v380
        %s445 = scalar_lea.vmem [#allocation2], 16
        %446 = vst.msk [vmem:[%s445 + $0x4] sm:$0xf] %vm159, %v381
        %447 = vst.msk [vmem:[%s445 + $0x8] sm:$0xf] %vm159, %v382
        %448 = vst.msk [vmem:[%s445 + $0x14] sm:$0xf] %vm159, %v383
        %449 = vst.msk [vmem:[%s445 + $0x18] sm:$0xf] %vm159, %v384
        %450 = vst.msk [vmem:[%s445 + $0x24] sm:$0xf] %vm159, %v385
        %451 = vst.msk [vmem:[%s445 + $0x28] sm:$0xf] %vm159, %v386
        %452 = vst.msk [vmem:[%s445 + $0x34] sm:$0xf] %vm159, %v387
        %453 = vst.msk [vmem:[%s445 + $0x38] sm:$0xf] %vm159, %v388
        %454 = vst.msk [vmem:[%s445 + $0x44] sm:$0xf] %vm159, %v389
        %455 = vst.msk [vmem:[%s445 + $0x48] sm:$0xf] %vm159, %v390
        %456 = vst.msk [vmem:[%s445 + $0x54] sm:$0xf] %vm159, %v391
        %457 = vst.msk [vmem:[%s445 + $0x58] sm:$0xf] %vm159, %v392
        %458 = vst.msk [vmem:[%s445 + $0x64] sm:$0xf] %vm159, %v393
        %459 = vst.msk [vmem:[%s445 + $0x68] sm:$0xf] %vm159, %v394
        %460 = vst.msk [vmem:[%s445 + $0x74] sm:$0xf] %vm159, %v395
        %461 = vst.msk [vmem:[%s445 + $0x78] sm:$0xf] %vm159, %v396
        %462 = vst.msk [vmem:[%s445 + $0xa4] sm:$0xf] %vm159, %v397
        %463 = vst.msk [vmem:[%s445 + $0xa8] sm:$0xf] %vm159, %v398
        %464 = vst.msk [vmem:[%s445 + $0xb4] sm:$0xf] %vm159, %v399
        %465 = vst.msk [vmem:[%s445 + $0xb8] sm:$0xf] %vm159, %v400
        %466 = vst.msk [vmem:[%s445 + $0xc4] sm:$0xf] %vm159, %v401
        %467 = vst.msk [vmem:[%s445 + $0xc8] sm:$0xf] %vm159, %v402
        %468 = vst.msk [vmem:[%s445 + $0xd4] sm:$0xf] %vm159, %v403
        %469 = vst.msk [vmem:[%s445 + $0xd8] sm:$0xf] %vm159, %v404
        %470 = vst.msk [vmem:[%s445 + $0xe4] sm:$0xf] %vm159, %v405
        %471 = vst.msk [vmem:[%s445 + $0xe8] sm:$0xf] %vm159, %v406
        %472 = vst.msk [vmem:[%s445 + $0xf4] sm:$0xf] %vm159, %v407
        %473 = vst.msk [vmem:[%s445 + $0xf8] sm:$0xf] %vm159, %v408
        %474 = vst.msk [vmem:[%s445 + $0x104] sm:$0xf] %vm159, %v409
        %475 = vst.msk [vmem:[%s445 + $0x108] sm:$0xf] %vm159, %v410
        %476 = vst.msk [vmem:[%s445 + $0x114] sm:$0xf] %vm159, %v411
        %477 = vst.msk [vmem:[%s445 + $0x118] sm:$0xf] %vm159, %v412
        %p478 = scmp.gt.s32.totalorder %s158, 0
        // Predicated region
        $region29: #{tpu_custom_call.1} parent=27 // pred_check
          %p479 = pneg %p478
        $region30: #{tpu_custom_call.1} parent=27 // pred_check_branch
          %481 = sbr.rel (%p479) target = $region32
        $region31: #{tpu_custom_call.1} parent=27 // pred_region
          %s482 = ssub.s32 %s158, 1
          %s483 = smul.u32 %s482, 16
          %s484 = scalar_lea.vmem %s0, %s483
          %v485 = vld [vmem:[%s484] sm:$0xff]
          %v486 = vld [vmem:[%s484 + $0x8] sm:$0xff]
          %v487 = vld [vmem:[%s484 + $0x100] sm:$0xff]
          %v488 = vld [vmem:[%s484 + $0x108] sm:$0xff]
          %v489 = vpack.c.bf16 %v486, %v485
          %v490 = vpack.c.bf16 %v488, %v487
          %v493 = vunpack.c.l.b16 %v489
          %v494 = vunpack.c.h.b16 %v489
          %v495 = vunpack.c.l.b16 %v490
          %v496 = vunpack.c.h.b16 %v490
          %v497 = vpack.c.b16 %v493, %v493
          %v498 = vpack.c.b16 %v494, %v494
          %v499 = vpack.c.b16 %v495, %v495
          %v500 = vpack.c.b16 %v496, %v496
          %505 = vst.msk [vmem:[#allocation2 + $0x4] sm:$0xf] %vm159, %v497
          %506 = vst.msk [vmem:[#allocation2 + $0x8] sm:$0xf] %vm159, %v498
          %507 = vst.msk [vmem:[#allocation2 + $0xa4] sm:$0xf] %vm159, %v499
          %508 = vst.msk [vmem:[#allocation2 + $0xa8] sm:$0xf] %vm159, %v500
        $region32: #{tpu_custom_call.1} parent=27 // pred_fallthru
          _
        %s509 = sadd.s32 %s158, 8
        %p510 = scmp.lt.s32.totalorder %s509, 16
        // Predicated region
        $region33: #{tpu_custom_call.1} parent=27 // pred_check
          %p511 = pneg %p510
        $region34: #{tpu_custom_call.1} parent=27 // pred_check_branch
          %513 = sbr.rel (%p511) target = $region36
        $region35: #{tpu_custom_call.1} parent=27 // pred_region
          %s514 = smul.u32 %s509, 16
          %s515 = scalar_lea.vmem %s0, %s514
          %v516 = vld [vmem:[%s515] sm:$0xff]
          %v517 = vld [vmem:[%s515 + $0x8] sm:$0xff]
          %v518 = vld [vmem:[%s515 + $0x100] sm:$0xff]
          %v519 = vld [vmem:[%s515 + $0x108] sm:$0xff]
          %v520 = vpack.c.bf16 %v517, %v516
          %v521 = vpack.c.bf16 %v519, %v518
          %v524 = vunpack.c.l.b16 %v520
          %v525 = vunpack.c.h.b16 %v520
          %v526 = vunpack.c.l.b16 %v521
          %v527 = vunpack.c.h.b16 %v521
          %v528 = vpack.c.b16 %v524, %v524
          %v529 = vpack.c.b16 %v525, %v525
          %v530 = vpack.c.b16 %v526, %v526
          %v531 = vpack.c.b16 %v527, %v527
          %s536 = scalar_lea.vmem [#allocation2], 144
          %537 = vst.msk [vmem:[%s536 + $0x4] sm:$0xf] %vm159, %v528
          %538 = vst.msk [vmem:[%s536 + $0x8] sm:$0xf] %vm159, %v529
          %539 = vst.msk [vmem:[%s536 + $0xa4] sm:$0xf] %vm159, %v530
          %540 = vst.msk [vmem:[%s536 + $0xa8] sm:$0xf] %vm159, %v531
        $region36: #{tpu_custom_call.1} parent=27 // pred_fallthru
          _
        %v541 = vld [vmem:[#allocation2] sm:$0x8]
        %v542 = vld [vmem:[#allocation2 + $0x4] sm:$0xf]
        %v543 = vld [vmem:[#allocation2 + $0x8] sm:$0xf]
        %v544 = vld [vmem:[#allocation2 + $0x10] sm:$0x8]
        %v545 = vld [vmem:[#allocation2 + $0x14] sm:$0xf]
        %v546 = vld [vmem:[#allocation2 + $0x18] sm:$0xf]
        %v547 = vld [vmem:[#allocation2 + $0x20] sm:$0x8]
        %v548 = vld [vmem:[#allocation2 + $0x24] sm:$0xf]
        %v549 = vld [vmem:[#allocation2 + $0x28] sm:$0xf]
        %v550 = vld [vmem:[#allocation2 + $0x30] sm:$0x8]
        %v551 = vld [vmem:[#allocation2 + $0x34] sm:$0xf]
        %v552 = vld [vmem:[#allocation2 + $0x38] sm:$0xf]
        %v553 = vld [vmem:[#allocation2 + $0x40] sm:$0x8]
        %v554 = vld [vmem:[#allocation2 + $0x44] sm:$0xf]
        %v555 = vld [vmem:[#allocation2 + $0x48] sm:$0xf]
        %v556 = vld [vmem:[#allocation2 + $0x50] sm:$0x8]
        %v557 = vld [vmem:[#allocation2 + $0x54] sm:$0xf]
        %v558 = vld [vmem:[#allocation2 + $0x58] sm:$0xf]
        %v559 = vld [vmem:[#allocation2 + $0x60] sm:$0x8]
        %v560 = vld [vmem:[#allocation2 + $0x64] sm:$0xf]
        %v561 = vld [vmem:[#allocation2 + $0x68] sm:$0xf]
        %v562 = vld [vmem:[#allocation2 + $0x70] sm:$0x8]
        %v563 = vld [vmem:[#allocation2 + $0x74] sm:$0xf]
        %v564 = vld [vmem:[#allocation2 + $0x78] sm:$0xf]
        %v565 = vld [vmem:[#allocation2 + $0xa0] sm:$0x8]
        %v566 = vld [vmem:[#allocation2 + $0xa4] sm:$0xf]
        %v567 = vld [vmem:[#allocation2 + $0xa8] sm:$0xf]
        %v568 = vld [vmem:[#allocation2 + $0xb0] sm:$0x8]
        %v569 = vld [vmem:[#allocation2 + $0xb4] sm:$0xf]
        %v570 = vld [vmem:[#allocation2 + $0xb8] sm:$0xf]
        %v571 = vld [vmem:[#allocation2 + $0xc0] sm:$0x8]
        %v572 = vld [vmem:[#allocation2 + $0xc4] sm:$0xf]
        %v573 = vld [vmem:[#allocation2 + $0xc8] sm:$0xf]
        %v574 = vld [vmem:[#allocation2 + $0xd0] sm:$0x8]
        %v575 = vld [vmem:[#allocation2 + $0xd4] sm:$0xf]
        %v576 = vld [vmem:[#allocation2 + $0xd8] sm:$0xf]
        %v577 = vld [vmem:[#allocation2 + $0xe0] sm:$0x8]
        %v578 = vld [vmem:[#allocation2 + $0xe4] sm:$0xf]
        %v579 = vld [vmem:[#allocation2 + $0xe8] sm:$0xf]
        %v580 = vld [vmem:[#allocation2 + $0xf0] sm:$0x8]
        %v581 = vld [vmem:[#allocation2 + $0xf4] sm:$0xf]
        %v582 = vld [vmem:[#allocation2 + $0xf8] sm:$0xf]
        %v583 = vld [vmem:[#allocation2 + $0x100] sm:$0x8]
        %v584 = vld [vmem:[#allocation2 + $0x104] sm:$0xf]
        %v585 = vld [vmem:[#allocation2 + $0x108] sm:$0xf]
        %v586 = vld [vmem:[#allocation2 + $0x110] sm:$0x8]
        %v587 = vld [vmem:[#allocation2 + $0x114] sm:$0xf]
        %v588 = vld [vmem:[#allocation2 + $0x118] sm:$0xf]
        %vm589 = vsmask.f32 4368
        %vm590 = vmor %vm164, %vm589
        %v592 = vshrl.u32 %v541, 16
        %v594 = vrot.slane %v592, 7
        %v595 = vrot.slane %v594, 4
        %v597 = vshrl.u32 %v542, 16
        %v599 = vrot.slane %v597, 7
        %v600 = vshll.u32 %v542, 16
        %v602 = vor.u32 %v599, %v600
        %v603 = vsel %vm590, %v595, %v602
        %v604 = vrot.slane %v599, 4
        %v606 = vshrl.u32 %v543, 16
        %v608 = vrot.slane %v606, 7
        %v609 = vshll.u32 %v543, 16
        %v611 = vor.u32 %v608, %v609
        %v612 = vsel %vm590, %v604, %v611
        %v614 = vshrl.u32 %v544, 16
        %v616 = vrot.slane %v614, 7
        %v617 = vrot.slane %v616, 4
        %v619 = vshrl.u32 %v545, 16
        %v621 = vrot.slane %v619, 7
        %v622 = vshll.u32 %v545, 16
        %v624 = vor.u32 %v621, %v622
        %v625 = vsel %vm590, %v617, %v624
        %v626 = vrot.slane %v621, 4
        %v628 = vshrl.u32 %v546, 16
        %v630 = vrot.slane %v628, 7
        %v631 = vshll.u32 %v546, 16
        %v633 = vor.u32 %v630, %v631
        %v634 = vsel %vm590, %v626, %v633
        %v636 = vshrl.u32 %v547, 16
        %v638 = vrot.slane %v636, 7
        %v639 = vrot.slane %v638, 4
        %v641 = vshrl.u32 %v548, 16
        %v643 = vrot.slane %v641, 7
        %v644 = vshll.u32 %v548, 16
        %v646 = vor.u32 %v643, %v644
        %v647 = vsel %vm590, %v639, %v646
        %v648 = vrot.slane %v643, 4
        %v650 = vshrl.u32 %v549, 16
        %v652 = vrot.slane %v650, 7
        %v653 = vshll.u32 %v549, 16
        %v655 = vor.u32 %v652, %v653
        %v656 = vsel %vm590, %v648, %v655
        %v658 = vshrl.u32 %v550, 16
        %v660 = vrot.slane %v658, 7
        %v661 = vrot.slane %v660, 4
        %v663 = vshrl.u32 %v551, 16
        %v665 = vrot.slane %v663, 7
        %v666 = vshll.u32 %v551, 16
        %v668 = vor.u32 %v665, %v666
        %v669 = vsel %vm590, %v661, %v668
        %v670 = vrot.slane %v665, 4
        %v672 = vshrl.u32 %v552, 16
        %v674 = vrot.slane %v672, 7
        %v675 = vshll.u32 %v552, 16
        %v677 = vor.u32 %v674, %v675
        %v678 = vsel %vm590, %v670, %v677
        %v680 = vshrl.u32 %v553, 16
        %v682 = vrot.slane %v680, 7
        %v683 = vrot.slane %v682, 4
        %v685 = vshrl.u32 %v554, 16
        %v687 = vrot.slane %v685, 7
        %v688 = vshll.u32 %v554, 16
        %v690 = vor.u32 %v687, %v688
        %v691 = vsel %vm590, %v683, %v690
        %v692 = vrot.slane %v687, 4
        %v694 = vshrl.u32 %v555, 16
        %v696 = vrot.slane %v694, 7
        %v697 = vshll.u32 %v555, 16
        %v699 = vor.u32 %v696, %v697
        %v700 = vsel %vm590, %v692, %v699
        %v702 = vshrl.u32 %v556, 16
        %v704 = vrot.slane %v702, 7
        %v705 = vrot.slane %v704, 4
        %v707 = vshrl.u32 %v557, 16
        %v709 = vrot.slane %v707, 7
        %v710 = vshll.u32 %v557, 16
        %v712 = vor.u32 %v709, %v710
        %v713 = vsel %vm590, %v705, %v712
        %v714 = vrot.slane %v709, 4
        %v716 = vshrl.u32 %v558, 16
        %v718 = vrot.slane %v716, 7
        %v719 = vshll.u32 %v558, 16
        %v721 = vor.u32 %v718, %v719
        %v722 = vsel %vm590, %v714, %v721
        %v724 = vshrl.u32 %v559, 16
        %v726 = vrot.slane %v724, 7
        %v727 = vrot.slane %v726, 4
        %v729 = vshrl.u32 %v560, 16
        %v731 = vrot.slane %v729, 7
        %v732 = vshll.u32 %v560, 16
        %v734 = vor.u32 %v731, %v732
        %v735 = vsel %vm590, %v727, %v734
        %v736 = vrot.slane %v731, 4
        %v738 = vshrl.u32 %v561, 16
        %v740 = vrot.slane %v738, 7
        %v741 = vshll.u32 %v561, 16
        %v743 = vor.u32 %v740, %v741
        %v744 = vsel %vm590, %v736, %v743
        %v746 = vshrl.u32 %v562, 16
        %v748 = vrot.slane %v746, 7
        %v749 = vrot.slane %v748, 4
        %v751 = vshrl.u32 %v563, 16
        %v753 = vrot.slane %v751, 7
        %v754 = vshll.u32 %v563, 16
        %v756 = vor.u32 %v753, %v754
        %v757 = vsel %vm590, %v749, %v756
        %v758 = vrot.slane %v753, 4
        %v760 = vshrl.u32 %v564, 16
        %v762 = vrot.slane %v760, 7
        %v763 = vshll.u32 %v564, 16
        %v765 = vor.u32 %v762, %v763
        %v766 = vsel %vm590, %v758, %v765
        %v768 = vshrl.u32 %v565, 16
        %v770 = vrot.slane %v768, 7
        %v771 = vrot.slane %v770, 4
        %v773 = vshrl.u32 %v566, 16
        %v775 = vrot.slane %v773, 7
        %v776 = vshll.u32 %v566, 16
        %v778 = vor.u32 %v775, %v776
        %v779 = vsel %vm590, %v771, %v778
        %v780 = vrot.slane %v775, 4
        %v782 = vshrl.u32 %v567, 16
        %v784 = vrot.slane %v782, 7
        %v785 = vshll.u32 %v567, 16
        %v787 = vor.u32 %v784, %v785
        %v788 = vsel %vm590, %v780, %v787
        %v790 = vshrl.u32 %v568, 16
        %v792 = vrot.slane %v790, 7
        %v793 = vrot.slane %v792, 4
        %v795 = vshrl.u32 %v569, 16
        %v797 = vrot.slane %v795, 7
        %v798 = vshll.u32 %v569, 16
        %v800 = vor.u32 %v797, %v798
        %v801 = vsel %vm590, %v793, %v800
        %v802 = vrot.slane %v797, 4
        %v804 = vshrl.u32 %v570, 16
        %v806 = vrot.slane %v804, 7
        %v807 = vshll.u32 %v570, 16
        %v809 = vor.u32 %v806, %v807
        %v810 = vsel %vm590, %v802, %v809
        %v812 = vshrl.u32 %v571, 16
        %v814 = vrot.slane %v812, 7
        %v815 = vrot.slane %v814, 4
        %v817 = vshrl.u32 %v572, 16
        %v819 = vrot.slane %v817, 7
        %v820 = vshll.u32 %v572, 16
        %v822 = vor.u32 %v819, %v820
        %v823 = vsel %vm590, %v815, %v822
        %v824 = vrot.slane %v819, 4
        %v826 = vshrl.u32 %v573, 16
        %v828 = vrot.slane %v826, 7
        %v829 = vshll.u32 %v573, 16
        %v831 = vor.u32 %v828, %v829
        %v832 = vsel %vm590, %v824, %v831
        %v834 = vshrl.u32 %v574, 16
        %v836 = vrot.slane %v834, 7
        %v837 = vrot.slane %v836, 4
        %v839 = vshrl.u32 %v575, 16
        %v841 = vrot.slane %v839, 7
        %v842 = vshll.u32 %v575, 16
        %v844 = vor.u32 %v841, %v842
        %v845 = vsel %vm590, %v837, %v844
        %v846 = vrot.slane %v841, 4
        %v848 = vshrl.u32 %v576, 16
        %v850 = vrot.slane %v848, 7
        %v851 = vshll.u32 %v576, 16
        %v853 = vor.u32 %v850, %v851
        %v854 = vsel %vm590, %v846, %v853
        %v856 = vshrl.u32 %v577, 16
        %v858 = vrot.slane %v856, 7
        %v859 = vrot.slane %v858, 4
        %v861 = vshrl.u32 %v578, 16
        %v863 = vrot.slane %v861, 7
        %v864 = vshll.u32 %v578, 16
        %v866 = vor.u32 %v863, %v864
        %v867 = vsel %vm590, %v859, %v866
        %v868 = vrot.slane %v863, 4
        %v870 = vshrl.u32 %v579, 16
        %v872 = vrot.slane %v870, 7
        %v873 = vshll.u32 %v579, 16
        %v875 = vor.u32 %v872, %v873
        %v876 = vsel %vm590, %v868, %v875
        %v878 = vshrl.u32 %v580, 16
        %v880 = vrot.slane %v878, 7
        %v881 = vrot.slane %v880, 4
        %v883 = vshrl.u32 %v581, 16
        %v885 = vrot.slane %v883, 7
        %v886 = vshll.u32 %v581, 16
        %v888 = vor.u32 %v885, %v886
        %v889 = vsel %vm590, %v881, %v888
        %v890 = vrot.slane %v885, 4
        %v892 = vshrl.u32 %v582, 16
        %v894 = vrot.slane %v892, 7
        %v895 = vshll.u32 %v582, 16
        %v897 = vor.u32 %v894, %v895
        %v898 = vsel %vm590, %v890, %v897
        %v900 = vshrl.u32 %v583, 16
        %v902 = vrot.slane %v900, 7
        %v903 = vrot.slane %v902, 4
        %v905 = vshrl.u32 %v584, 16
        %v907 = vrot.slane %v905, 7
        %v908 = vshll.u32 %v584, 16
        %v910 = vor.u32 %v907, %v908
        %v911 = vsel %vm590, %v903, %v910
        %v912 = vrot.slane %v907, 4
        %v914 = vshrl.u32 %v585, 16
        %v916 = vrot.slane %v914, 7
        %v917 = vshll.u32 %v585, 16
        %v919 = vor.u32 %v916, %v917
        %v920 = vsel %vm590, %v912, %v919
        %v922 = vshrl.u32 %v586, 16
        %v924 = vrot.slane %v922, 7
        %v925 = vrot.slane %v924, 4
        %v927 = vshrl.u32 %v587, 16
        %v929 = vrot.slane %v927, 7
        %v930 = vshll.u32 %v587, 16
        %v932 = vor.u32 %v929, %v930
        %v933 = vsel %vm590, %v925, %v932
        %v934 = vrot.slane %v929, 4
        %v936 = vshrl.u32 %v588, 16
        %v938 = vrot.slane %v936, 7
        %v939 = vshll.u32 %v588, 16
        %v941 = vor.u32 %v938, %v939
        %v942 = vsel %vm590, %v934, %v941
        %v943 = vunpack.c.l.b16 %v603
        %v944 = vunpack.c.l.b16 %v612
        %v945 = vunpack.c.l.b16 %v625
        %v946 = vunpack.c.l.b16 %v634
        %v947 = vunpack.c.l.b16 %v647
        %v948 = vunpack.c.l.b16 %v656
        %v949 = vunpack.c.l.b16 %v669
        %v950 = vunpack.c.l.b16 %v678
        %v951 = vunpack.c.l.b16 %v691
        %v952 = vunpack.c.l.b16 %v700
        %v953 = vunpack.c.l.b16 %v713
        %v954 = vunpack.c.l.b16 %v722
        %v955 = vunpack.c.l.b16 %v735
        %v956 = vunpack.c.l.b16 %v744
        %v957 = vunpack.c.l.b16 %v757
        %v958 = vunpack.c.l.b16 %v766
        %v959 = vunpack.c.l.b16 %v779
        %v960 = vunpack.c.l.b16 %v788
        %v961 = vunpack.c.l.b16 %v801
        %v962 = vunpack.c.l.b16 %v810
        %v963 = vunpack.c.l.b16 %v823
        %v964 = vunpack.c.l.b16 %v832
        %v965 = vunpack.c.l.b16 %v845
        %v966 = vunpack.c.l.b16 %v854
        %v967 = vunpack.c.l.b16 %v867
        %v968 = vunpack.c.l.b16 %v876
        %v969 = vunpack.c.l.b16 %v889
        %v970 = vunpack.c.l.b16 %v898
        %v971 = vunpack.c.l.b16 %v911
        %v972 = vunpack.c.l.b16 %v920
        %v973 = vunpack.c.l.b16 %v933
        %v974 = vunpack.c.l.b16 %v942
        %v975 = vpack.c.b16 %v944, %v943
        %v976 = vpack.c.b16 %v946, %v945
        %v977 = vpack.c.b16 %v948, %v947
        %v978 = vpack.c.b16 %v950, %v949
        %v979 = vpack.c.b16 %v952, %v951
        %v980 = vpack.c.b16 %v954, %v953
        %v981 = vpack.c.b16 %v956, %v955
        %v982 = vpack.c.b16 %v958, %v957
        %v983 = vpack.c.b16 %v960, %v959
        %v984 = vpack.c.b16 %v962, %v961
        %v985 = vpack.c.b16 %v964, %v963
        %v986 = vpack.c.b16 %v966, %v965
        %v987 = vpack.c.b16 %v968, %v967
        %v988 = vpack.c.b16 %v970, %v969
        %v989 = vpack.c.b16 %v972, %v971
        %v990 = vpack.c.b16 %v974, %v973
        %vm1007 = vcmask 31744
        %1008 = vst.msk [vmem:[#allocation3] sm:$0xff] %vm1007, %v975
        %1009 = vst.msk [vmem:[#allocation3 + $0x8] sm:$0xff] %vm1007, %v976
        %1010 = vst.msk [vmem:[#allocation3 + $0x10] sm:$0xff] %vm1007, %v977
        %1011 = vst.msk [vmem:[#allocation3 + $0x18] sm:$0xff] %vm1007, %v978
        %1012 = vst.msk [vmem:[#allocation3 + $0x20] sm:$0xff] %vm1007, %v979
        %1013 = vst.msk [vmem:[#allocation3 + $0x28] sm:$0xff] %vm1007, %v980
        %1014 = vst.msk [vmem:[#allocation3 + $0x30] sm:$0xff] %vm1007, %v981
        %1015 = vst.msk [vmem:[#allocation3 + $0x38] sm:$0xff] %vm1007, %v982
        %1016 = vst.msk [vmem:[#allocation3 + $0x40] sm:$0xff] %vm1007, %v983
        %1017 = vst.msk [vmem:[#allocation3 + $0x48] sm:$0xff] %vm1007, %v984
        %1018 = vst.msk [vmem:[#allocation3 + $0x50] sm:$0xff] %vm1007, %v985
        %1019 = vst.msk [vmem:[#allocation3 + $0x58] sm:$0xff] %vm1007, %v986
        %1020 = vst.msk [vmem:[#allocation3 + $0x60] sm:$0xff] %vm1007, %v987
        %1021 = vst.msk [vmem:[#allocation3 + $0x68] sm:$0xff] %vm1007, %v988
        %1022 = vst.msk [vmem:[#allocation3 + $0x70] sm:$0xff] %vm1007, %v989
        %1023 = vst.msk [vmem:[#allocation3 + $0x78] sm:$0xff] %vm1007, %v990
        %v1024 = vld [vmem:[#allocation2 + $0x4] sm:$0xf]
        %v1025 = vld [vmem:[#allocation2 + $0x8] sm:$0xf]
        %v1026 = vld [vmem:[#allocation2 + $0x14] sm:$0xf]
        %v1027 = vld [vmem:[#allocation2 + $0x18] sm:$0xf]
        %v1028 = vld [vmem:[#allocation2 + $0x24] sm:$0xf]
        %v1029 = vld [vmem:[#allocation2 + $0x28] sm:$0xf]
        %v1030 = vld [vmem:[#allocation2 + $0x34] sm:$0xf]
        %v1031 = vld [vmem:[#allocation2 + $0x38] sm:$0xf]
        %v1032 = vld [vmem:[#allocation2 + $0x44] sm:$0xf]
        %v1033 = vld [vmem:[#allocation2 + $0x48] sm:$0xf]
        %v1034 = vld [vmem:[#allocation2 + $0x54] sm:$0xf]
        %v1035 = vld [vmem:[#allocation2 + $0x58] sm:$0xf]
        %v1036 = vld [vmem:[#allocation2 + $0x64] sm:$0xf]
        %v1037 = vld [vmem:[#allocation2 + $0x68] sm:$0xf]
        %v1038 = vld [vmem:[#allocation2 + $0x74] sm:$0xf]
        %v1039 = vld [vmem:[#allocation2 + $0x78] sm:$0xf]
        %v1040 = vld [vmem:[#allocation2 + $0xa4] sm:$0xf]
        %v1041 = vld [vmem:[#allocation2 + $0xa8] sm:$0xf]
        %v1042 = vld [vmem:[#allocation2 + $0xb4] sm:$0xf]
        %v1043 = vld [vmem:[#allocation2 + $0xb8] sm:$0xf]
        %v1044 = vld [vmem:[#allocation2 + $0xc4] sm:$0xf]
        %v1045 = vld [vmem:[#allocation2 + $0xc8] sm:$0xf]
        %v1046 = vld [vmem:[#allocation2 + $0xd4] sm:$0xf]
        %v1047 = vld [vmem:[#allocation2 + $0xd8] sm:$0xf]
        %v1048 = vld [vmem:[#allocation2 + $0xe4] sm:$0xf]
        %v1049 = vld [vmem:[#allocation2 + $0xe8] sm:$0xf]
        %v1050 = vld [vmem:[#allocation2 + $0xf4] sm:$0xf]
        %v1051 = vld [vmem:[#allocation2 + $0xf8] sm:$0xf]
        %v1052 = vld [vmem:[#allocation2 + $0x104] sm:$0xf]
        %v1053 = vld [vmem:[#allocation2 + $0x108] sm:$0xf]
        %v1054 = vld [vmem:[#allocation2 + $0x114] sm:$0xf]
        %v1055 = vld [vmem:[#allocation2 + $0x118] sm:$0xf]
        %v1088 = vunpack.c.l.b16 %v1024
        %v1089 = vunpack.c.l.b16 %v1025
        %v1090 = vunpack.c.l.b16 %v1026
        %v1091 = vunpack.c.l.b16 %v1027
        %v1092 = vunpack.c.l.b16 %v1028
        %v1093 = vunpack.c.l.b16 %v1029
        %v1094 = vunpack.c.l.b16 %v1030
        %v1095 = vunpack.c.l.b16 %v1031
        %v1096 = vunpack.c.l.b16 %v1032
        %v1097 = vunpack.c.l.b16 %v1033
        %v1098 = vunpack.c.l.b16 %v1034
        %v1099 = vunpack.c.l.b16 %v1035
        %v1100 = vunpack.c.l.b16 %v1036
        %v1101 = vunpack.c.l.b16 %v1037
        %v1102 = vunpack.c.l.b16 %v1038
        %v1103 = vunpack.c.l.b16 %v1039
        %v1104 = vunpack.c.l.b16 %v1040
        %v1105 = vunpack.c.l.b16 %v1041
        %v1106 = vunpack.c.l.b16 %v1042
        %v1107 = vunpack.c.l.b16 %v1043
        %v1108 = vunpack.c.l.b16 %v1044
        %v1109 = vunpack.c.l.b16 %v1045
        %v1110 = vunpack.c.l.b16 %v1046
        %v1111 = vunpack.c.l.b16 %v1047
        %v1112 = vunpack.c.l.b16 %v1048
        %v1113 = vunpack.c.l.b16 %v1049
        %v1114 = vunpack.c.l.b16 %v1050
        %v1115 = vunpack.c.l.b16 %v1051
        %v1116 = vunpack.c.l.b16 %v1052
        %v1117 = vunpack.c.l.b16 %v1053
        %v1118 = vunpack.c.l.b16 %v1054
        %v1119 = vunpack.c.l.b16 %v1055
        %v1120 = vpack.c.b16 %v1089, %v1088
        %v1121 = vpack.c.b16 %v1091, %v1090
        %v1122 = vpack.c.b16 %v1093, %v1092
        %v1123 = vpack.c.b16 %v1095, %v1094
        %v1124 = vpack.c.b16 %v1097, %v1096
        %v1125 = vpack.c.b16 %v1099, %v1098
        %v1126 = vpack.c.b16 %v1101, %v1100
        %v1127 = vpack.c.b16 %v1103, %v1102
        %v1128 = vpack.c.b16 %v1105, %v1104
        %v1129 = vpack.c.b16 %v1107, %v1106
        %v1130 = vpack.c.b16 %v1109, %v1108
        %v1131 = vpack.c.b16 %v1111, %v1110
        %v1132 = vpack.c.b16 %v1113, %v1112
        %v1133 = vpack.c.b16 %v1115, %v1114
        %v1134 = vpack.c.b16 %v1117, %v1116
        %v1135 = vpack.c.b16 %v1119, %v1118
        %1136 = vrot.lane.b32.xlu0 %v1120, 4
        %v1137 = vpop.permute.xlu0 %1136
        %1138 = vrot.lane.b32.xlu0 %v1121, 4
        %v1139 = vpop.permute.xlu0 %1138
        %1140 = vrot.lane.b32.xlu0 %v1122, 4
        %v1141 = vpop.permute.xlu0 %1140
        %1142 = vrot.lane.b32.xlu0 %v1123, 4
        %v1143 = vpop.permute.xlu0 %1142
        %1144 = vrot.lane.b32.xlu0 %v1124, 4
        %v1145 = vpop.permute.xlu0 %1144
        %1146 = vrot.lane.b32.xlu0 %v1125, 4
        %v1147 = vpop.permute.xlu0 %1146
        %1148 = vrot.lane.b32.xlu0 %v1126, 4
        %v1149 = vpop.permute.xlu0 %1148
        %1150 = vrot.lane.b32.xlu0 %v1127, 4
        %v1151 = vpop.permute.xlu0 %1150
        %1152 = vrot.lane.b32.xlu0 %v1128, 4
        %v1153 = vpop.permute.xlu0 %1152
        %1154 = vrot.lane.b32.xlu0 %v1129, 4
        %v1155 = vpop.permute.xlu0 %1154
        %1156 = vrot.lane.b32.xlu0 %v1130, 4
        %v1157 = vpop.permute.xlu0 %1156
        %1158 = vrot.lane.b32.xlu0 %v1131, 4
        %v1159 = vpop.permute.xlu0 %1158
        %1160 = vrot.lane.b32.xlu0 %v1132, 4
        %v1161 = vpop.permute.xlu0 %1160
        %1162 = vrot.lane.b32.xlu0 %v1133, 4
        %v1163 = vpop.permute.xlu0 %1162
        %1164 = vrot.lane.b32.xlu0 %v1134, 4
        %v1165 = vpop.permute.xlu0 %1164
        %1166 = vrot.lane.b32.xlu0 %v1135, 4
        %v1167 = vpop.permute.xlu0 %1166
        %vm1184 = vcmask 64544
        %1185 = vst.msk [vmem:[#allocation3] sm:$0xff] %vm1184, %v1137
        %1186 = vst.msk [vmem:[#allocation3 + $0x8] sm:$0xff] %vm1184, %v1139
        %1187 = vst.msk [vmem:[#allocation3 + $0x10] sm:$0xff] %vm1184, %v1141
        %1188 = vst.msk [vmem:[#allocation3 + $0x18] sm:$0xff] %vm1184, %v1143
        %1189 = vst.msk [vmem:[#allocation3 + $0x20] sm:$0xff] %vm1184, %v1145
        %1190 = vst.msk [vmem:[#allocation3 + $0x28] sm:$0xff] %vm1184, %v1147
        %1191 = vst.msk [vmem:[#allocation3 + $0x30] sm:$0xff] %vm1184, %v1149
        %1192 = vst.msk [vmem:[#allocation3 + $0x38] sm:$0xff] %vm1184, %v1151
        %1193 = vst.msk [vmem:[#allocation3 + $0x40] sm:$0xff] %vm1184, %v1153
        %1194 = vst.msk [vmem:[#allocation3 + $0x48] sm:$0xff] %vm1184, %v1155
        %1195 = vst.msk [vmem:[#allocation3 + $0x50] sm:$0xff] %vm1184, %v1157
        %1196 = vst.msk [vmem:[#allocation3 + $0x58] sm:$0xff] %vm1184, %v1159
        %1197 = vst.msk [vmem:[#allocation3 + $0x60] sm:$0xff] %vm1184, %v1161
        %1198 = vst.msk [vmem:[#allocation3 + $0x68] sm:$0xff] %vm1184, %v1163
        %1199 = vst.msk [vmem:[#allocation3 + $0x70] sm:$0xff] %vm1184, %v1165
        %1200 = vst.msk [vmem:[#allocation3 + $0x78] sm:$0xff] %vm1184, %v1167
        %v1201 = vld [vmem:[#allocation2 + $0x4] sm:$0xf]
        %v1202 = vld [vmem:[#allocation2 + $0x8] sm:$0xf]
        %v1203 = vld [vmem:[#allocation2 + $0xc] sm:$0x1]
        %v1204 = vld [vmem:[#allocation2 + $0x14] sm:$0xf]
        %v1205 = vld [vmem:[#allocation2 + $0x18] sm:$0xf]
        %v1206 = vld [vmem:[#allocation2 + $0x1c] sm:$0x1]
        %v1207 = vld [vmem:[#allocation2 + $0x24] sm:$0xf]
        %v1208 = vld [vmem:[#allocation2 + $0x28] sm:$0xf]
        %v1209 = vld [vmem:[#allocation2 + $0x2c] sm:$0x1]
        %v1210 = vld [vmem:[#allocation2 + $0x34] sm:$0xf]
        %v1211 = vld [vmem:[#allocation2 + $0x38] sm:$0xf]
        %v1212 = vld [vmem:[#allocation2 + $0x3c] sm:$0x1]
        %v1213 = vld [vmem:[#allocation2 + $0x44] sm:$0xf]
        %v1214 = vld [vmem:[#allocation2 + $0x48] sm:$0xf]
        %v1215 = vld [vmem:[#allocation2 + $0x4c] sm:$0x1]
        %v1216 = vld [vmem:[#allocation2 + $0x54] sm:$0xf]
        %v1217 = vld [vmem:[#allocation2 + $0x58] sm:$0xf]
        %v1218 = vld [vmem:[#allocation2 + $0x5c] sm:$0x1]
        %v1219 = vld [vmem:[#allocation2 + $0x64] sm:$0xf]
        %v1220 = vld [vmem:[#allocation2 + $0x68] sm:$0xf]
        %v1221 = vld [vmem:[#allocation2 + $0x6c] sm:$0x1]
        %v1222 = vld [vmem:[#allocation2 + $0x74] sm:$0xf]
        %v1223 = vld [vmem:[#allocation2 + $0x78] sm:$0xf]
        %v1224 = vld [vmem:[#allocation2 + $0x7c] sm:$0x1]
        %v1225 = vld [vmem:[#allocation2 + $0xa4] sm:$0xf]
        %v1226 = vld [vmem:[#allocation2 + $0xa8] sm:$0xf]
        %v1227 = vld [vmem:[#allocation2 + $0xac] sm:$0x1]
        %v1228 = vld [vmem:[#allocation2 + $0xb4] sm:$0xf]
        %v1229 = vld [vmem:[#allocation2 + $0xb8] sm:$0xf]
        %v1230 = vld [vmem:[#allocation2 + $0xbc] sm:$0x1]
        %v1231 = vld [vmem:[#allocation2 + $0xc4] sm:$0xf]
        %v1232 = vld [vmem:[#allocation2 + $0xc8] sm:$0xf]
        %v1233 = vld [vmem:[#allocation2 + $0xcc] sm:$0x1]
        %v1234 = vld [vmem:[#allocation2 + $0xd4] sm:$0xf]
        %v1235 = vld [vmem:[#allocation2 + $0xd8] sm:$0xf]
        %v1236 = vld [vmem:[#allocation2 + $0xdc] sm:$0x1]
        %v1237 = vld [vmem:[#allocation2 + $0xe4] sm:$0xf]
        %v1238 = vld [vmem:[#allocation2 + $0xe8] sm:$0xf]
        %v1239 = vld [vmem:[#allocation2 + $0xec] sm:$0x1]
        %v1240 = vld [vmem:[#allocation2 + $0xf4] sm:$0xf]
        %v1241 = vld [vmem:[#allocation2 + $0xf8] sm:$0xf]
        %v1242 = vld [vmem:[#allocation2 + $0xfc] sm:$0x1]
        %v1243 = vld [vmem:[#allocation2 + $0x104] sm:$0xf]
        %v1244 = vld [vmem:[#allocation2 + $0x108] sm:$0xf]
        %v1245 = vld [vmem:[#allocation2 + $0x10c] sm:$0x1]
        %v1246 = vld [vmem:[#allocation2 + $0x114] sm:$0xf]
        %v1247 = vld [vmem:[#allocation2 + $0x118] sm:$0xf]
        %v1248 = vld [vmem:[#allocation2 + $0x11c] sm:$0x1]
        %vm1249 = vsmask.f32 3328
        %vm1250 = vsmask.f32 7440
        %vm1251 = vmor %vm1249, %vm1250
        %v1253 = vshrl.u32 %v1201, 16
        %v1255 = vrot.slane %v1253, 4
        %v1256 = vshll.u32 %v1201, 16
        %v1258 = vrot.slane %v1256, 5
        %v1259 = vor.u32 %v1255, %v1258
        %v1260 = vrot.slane %v1259, 4
        %v1262 = vshll.u32 %v1202, 16
        %v1264 = vrot.slane %v1262, 5
        %v1265 = vsel %vm1251, %v1260, %v1264
        %v1266 = vshrl.u32 %v1202, 16
        %v1268 = vrot.slane %v1266, 4
        %v1269 = vor.u32 %v1268, %v1264
        %v1270 = vrot.slane %v1269, 4
        %v1272 = vshll.u32 %v1203, 16
        %v1274 = vrot.slane %v1272, 5
        %v1275 = vsel %vm1251, %v1270, %v1274
        %v1277 = vshrl.u32 %v1204, 16
        %v1279 = vrot.slane %v1277, 4
        %v1280 = vshll.u32 %v1204, 16
        %v1282 = vrot.slane %v1280, 5
        %v1283 = vor.u32 %v1279, %v1282
        %v1284 = vrot.slane %v1283, 4
        %v1286 = vshll.u32 %v1205, 16
        %v1288 = vrot.slane %v1286, 5
        %v1289 = vsel %vm1251, %v1284, %v1288
        %v1290 = vshrl.u32 %v1205, 16
        %v1292 = vrot.slane %v1290, 4
        %v1293 = vor.u32 %v1292, %v1288
        %v1294 = vrot.slane %v1293, 4
        %v1296 = vshll.u32 %v1206, 16
        %v1298 = vrot.slane %v1296, 5
        %v1299 = vsel %vm1251, %v1294, %v1298
        %v1301 = vshrl.u32 %v1207, 16
        %v1303 = vrot.slane %v1301, 4
        %v1304 = vshll.u32 %v1207, 16
        %v1306 = vrot.slane %v1304, 5
        %v1307 = vor.u32 %v1303, %v1306
        %v1308 = vrot.slane %v1307, 4
        %v1310 = vshll.u32 %v1208, 16
        %v1312 = vrot.slane %v1310, 5
        %v1313 = vsel %vm1251, %v1308, %v1312
        %v1314 = vshrl.u32 %v1208, 16
        %v1316 = vrot.slane %v1314, 4
        %v1317 = vor.u32 %v1316, %v1312
        %v1318 = vrot.slane %v1317, 4
        %v1320 = vshll.u32 %v1209, 16
        %v1322 = vrot.slane %v1320, 5
        %v1323 = vsel %vm1251, %v1318, %v1322
        %v1325 = vshrl.u32 %v1210, 16
        %v1327 = vrot.slane %v1325, 4
        %v1328 = vshll.u32 %v1210, 16
        %v1330 = vrot.slane %v1328, 5
        %v1331 = vor.u32 %v1327, %v1330
        %v1332 = vrot.slane %v1331, 4
        %v1334 = vshll.u32 %v1211, 16
        %v1336 = vrot.slane %v1334, 5
        %v1337 = vsel %vm1251, %v1332, %v1336
        %v1338 = vshrl.u32 %v1211, 16
        %v1340 = vrot.slane %v1338, 4
        %v1341 = vor.u32 %v1340, %v1336
        %v1342 = vrot.slane %v1341, 4
        %v1344 = vshll.u32 %v1212, 16
        %v1346 = vrot.slane %v1344, 5
        %v1347 = vsel %vm1251, %v1342, %v1346
        %v1349 = vshrl.u32 %v1213, 16
        %v1351 = vrot.slane %v1349, 4
        %v1352 = vshll.u32 %v1213, 16
        %v1354 = vrot.slane %v1352, 5
        %v1355 = vor.u32 %v1351, %v1354
        %v1356 = vrot.slane %v1355, 4
        %v1358 = vshll.u32 %v1214, 16
        %v1360 = vrot.slane %v1358, 5
        %v1361 = vsel %vm1251, %v1356, %v1360
        %v1362 = vshrl.u32 %v1214, 16
        %v1364 = vrot.slane %v1362, 4
        %v1365 = vor.u32 %v1364, %v1360
        %v1366 = vrot.slane %v1365, 4
        %v1368 = vshll.u32 %v1215, 16
        %v1370 = vrot.slane %v1368, 5
        %v1371 = vsel %vm1251, %v1366, %v1370
        %v1373 = vshrl.u32 %v1216, 16
        %v1375 = vrot.slane %v1373, 4
        %v1376 = vshll.u32 %v1216, 16
        %v1378 = vrot.slane %v1376, 5
        %v1379 = vor.u32 %v1375, %v1378
        %v1380 = vrot.slane %v1379, 4
        %v1382 = vshll.u32 %v1217, 16
        %v1384 = vrot.slane %v1382, 5
        %v1385 = vsel %vm1251, %v1380, %v1384
        %v1386 = vshrl.u32 %v1217, 16
        %v1388 = vrot.slane %v1386, 4
        %v1389 = vor.u32 %v1388, %v1384
        %v1390 = vrot.slane %v1389, 4
        %v1392 = vshll.u32 %v1218, 16
        %v1394 = vrot.slane %v1392, 5
        %v1395 = vsel %vm1251, %v1390, %v1394
        %v1397 = vshrl.u32 %v1219, 16
        %v1399 = vrot.slane %v1397, 4
        %v1400 = vshll.u32 %v1219, 16
        %v1402 = vrot.slane %v1400, 5
        %v1403 = vor.u32 %v1399, %v1402
        %v1404 = vrot.slane %v1403, 4
        %v1406 = vshll.u32 %v1220, 16
        %v1408 = vrot.slane %v1406, 5
        %v1409 = vsel %vm1251, %v1404, %v1408
        %v1410 = vshrl.u32 %v1220, 16
        %v1412 = vrot.slane %v1410, 4
        %v1413 = vor.u32 %v1412, %v1408
        %v1414 = vrot.slane %v1413, 4
        %v1416 = vshll.u32 %v1221, 16
        %v1418 = vrot.slane %v1416, 5
        %v1419 = vsel %vm1251, %v1414, %v1418
        %v1421 = vshrl.u32 %v1222, 16
        %v1423 = vrot.slane %v1421, 4
        %v1424 = vshll.u32 %v1222, 16
        %v1426 = vrot.slane %v1424, 5
        %v1427 = vor.u32 %v1423, %v1426
        %v1428 = vrot.slane %v1427, 4
        %v1430 = vshll.u32 %v1223, 16
        %v1432 = vrot.slane %v1430, 5
        %v1433 = vsel %vm1251, %v1428, %v1432
        %v1434 = vshrl.u32 %v1223, 16
        %v1436 = vrot.slane %v1434, 4
        %v1437 = vor.u32 %v1436, %v1432
        %v1438 = vrot.slane %v1437, 4
        %v1440 = vshll.u32 %v1224, 16
        %v1442 = vrot.slane %v1440, 5
        %v1443 = vsel %vm1251, %v1438, %v1442
        %v1445 = vshrl.u32 %v1225, 16
        %v1447 = vrot.slane %v1445, 4
        %v1448 = vshll.u32 %v1225, 16
        %v1450 = vrot.slane %v1448, 5
        %v1451 = vor.u32 %v1447, %v1450
        %v1452 = vrot.slane %v1451, 4
        %v1454 = vshll.u32 %v1226, 16
        %v1456 = vrot.slane %v1454, 5
        %v1457 = vsel %vm1251, %v1452, %v1456
        %v1458 = vshrl.u32 %v1226, 16
        %v1460 = vrot.slane %v1458, 4
        %v1461 = vor.u32 %v1460, %v1456
        %v1462 = vrot.slane %v1461, 4
        %v1464 = vshll.u32 %v1227, 16
        %v1466 = vrot.slane %v1464, 5
        %v1467 = vsel %vm1251, %v1462, %v1466
        %v1469 = vshrl.u32 %v1228, 16
        %v1471 = vrot.slane %v1469, 4
        %v1472 = vshll.u32 %v1228, 16
        %v1474 = vrot.slane %v1472, 5
        %v1475 = vor.u32 %v1471, %v1474
        %v1476 = vrot.slane %v1475, 4
        %v1478 = vshll.u32 %v1229, 16
        %v1480 = vrot.slane %v1478, 5
        %v1481 = vsel %vm1251, %v1476, %v1480
        %v1482 = vshrl.u32 %v1229, 16
        %v1484 = vrot.slane %v1482, 4
        %v1485 = vor.u32 %v1484, %v1480
        %v1486 = vrot.slane %v1485, 4
        %v1488 = vshll.u32 %v1230, 16
        %v1490 = vrot.slane %v1488, 5
        %v1491 = vsel %vm1251, %v1486, %v1490
        %v1493 = vshrl.u32 %v1231, 16
        %v1495 = vrot.slane %v1493, 4
        %v1496 = vshll.u32 %v1231, 16
        %v1498 = vrot.slane %v1496, 5
        %v1499 = vor.u32 %v1495, %v1498
        %v1500 = vrot.slane %v1499, 4
        %v1502 = vshll.u32 %v1232, 16
        %v1504 = vrot.slane %v1502, 5
        %v1505 = vsel %vm1251, %v1500, %v1504
        %v1506 = vshrl.u32 %v1232, 16
        %v1508 = vrot.slane %v1506, 4
        %v1509 = vor.u32 %v1508, %v1504
        %v1510 = vrot.slane %v1509, 4
        %v1512 = vshll.u32 %v1233, 16
        %v1514 = vrot.slane %v1512, 5
        %v1515 = vsel %vm1251, %v1510, %v1514
        %v1517 = vshrl.u32 %v1234, 16
        %v1519 = vrot.slane %v1517, 4
        %v1520 = vshll.u32 %v1234, 16
        %v1522 = vrot.slane %v1520, 5
        %v1523 = vor.u32 %v1519, %v1522
        %v1524 = vrot.slane %v1523, 4
        %v1526 = vshll.u32 %v1235, 16
        %v1528 = vrot.slane %v1526, 5
        %v1529 = vsel %vm1251, %v1524, %v1528
        %v1530 = vshrl.u32 %v1235, 16
        %v1532 = vrot.slane %v1530, 4
        %v1533 = vor.u32 %v1532, %v1528
        %v1534 = vrot.slane %v1533, 4
        %v1536 = vshll.u32 %v1236, 16
        %v1538 = vrot.slane %v1536, 5
        %v1539 = vsel %vm1251, %v1534, %v1538
        %v1541 = vshrl.u32 %v1237, 16
        %v1543 = vrot.slane %v1541, 4
        %v1544 = vshll.u32 %v1237, 16
        %v1546 = vrot.slane %v1544, 5
        %v1547 = vor.u32 %v1543, %v1546
        %v1548 = vrot.slane %v1547, 4
        %v1550 = vshll.u32 %v1238, 16
        %v1552 = vrot.slane %v1550, 5
        %v1553 = vsel %vm1251, %v1548, %v1552
        %v1554 = vshrl.u32 %v1238, 16
        %v1556 = vrot.slane %v1554, 4
        %v1557 = vor.u32 %v1556, %v1552
        %v1558 = vrot.slane %v1557, 4
        %v1560 = vshll.u32 %v1239, 16
        %v1562 = vrot.slane %v1560, 5
        %v1563 = vsel %vm1251, %v1558, %v1562
        %v1565 = vshrl.u32 %v1240, 16
        %v1567 = vrot.slane %v1565, 4
        %v1568 = vshll.u32 %v1240, 16
        %v1570 = vrot.slane %v1568, 5
        %v1571 = vor.u32 %v1567, %v1570
        %v1572 = vrot.slane %v1571, 4
        %v1574 = vshll.u32 %v1241, 16
        %v1576 = vrot.slane %v1574, 5
        %v1577 = vsel %vm1251, %v1572, %v1576
        %v1578 = vshrl.u32 %v1241, 16
        %v1580 = vrot.slane %v1578, 4
        %v1581 = vor.u32 %v1580, %v1576
        %v1582 = vrot.slane %v1581, 4
        %v1584 = vshll.u32 %v1242, 16
        %v1586 = vrot.slane %v1584, 5
        %v1587 = vsel %vm1251, %v1582, %v1586
        %v1589 = vshrl.u32 %v1243, 16
        %v1591 = vrot.slane %v1589, 4
        %v1592 = vshll.u32 %v1243, 16
        %v1594 = vrot.slane %v1592, 5
        %v1595 = vor.u32 %v1591, %v1594
        %v1596 = vrot.slane %v1595, 4
        %v1598 = vshll.u32 %v1244, 16
        %v1600 = vrot.slane %v1598, 5
        %v1601 = vsel %vm1251, %v1596, %v1600
        %v1602 = vshrl.u32 %v1244, 16
        %v1604 = vrot.slane %v1602, 4
        %v1605 = vor.u32 %v1604, %v1600
        %v1606 = vrot.slane %v1605, 4
        %v1608 = vshll.u32 %v1245, 16
        %v1610 = vrot.slane %v1608, 5
        %v1611 = vsel %vm1251, %v1606, %v1610
        %v1613 = vshrl.u32 %v1246, 16
        %v1615 = vrot.slane %v1613, 4
        %v1616 = vshll.u32 %v1246, 16
        %v1618 = vrot.slane %v1616, 5
        %v1619 = vor.u32 %v1615, %v1618
        %v1620 = vrot.slane %v1619, 4
        %v1622 = vshll.u32 %v1247, 16
        %v1624 = vrot.slane %v1622, 5
        %v1625 = vsel %vm1251, %v1620, %v1624
        %v1626 = vshrl.u32 %v1247, 16
        %v1628 = vrot.slane %v1626, 4
        %v1629 = vor.u32 %v1628, %v1624
        %v1630 = vrot.slane %v1629, 4
        %v1632 = vshll.u32 %v1248, 16
        %v1634 = vrot.slane %v1632, 5
        %v1635 = vsel %vm1251, %v1630, %v1634
        %v1636 = vunpack.c.l.b16 %v1265
        %v1637 = vunpack.c.l.b16 %v1275
        %v1638 = vunpack.c.l.b16 %v1289
        %v1639 = vunpack.c.l.b16 %v1299
        %v1640 = vunpack.c.l.b16 %v1313
        %v1641 = vunpack.c.l.b16 %v1323
        %v1642 = vunpack.c.l.b16 %v1337
        %v1643 = vunpack.c.l.b16 %v1347
        %v1644 = vunpack.c.l.b16 %v1361
        %v1645 = vunpack.c.l.b16 %v1371
        %v1646 = vunpack.c.l.b16 %v1385
        %v1647 = vunpack.c.l.b16 %v1395
        %v1648 = vunpack.c.l.b16 %v1409
        %v1649 = vunpack.c.l.b16 %v1419
        %v1650 = vunpack.c.l.b16 %v1433
        %v1651 = vunpack.c.l.b16 %v1443
        %v1652 = vunpack.c.l.b16 %v1457
        %v1653 = vunpack.c.l.b16 %v1467
        %v1654 = vunpack.c.l.b16 %v1481
        %v1655 = vunpack.c.l.b16 %v1491
        %v1656 = vunpack.c.l.b16 %v1505
        %v1657 = vunpack.c.l.b16 %v1515
        %v1658 = vunpack.c.l.b16 %v1529
        %v1659 = vunpack.c.l.b16 %v1539
        %v1660 = vunpack.c.l.b16 %v1553
        %v1661 = vunpack.c.l.b16 %v1563
        %v1662 = vunpack.c.l.b16 %v1577
        %v1663 = vunpack.c.l.b16 %v1587
        %v1664 = vunpack.c.l.b16 %v1601
        %v1665 = vunpack.c.l.b16 %v1611
        %v1666 = vunpack.c.l.b16 %v1625
        %v1667 = vunpack.c.l.b16 %v1635
        %v1668 = vpack.c.b16 %v1637, %v1636
        %v1669 = vpack.c.b16 %v1639, %v1638
        %v1670 = vpack.c.b16 %v1641, %v1640
        %v1671 = vpack.c.b16 %v1643, %v1642
        %v1672 = vpack.c.b16 %v1645, %v1644
        %v1673 = vpack.c.b16 %v1647, %v1646
        %v1674 = vpack.c.b16 %v1649, %v1648
        %v1675 = vpack.c.b16 %v1651, %v1650
        %v1676 = vpack.c.b16 %v1653, %v1652
        %v1677 = vpack.c.b16 %v1655, %v1654
        %v1678 = vpack.c.b16 %v1657, %v1656
        %v1679 = vpack.c.b16 %v1659, %v1658
        %v1680 = vpack.c.b16 %v1661, %v1660
        %v1681 = vpack.c.b16 %v1663, %v1662
        %v1682 = vpack.c.b16 %v1665, %v1664
        %v1683 = vpack.c.b16 %v1667, %v1666
        %1684 = vrot.lane.b32.xlu0 %v1668, 8
        %v1685 = vpop.permute.xlu0 %1684
        %1686 = vrot.lane.b32.xlu0 %v1669, 8
        %v1687 = vpop.permute.xlu0 %1686
        %1688 = vrot.lane.b32.xlu0 %v1670, 8
        %v1689 = vpop.permute.xlu0 %1688
        %1690 = vrot.lane.b32.xlu0 %v1671, 8
        %v1691 = vpop.permute.xlu0 %1690
        %1692 = vrot.lane.b32.xlu0 %v1672, 8
        %v1693 = vpop.permute.xlu0 %1692
        %1694 = vrot.lane.b32.xlu0 %v1673, 8
        %v1695 = vpop.permute.xlu0 %1694
        %1696 = vrot.lane.b32.xlu0 %v1674, 8
        %v1697 = vpop.permute.xlu0 %1696
        %1698 = vrot.lane.b32.xlu0 %v1675, 8
        %v1699 = vpop.permute.xlu0 %1698
        %1700 = vrot.lane.b32.xlu0 %v1676, 8
        %v1701 = vpop.permute.xlu0 %1700
        %1702 = vrot.lane.b32.xlu0 %v1677, 8
        %v1703 = vpop.permute.xlu0 %1702
        %1704 = vrot.lane.b32.xlu0 %v1678, 8
        %v1705 = vpop.permute.xlu0 %1704
        %1706 = vrot.lane.b32.xlu0 %v1679, 8
        %v1707 = vpop.permute.xlu0 %1706
        %1708 = vrot.lane.b32.xlu0 %v1680, 8
        %v1709 = vpop.permute.xlu0 %1708
        %1710 = vrot.lane.b32.xlu0 %v1681, 8
        %v1711 = vpop.permute.xlu0 %1710
        %1712 = vrot.lane.b32.xlu0 %v1682, 8
        %v1713 = vpop.permute.xlu0 %1712
        %1714 = vrot.lane.b32.xlu0 %v1683, 8
        %v1715 = vpop.permute.xlu0 %1714
        %vm1732 = vcmask 97344
        %1733 = vst.msk [vmem:[#allocation3] sm:$0xff] %vm1732, %v1685
        %1734 = vst.msk [vmem:[#allocation3 + $0x8] sm:$0xff] %vm1732, %v1687
        %1735 = vst.msk [vmem:[#allocation3 + $0x10] sm:$0xff] %vm1732, %v1689
        %1736 = vst.msk [vmem:[#allocation3 + $0x18] sm:$0xff] %vm1732, %v1691
        %1737 = vst.msk [vmem:[#allocation3 + $0x20] sm:$0xff] %vm1732, %v1693
        %1738 = vst.msk [vmem:[#allocation3 + $0x28] sm:$0xff] %vm1732, %v1695
        %1739 = vst.msk [vmem:[#allocation3 + $0x30] sm:$0xff] %vm1732, %v1697
        %1740 = vst.msk [vmem:[#allocation3 + $0x38] sm:$0xff] %vm1732, %v1699
        %1741 = vst.msk [vmem:[#allocation3 + $0x40] sm:$0xff] %vm1732, %v1701
        %1742 = vst.msk [vmem:[#allocation3 + $0x48] sm:$0xff] %vm1732, %v1703
        %1743 = vst.msk [vmem:[#allocation3 + $0x50] sm:$0xff] %vm1732, %v1705
        %1744 = vst.msk [vmem:[#allocation3 + $0x58] sm:$0xff] %vm1732, %v1707
        %1745 = vst.msk [vmem:[#allocation3 + $0x60] sm:$0xff] %vm1732, %v1709
        %1746 = vst.msk [vmem:[#allocation3 + $0x68] sm:$0xff] %vm1732, %v1711
        %1747 = vst.msk [vmem:[#allocation3 + $0x70] sm:$0xff] %vm1732, %v1713
        %1748 = vst.msk [vmem:[#allocation3 + $0x78] sm:$0xff] %vm1732, %v1715
        %v1749 = vld [vmem:[%s445] sm:$0x8]
        %v1750 = vld [vmem:[%s445 + $0x4] sm:$0xf]
        %v1751 = vld [vmem:[%s445 + $0x8] sm:$0xf]
        %v1752 = vld [vmem:[%s445 + $0x10] sm:$0x8]
        %v1753 = vld [vmem:[%s445 + $0x14] sm:$0xf]
        %v1754 = vld [vmem:[%s445 + $0x18] sm:$0xf]
        %v1755 = vld [vmem:[%s445 + $0x20] sm:$0x8]
        %v1756 = vld [vmem:[%s445 + $0x24] sm:$0xf]
        %v1757 = vld [vmem:[%s445 + $0x28] sm:$0xf]
        %v1758 = vld [vmem:[%s445 + $0x30] sm:$0x8]
        %v1759 = vld [vmem:[%s445 + $0x34] sm:$0xf]
        %v1760 = vld [vmem:[%s445 + $0x38] sm:$0xf]
        %v1761 = vld [vmem:[%s445 + $0x40] sm:$0x8]
        %v1762 = vld [vmem:[%s445 + $0x44] sm:$0xf]
        %v1763 = vld [vmem:[%s445 + $0x48] sm:$0xf]
        %v1764 = vld [vmem:[%s445 + $0x50] sm:$0x8]
        %v1765 = vld [vmem:[%s445 + $0x54] sm:$0xf]
        %v1766 = vld [vmem:[%s445 + $0x58] sm:$0xf]
        %v1767 = vld [vmem:[%s445 + $0x60] sm:$0x8]
        %v1768 = vld [vmem:[%s445 + $0x64] sm:$0xf]
        %v1769 = vld [vmem:[%s445 + $0x68] sm:$0xf]
        %v1770 = vld [vmem:[%s445 + $0x70] sm:$0x8]
        %v1771 = vld [vmem:[%s445 + $0x74] sm:$0xf]
        %v1772 = vld [vmem:[%s445 + $0x78] sm:$0xf]
        %v1773 = vld [vmem:[%s445 + $0xa0] sm:$0x8]
        %v1774 = vld [vmem:[%s445 + $0xa4] sm:$0xf]
        %v1775 = vld [vmem:[%s445 + $0xa8] sm:$0xf]
        %v1776 = vld [vmem:[%s445 + $0xb0] sm:$0x8]
        %v1777 = vld [vmem:[%s445 + $0xb4] sm:$0xf]
        %v1778 = vld [vmem:[%s445 + $0xb8] sm:$0xf]
        %v1779 = vld [vmem:[%s445 + $0xc0] sm:$0x8]
        %v1780 = vld [vmem:[%s445 + $0xc4] sm:$0xf]
        %v1781 = vld [vmem:[%s445 + $0xc8] sm:$0xf]
        %v1782 = vld [vmem:[%s445 + $0xd0] sm:$0x8]
        %v1783 = vld [vmem:[%s445 + $0xd4] sm:$0xf]
        %v1784 = vld [vmem:[%s445 + $0xd8] sm:$0xf]
        %v1785 = vld [vmem:[%s445 + $0xe0] sm:$0x8]
        %v1786 = vld [vmem:[%s445 + $0xe4] sm:$0xf]
        %v1787 = vld [vmem:[%s445 + $0xe8] sm:$0xf]
        %v1788 = vld [vmem:[%s445 + $0xf0] sm:$0x8]
        %v1789 = vld [vmem:[%s445 + $0xf4] sm:$0xf]
        %v1790 = vld [vmem:[%s445 + $0xf8] sm:$0xf]
        %v1791 = vld [vmem:[%s445 + $0x100] sm:$0x8]
        %v1792 = vld [vmem:[%s445 + $0x104] sm:$0xf]
        %v1793 = vld [vmem:[%s445 + $0x108] sm:$0xf]
        %v1794 = vld [vmem:[%s445 + $0x110] sm:$0x8]
        %v1795 = vld [vmem:[%s445 + $0x114] sm:$0xf]
        %v1796 = vld [vmem:[%s445 + $0x118] sm:$0xf]
        %v1798 = vshrl.u32 %v1749, 16
        %v1800 = vrot.slane %v1798, 7
        %v1801 = vrot.slane %v1800, 4
        %v1803 = vshrl.u32 %v1750, 16
        %v1805 = vrot.slane %v1803, 7
        %v1806 = vshll.u32 %v1750, 16
        %v1808 = vor.u32 %v1805, %v1806
        %v1809 = vsel %vm590, %v1801, %v1808
        %v1810 = vrot.slane %v1805, 4
        %v1812 = vshrl.u32 %v1751, 16
        %v1814 = vrot.slane %v1812, 7
        %v1815 = vshll.u32 %v1751, 16
        %v1817 = vor.u32 %v1814, %v1815
        %v1818 = vsel %vm590, %v1810, %v1817
        %v1820 = vshrl.u32 %v1752, 16
        %v1822 = vrot.slane %v1820, 7
        %v1823 = vrot.slane %v1822, 4
        %v1825 = vshrl.u32 %v1753, 16
        %v1827 = vrot.slane %v1825, 7
        %v1828 = vshll.u32 %v1753, 16
        %v1830 = vor.u32 %v1827, %v1828
        %v1831 = vsel %vm590, %v1823, %v1830
        %v1832 = vrot.slane %v1827, 4
        %v1834 = vshrl.u32 %v1754, 16
        %v1836 = vrot.slane %v1834, 7
        %v1837 = vshll.u32 %v1754, 16
        %v1839 = vor.u32 %v1836, %v1837
        %v1840 = vsel %vm590, %v1832, %v1839
        %v1842 = vshrl.u32 %v1755, 16
        %v1844 = vrot.slane %v1842, 7
        %v1845 = vrot.slane %v1844, 4
        %v1847 = vshrl.u32 %v1756, 16
        %v1849 = vrot.slane %v1847, 7
        %v1850 = vshll.u32 %v1756, 16
        %v1852 = vor.u32 %v1849, %v1850
        %v1853 = vsel %vm590, %v1845, %v1852
        %v1854 = vrot.slane %v1849, 4
        %v1856 = vshrl.u32 %v1757, 16
        %v1858 = vrot.slane %v1856, 7
        %v1859 = vshll.u32 %v1757, 16
        %v1861 = vor.u32 %v1858, %v1859
        %v1862 = vsel %vm590, %v1854, %v1861
        %v1864 = vshrl.u32 %v1758, 16
        %v1866 = vrot.slane %v1864, 7
        %v1867 = vrot.slane %v1866, 4
        %v1869 = vshrl.u32 %v1759, 16
        %v1871 = vrot.slane %v1869, 7
        %v1872 = vshll.u32 %v1759, 16
        %v1874 = vor.u32 %v1871, %v1872
        %v1875 = vsel %vm590, %v1867, %v1874
        %v1876 = vrot.slane %v1871, 4
        %v1878 = vshrl.u32 %v1760, 16
        %v1880 = vrot.slane %v1878, 7
        %v1881 = vshll.u32 %v1760, 16
        %v1883 = vor.u32 %v1880, %v1881
        %v1884 = vsel %vm590, %v1876, %v1883
        %v1886 = vshrl.u32 %v1761, 16
        %v1888 = vrot.slane %v1886, 7
        %v1889 = vrot.slane %v1888, 4
        %v1891 = vshrl.u32 %v1762, 16
        %v1893 = vrot.slane %v1891, 7
        %v1894 = vshll.u32 %v1762, 16
        %v1896 = vor.u32 %v1893, %v1894
        %v1897 = vsel %vm590, %v1889, %v1896
        %v1898 = vrot.slane %v1893, 4
        %v1900 = vshrl.u32 %v1763, 16
        %v1902 = vrot.slane %v1900, 7
        %v1903 = vshll.u32 %v1763, 16
        %v1905 = vor.u32 %v1902, %v1903
        %v1906 = vsel %vm590, %v1898, %v1905
        %v1908 = vshrl.u32 %v1764, 16
        %v1910 = vrot.slane %v1908, 7
        %v1911 = vrot.slane %v1910, 4
        %v1913 = vshrl.u32 %v1765, 16
        %v1915 = vrot.slane %v1913, 7
        %v1916 = vshll.u32 %v1765, 16
        %v1918 = vor.u32 %v1915, %v1916
        %v1919 = vsel %vm590, %v1911, %v1918
        %v1920 = vrot.slane %v1915, 4
        %v1922 = vshrl.u32 %v1766, 16
        %v1924 = vrot.slane %v1922, 7
        %v1925 = vshll.u32 %v1766, 16
        %v1927 = vor.u32 %v1924, %v1925
        %v1928 = vsel %vm590, %v1920, %v1927
        %v1930 = vshrl.u32 %v1767, 16
        %v1932 = vrot.slane %v1930, 7
        %v1933 = vrot.slane %v1932, 4
        %v1935 = vshrl.u32 %v1768, 16
        %v1937 = vrot.slane %v1935, 7
        %v1938 = vshll.u32 %v1768, 16
        %v1940 = vor.u32 %v1937, %v1938
        %v1941 = vsel %vm590, %v1933, %v1940
        %v1942 = vrot.slane %v1937, 4
        %v1944 = vshrl.u32 %v1769, 16
        %v1946 = vrot.slane %v1944, 7
        %v1947 = vshll.u32 %v1769, 16
        %v1949 = vor.u32 %v1946, %v1947
        %v1950 = vsel %vm590, %v1942, %v1949
        %v1952 = vshrl.u32 %v1770, 16
        %v1954 = vrot.slane %v1952, 7
        %v1955 = vrot.slane %v1954, 4
        %v1957 = vshrl.u32 %v1771, 16
        %v1959 = vrot.slane %v1957, 7
        %v1960 = vshll.u32 %v1771, 16
        %v1962 = vor.u32 %v1959, %v1960
        %v1963 = vsel %vm590, %v1955, %v1962
        %v1964 = vrot.slane %v1959, 4
        %v1966 = vshrl.u32 %v1772, 16
        %v1968 = vrot.slane %v1966, 7
        %v1969 = vshll.u32 %v1772, 16
        %v1971 = vor.u32 %v1968, %v1969
        %v1972 = vsel %vm590, %v1964, %v1971
        %v1974 = vshrl.u32 %v1773, 16
        %v1976 = vrot.slane %v1974, 7
        %v1977 = vrot.slane %v1976, 4
        %v1979 = vshrl.u32 %v1774, 16
        %v1981 = vrot.slane %v1979, 7
        %v1982 = vshll.u32 %v1774, 16
        %v1984 = vor.u32 %v1981, %v1982
        %v1985 = vsel %vm590, %v1977, %v1984
        %v1986 = vrot.slane %v1981, 4
        %v1988 = vshrl.u32 %v1775, 16
        %v1990 = vrot.slane %v1988, 7
        %v1991 = vshll.u32 %v1775, 16
        %v1993 = vor.u32 %v1990, %v1991
        %v1994 = vsel %vm590, %v1986, %v1993
        %v1996 = vshrl.u32 %v1776, 16
        %v1998 = vrot.slane %v1996, 7
        %v1999 = vrot.slane %v1998, 4
        %v2001 = vshrl.u32 %v1777, 16
        %v2003 = vrot.slane %v2001, 7
        %v2004 = vshll.u32 %v1777, 16
        %v2006 = vor.u32 %v2003, %v2004
        %v2007 = vsel %vm590, %v1999, %v2006
        %v2008 = vrot.slane %v2003, 4
        %v2010 = vshrl.u32 %v1778, 16
        %v2012 = vrot.slane %v2010, 7
        %v2013 = vshll.u32 %v1778, 16
        %v2015 = vor.u32 %v2012, %v2013
        %v2016 = vsel %vm590, %v2008, %v2015
        %v2018 = vshrl.u32 %v1779, 16
        %v2020 = vrot.slane %v2018, 7
        %v2021 = vrot.slane %v2020, 4
        %v2023 = vshrl.u32 %v1780, 16
        %v2025 = vrot.slane %v2023, 7
        %v2026 = vshll.u32 %v1780, 16
        %v2028 = vor.u32 %v2025, %v2026
        %v2029 = vsel %vm590, %v2021, %v2028
        %v2030 = vrot.slane %v2025, 4
        %v2032 = vshrl.u32 %v1781, 16
        %v2034 = vrot.slane %v2032, 7
        %v2035 = vshll.u32 %v1781, 16
        %v2037 = vor.u32 %v2034, %v2035
        %v2038 = vsel %vm590, %v2030, %v2037
        %v2040 = vshrl.u32 %v1782, 16
        %v2042 = vrot.slane %v2040, 7
        %v2043 = vrot.slane %v2042, 4
        %v2045 = vshrl.u32 %v1783, 16
        %v2047 = vrot.slane %v2045, 7
        %v2048 = vshll.u32 %v1783, 16
        %v2050 = vor.u32 %v2047, %v2048
        %v2051 = vsel %vm590, %v2043, %v2050
        %v2052 = vrot.slane %v2047, 4
        %v2054 = vshrl.u32 %v1784, 16
        %v2056 = vrot.slane %v2054, 7
        %v2057 = vshll.u32 %v1784, 16
        %v2059 = vor.u32 %v2056, %v2057
        %v2060 = vsel %vm590, %v2052, %v2059
        %v2062 = vshrl.u32 %v1785, 16
        %v2064 = vrot.slane %v2062, 7
        %v2065 = vrot.slane %v2064, 4
        %v2067 = vshrl.u32 %v1786, 16
        %v2069 = vrot.slane %v2067, 7
        %v2070 = vshll.u32 %v1786, 16
        %v2072 = vor.u32 %v2069, %v2070
        %v2073 = vsel %vm590, %v2065, %v2072
        %v2074 = vrot.slane %v2069, 4
        %v2076 = vshrl.u32 %v1787, 16
        %v2078 = vrot.slane %v2076, 7
        %v2079 = vshll.u32 %v1787, 16
        %v2081 = vor.u32 %v2078, %v2079
        %v2082 = vsel %vm590, %v2074, %v2081
        %v2084 = vshrl.u32 %v1788, 16
        %v2086 = vrot.slane %v2084, 7
        %v2087 = vrot.slane %v2086, 4
        %v2089 = vshrl.u32 %v1789, 16
        %v2091 = vrot.slane %v2089, 7
        %v2092 = vshll.u32 %v1789, 16
        %v2094 = vor.u32 %v2091, %v2092
        %v2095 = vsel %vm590, %v2087, %v2094
        %v2096 = vrot.slane %v2091, 4
        %v2098 = vshrl.u32 %v1790, 16
        %v2100 = vrot.slane %v2098, 7
        %v2101 = vshll.u32 %v1790, 16
        %v2103 = vor.u32 %v2100, %v2101
        %v2104 = vsel %vm590, %v2096, %v2103
        %v2106 = vshrl.u32 %v1791, 16
        %v2108 = vrot.slane %v2106, 7
        %v2109 = vrot.slane %v2108, 4
        %v2111 = vshrl.u32 %v1792, 16
        %v2113 = vrot.slane %v2111, 7
        %v2114 = vshll.u32 %v1792, 16
        %v2116 = vor.u32 %v2113, %v2114
        %v2117 = vsel %vm590, %v2109, %v2116
        %v2118 = vrot.slane %v2113, 4
        %v2120 = vshrl.u32 %v1793, 16
        %v2122 = vrot.slane %v2120, 7
        %v2123 = vshll.u32 %v1793, 16
        %v2125 = vor.u32 %v2122, %v2123
        %v2126 = vsel %vm590, %v2118, %v2125
        %v2128 = vshrl.u32 %v1794, 16
        %v2130 = vrot.slane %v2128, 7
        %v2131 = vrot.slane %v2130, 4
        %v2133 = vshrl.u32 %v1795, 16
        %v2135 = vrot.slane %v2133, 7
        %v2136 = vshll.u32 %v1795, 16
        %v2138 = vor.u32 %v2135, %v2136
        %v2139 = vsel %vm590, %v2131, %v2138
        %v2140 = vrot.slane %v2135, 4
        %v2142 = vshrl.u32 %v1796, 16
        %v2144 = vrot.slane %v2142, 7
        %v2145 = vshll.u32 %v1796, 16
        %v2147 = vor.u32 %v2144, %v2145
        %v2148 = vsel %vm590, %v2140, %v2147
        %v2149 = vunpack.c.l.b16 %v1809
        %v2150 = vunpack.c.l.b16 %v1818
        %v2151 = vunpack.c.l.b16 %v1831
        %v2152 = vunpack.c.l.b16 %v1840
        %v2153 = vunpack.c.l.b16 %v1853
        %v2154 = vunpack.c.l.b16 %v1862
        %v2155 = vunpack.c.l.b16 %v1875
        %v2156 = vunpack.c.l.b16 %v1884
        %v2157 = vunpack.c.l.b16 %v1897
        %v2158 = vunpack.c.l.b16 %v1906
        %v2159 = vunpack.c.l.b16 %v1919
        %v2160 = vunpack.c.l.b16 %v1928
        %v2161 = vunpack.c.l.b16 %v1941
        %v2162 = vunpack.c.l.b16 %v1950
        %v2163 = vunpack.c.l.b16 %v1963
        %v2164 = vunpack.c.l.b16 %v1972
        %v2165 = vunpack.c.l.b16 %v1985
        %v2166 = vunpack.c.l.b16 %v1994
        %v2167 = vunpack.c.l.b16 %v2007
        %v2168 = vunpack.c.l.b16 %v2016
        %v2169 = vunpack.c.l.b16 %v2029
        %v2170 = vunpack.c.l.b16 %v2038
        %v2171 = vunpack.c.l.b16 %v2051
        %v2172 = vunpack.c.l.b16 %v2060
        %v2173 = vunpack.c.l.b16 %v2073
        %v2174 = vunpack.c.l.b16 %v2082
        %v2175 = vunpack.c.l.b16 %v2095
        %v2176 = vunpack.c.l.b16 %v2104
        %v2177 = vunpack.c.l.b16 %v2117
        %v2178 = vunpack.c.l.b16 %v2126
        %v2179 = vunpack.c.l.b16 %v2139
        %v2180 = vunpack.c.l.b16 %v2148
        %v2181 = vpack.c.b16 %v2150, %v2149
        %v2182 = vpack.c.b16 %v2152, %v2151
        %v2183 = vpack.c.b16 %v2154, %v2153
        %v2184 = vpack.c.b16 %v2156, %v2155
        %v2185 = vpack.c.b16 %v2158, %v2157
        %v2186 = vpack.c.b16 %v2160, %v2159
        %v2187 = vpack.c.b16 %v2162, %v2161
        %v2188 = vpack.c.b16 %v2164, %v2163
        %v2189 = vpack.c.b16 %v2166, %v2165
        %v2190 = vpack.c.b16 %v2168, %v2167
        %v2191 = vpack.c.b16 %v2170, %v2169
        %v2192 = vpack.c.b16 %v2172, %v2171
        %v2193 = vpack.c.b16 %v2174, %v2173
        %v2194 = vpack.c.b16 %v2176, %v2175
        %v2195 = vpack.c.b16 %v2178, %v2177
        %v2196 = vpack.c.b16 %v2180, %v2179
        %2197 = vrot.lane.b32.xlu0 %v2181, 12
        %v2198 = vpop.permute.xlu0 %2197
        %2199 = vrot.lane.b32.xlu0 %v2182, 12
        %v2200 = vpop.permute.xlu0 %2199
        %2201 = vrot.lane.b32.xlu0 %v2183, 12
        %v2202 = vpop.permute.xlu0 %2201
        %2203 = vrot.lane.b32.xlu0 %v2184, 12
        %v2204 = vpop.permute.xlu0 %2203
        %2205 = vrot.lane.b32.xlu0 %v2185, 12
        %v2206 = vpop.permute.xlu0 %2205
        %2207 = vrot.lane.b32.xlu0 %v2186, 12
        %v2208 = vpop.permute.xlu0 %2207
        %2209 = vrot.lane.b32.xlu0 %v2187, 12
        %v2210 = vpop.permute.xlu0 %2209
        %2211 = vrot.lane.b32.xlu0 %v2188, 12
        %v2212 = vpop.permute.xlu0 %2211
        %2213 = vrot.lane.b32.xlu0 %v2189, 12
        %v2214 = vpop.permute.xlu0 %2213
        %2215 = vrot.lane.b32.xlu0 %v2190, 12
        %v2216 = vpop.permute.xlu0 %2215
        %2217 = vrot.lane.b32.xlu0 %v2191, 12
        %v2218 = vpop.permute.xlu0 %2217
        %2219 = vrot.lane.b32.xlu0 %v2192, 12
        %v2220 = vpop.permute.xlu0 %2219
        %2221 = vrot.lane.b32.xlu0 %v2193, 12
        %v2222 = vpop.permute.xlu0 %2221
        %2223 = vrot.lane.b32.xlu0 %v2194, 12
        %v2224 = vpop.permute.xlu0 %2223
        %2225 = vrot.lane.b32.xlu0 %v2195, 12
        %v2226 = vpop.permute.xlu0 %2225
        %2227 = vrot.lane.b32.xlu0 %v2196, 12
        %v2228 = vpop.permute.xlu0 %2227
        %vm2245 = vcmask 130144
        %2246 = vst.msk [vmem:[#allocation3] sm:$0xff] %vm2245, %v2198
        %2247 = vst.msk [vmem:[#allocation3 + $0x8] sm:$0xff] %vm2245, %v2200
        %2248 = vst.msk [vmem:[#allocation3 + $0x10] sm:$0xff] %vm2245, %v2202
        %2249 = vst.msk [vmem:[#allocation3 + $0x18] sm:$0xff] %vm2245, %v2204
        %2250 = vst.msk [vmem:[#allocation3 + $0x20] sm:$0xff] %vm2245, %v2206
        %2251 = vst.msk [vmem:[#allocation3 + $0x28] sm:$0xff] %vm2245, %v2208
        %2252 = vst.msk [vmem:[#allocation3 + $0x30] sm:$0xff] %vm2245, %v2210
        %2253 = vst.msk [vmem:[#allocation3 + $0x38] sm:$0xff] %vm2245, %v2212
        %2254 = vst.msk [vmem:[#allocation3 + $0x40] sm:$0xff] %vm2245, %v2214
        %2255 = vst.msk [vmem:[#allocation3 + $0x48] sm:$0xff] %vm2245, %v2216
        %2256 = vst.msk [vmem:[#allocation3 + $0x50] sm:$0xff] %vm2245, %v2218
        %2257 = vst.msk [vmem:[#allocation3 + $0x58] sm:$0xff] %vm2245, %v2220
        %2258 = vst.msk [vmem:[#allocation3 + $0x60] sm:$0xff] %vm2245, %v2222
        %2259 = vst.msk [vmem:[#allocation3 + $0x68] sm:$0xff] %vm2245, %v2224
        %2260 = vst.msk [vmem:[#allocation3 + $0x70] sm:$0xff] %vm2245, %v2226
        %2261 = vst.msk [vmem:[#allocation3 + $0x78] sm:$0xff] %vm2245, %v2228
        %v2262 = vld [vmem:[%s445 + $0x4] sm:$0xf]
        %v2263 = vld [vmem:[%s445 + $0x8] sm:$0xf]
        %v2264 = vld [vmem:[%s445 + $0x14] sm:$0xf]
        %v2265 = vld [vmem:[%s445 + $0x18] sm:$0xf]
        %v2266 = vld [vmem:[%s445 + $0x24] sm:$0xf]
        %v2267 = vld [vmem:[%s445 + $0x28] sm:$0xf]
        %v2268 = vld [vmem:[%s445 + $0x34] sm:$0xf]
        %v2269 = vld [vmem:[%s445 + $0x38] sm:$0xf]
        %v2270 = vld [vmem:[%s445 + $0x44] sm:$0xf]
        %v2271 = vld [vmem:[%s445 + $0x48] sm:$0xf]
        %v2272 = vld [vmem:[%s445 + $0x54] sm:$0xf]
        %v2273 = vld [vmem:[%s445 + $0x58] sm:$0xf]
        %v2274 = vld [vmem:[%s445 + $0x64] sm:$0xf]
        %v2275 = vld [vmem:[%s445 + $0x68] sm:$0xf]
        %v2276 = vld [vmem:[%s445 + $0x74] sm:$0xf]
        %v2277 = vld [vmem:[%s445 + $0x78] sm:$0xf]
        %v2278 = vld [vmem:[%s445 + $0xa4] sm:$0xf]
        %v2279 = vld [vmem:[%s445 + $0xa8] sm:$0xf]
        %v2280 = vld [vmem:[%s445 + $0xb4] sm:$0xf]
        %v2281 = vld [vmem:[%s445 + $0xb8] sm:$0xf]
        %v2282 = vld [vmem:[%s445 + $0xc4] sm:$0xf]
        %v2283 = vld [vmem:[%s445 + $0xc8] sm:$0xf]
        %v2284 = vld [vmem:[%s445 + $0xd4] sm:$0xf]
        %v2285 = vld [vmem:[%s445 + $0xd8] sm:$0xf]
        %v2286 = vld [vmem:[%s445 + $0xe4] sm:$0xf]
        %v2287 = vld [vmem:[%s445 + $0xe8] sm:$0xf]
        %v2288 = vld [vmem:[%s445 + $0xf4] sm:$0xf]
        %v2289 = vld [vmem:[%s445 + $0xf8] sm:$0xf]
        %v2290 = vld [vmem:[%s445 + $0x104] sm:$0xf]
        %v2291 = vld [vmem:[%s445 + $0x108] sm:$0xf]
        %v2292 = vld [vmem:[%s445 + $0x114] sm:$0xf]
        %v2293 = vld [vmem:[%s445 + $0x118] sm:$0xf]
        %v2326 = vunpack.c.l.b16 %v2262
        %v2327 = vunpack.c.l.b16 %v2263
        %v2328 = vunpack.c.l.b16 %v2264
        %v2329 = vunpack.c.l.b16 %v2265
        %v2330 = vunpack.c.l.b16 %v2266
        %v2331 = vunpack.c.l.b16 %v2267
        %v2332 = vunpack.c.l.b16 %v2268
        %v2333 = vunpack.c.l.b16 %v2269
        %v2334 = vunpack.c.l.b16 %v2270
        %v2335 = vunpack.c.l.b16 %v2271
        %v2336 = vunpack.c.l.b16 %v2272
        %v2337 = vunpack.c.l.b16 %v2273
        %v2338 = vunpack.c.l.b16 %v2274
        %v2339 = vunpack.c.l.b16 %v2275
        %v2340 = vunpack.c.l.b16 %v2276
        %v2341 = vunpack.c.l.b16 %v2277
        %v2342 = vunpack.c.l.b16 %v2278
        %v2343 = vunpack.c.l.b16 %v2279
        %v2344 = vunpack.c.l.b16 %v2280
        %v2345 = vunpack.c.l.b16 %v2281
        %v2346 = vunpack.c.l.b16 %v2282
        %v2347 = vunpack.c.l.b16 %v2283
        %v2348 = vunpack.c.l.b16 %v2284
        %v2349 = vunpack.c.l.b16 %v2285
        %v2350 = vunpack.c.l.b16 %v2286
        %v2351 = vunpack.c.l.b16 %v2287
        %v2352 = vunpack.c.l.b16 %v2288
        %v2353 = vunpack.c.l.b16 %v2289
        %v2354 = vunpack.c.l.b16 %v2290
        %v2355 = vunpack.c.l.b16 %v2291
        %v2356 = vunpack.c.l.b16 %v2292
        %v2357 = vunpack.c.l.b16 %v2293
        %v2358 = vpack.c.b16 %v2327, %v2326
        %v2359 = vpack.c.b16 %v2329, %v2328
        %v2360 = vpack.c.b16 %v2331, %v2330
        %v2361 = vpack.c.b16 %v2333, %v2332
        %v2362 = vpack.c.b16 %v2335, %v2334
        %v2363 = vpack.c.b16 %v2337, %v2336
        %v2364 = vpack.c.b16 %v2339, %v2338
        %v2365 = vpack.c.b16 %v2341, %v2340
        %v2366 = vpack.c.b16 %v2343, %v2342
        %v2367 = vpack.c.b16 %v2345, %v2344
        %v2368 = vpack.c.b16 %v2347, %v2346
        %v2369 = vpack.c.b16 %v2349, %v2348
        %v2370 = vpack.c.b16 %v2351, %v2350
        %v2371 = vpack.c.b16 %v2353, %v2352
        %v2372 = vpack.c.b16 %v2355, %v2354
        %v2373 = vpack.c.b16 %v2357, %v2356
        %2374 = vrot.lane.b32.xlu0 %v2358, 16
        %v2375 = vpop.permute.xlu0 %2374
        %2376 = vrot.lane.b32.xlu0 %v2359, 16
        %v2377 = vpop.permute.xlu0 %2376
        %2378 = vrot.lane.b32.xlu0 %v2360, 16
        %v2379 = vpop.permute.xlu0 %2378
        %2380 = vrot.lane.b32.xlu0 %v2361, 16
        %v2381 = vpop.permute.xlu0 %2380
        %2382 = vrot.lane.b32.xlu0 %v2362, 16
        %v2383 = vpop.permute.xlu0 %2382
        %2384 = vrot.lane.b32.xlu0 %v2363, 16
        %v2385 = vpop.permute.xlu0 %2384
        %2386 = vrot.lane.b32.xlu0 %v2364, 16
        %v2387 = vpop.permute.xlu0 %2386
        %2388 = vrot.lane.b32.xlu0 %v2365, 16
        %v2389 = vpop.permute.xlu0 %2388
        %2390 = vrot.lane.b32.xlu0 %v2366, 16
        %v2391 = vpop.permute.xlu0 %2390
        %2392 = vrot.lane.b32.xlu0 %v2367, 16
        %v2393 = vpop.permute.xlu0 %2392
        %2394 = vrot.lane.b32.xlu0 %v2368, 16
        %v2395 = vpop.permute.xlu0 %2394
        %2396 = vrot.lane.b32.xlu0 %v2369, 16
        %v2397 = vpop.permute.xlu0 %2396
        %2398 = vrot.lane.b32.xlu0 %v2370, 16
        %v2399 = vpop.permute.xlu0 %2398
        %2400 = vrot.lane.b32.xlu0 %v2371, 16
        %v2401 = vpop.permute.xlu0 %2400
        %2402 = vrot.lane.b32.xlu0 %v2372, 16
        %v2403 = vpop.permute.xlu0 %2402
        %2404 = vrot.lane.b32.xlu0 %v2373, 16
        %v2405 = vpop.permute.xlu0 %2404
        %vm2422 = vcmask 162944
        %2423 = vst.msk [vmem:[#allocation3] sm:$0xff] %vm2422, %v2375
        %2424 = vst.msk [vmem:[#allocation3 + $0x8] sm:$0xff] %vm2422, %v2377
        %2425 = vst.msk [vmem:[#allocation3 + $0x10] sm:$0xff] %vm2422, %v2379
        %2426 = vst.msk [vmem:[#allocation3 + $0x18] sm:$0xff] %vm2422, %v2381
        %2427 = vst.msk [vmem:[#allocation3 + $0x20] sm:$0xff] %vm2422, %v2383
        %2428 = vst.msk [vmem:[#allocation3 + $0x28] sm:$0xff] %vm2422, %v2385
        %2429 = vst.msk [vmem:[#allocation3 + $0x30] sm:$0xff] %vm2422, %v2387
        %2430 = vst.msk [vmem:[#allocation3 + $0x38] sm:$0xff] %vm2422, %v2389
        %2431 = vst.msk [vmem:[#allocation3 + $0x40] sm:$0xff] %vm2422, %v2391
        %2432 = vst.msk [vmem:[#allocation3 + $0x48] sm:$0xff] %vm2422, %v2393
        %2433 = vst.msk [vmem:[#allocation3 + $0x50] sm:$0xff] %vm2422, %v2395
        %2434 = vst.msk [vmem:[#allocation3 + $0x58] sm:$0xff] %vm2422, %v2397
        %2435 = vst.msk [vmem:[#allocation3 + $0x60] sm:$0xff] %vm2422, %v2399
        %2436 = vst.msk [vmem:[#allocation3 + $0x68] sm:$0xff] %vm2422, %v2401
        %2437 = vst.msk [vmem:[#allocation3 + $0x70] sm:$0xff] %vm2422, %v2403
        %2438 = vst.msk [vmem:[#allocation3 + $0x78] sm:$0xff] %vm2422, %v2405
        %v2439 = vld [vmem:[%s445 + $0x4] sm:$0xf]
        %v2440 = vld [vmem:[%s445 + $0x8] sm:$0xf]
        %v2441 = vld [vmem:[%s445 + $0xc] sm:$0x1]
        %v2442 = vld [vmem:[%s445 + $0x14] sm:$0xf]
        %v2443 = vld [vmem:[%s445 + $0x18] sm:$0xf]
        %v2444 = vld [vmem:[%s445 + $0x1c] sm:$0x1]
        %v2445 = vld [vmem:[%s445 + $0x24] sm:$0xf]
        %v2446 = vld [vmem:[%s445 + $0x28] sm:$0xf]
        %v2447 = vld [vmem:[%s445 + $0x2c] sm:$0x1]
        %v2448 = vld [vmem:[%s445 + $0x34] sm:$0xf]
        %v2449 = vld [vmem:[%s445 + $0x38] sm:$0xf]
        %v2450 = vld [vmem:[%s445 + $0x3c] sm:$0x1]
        %v2451 = vld [vmem:[%s445 + $0x44] sm:$0xf]
        %v2452 = vld [vmem:[%s445 + $0x48] sm:$0xf]
        %v2453 = vld [vmem:[%s445 + $0x4c] sm:$0x1]
        %v2454 = vld [vmem:[%s445 + $0x54] sm:$0xf]
        %v2455 = vld [vmem:[%s445 + $0x58] sm:$0xf]
        %v2456 = vld [vmem:[%s445 + $0x5c] sm:$0x1]
        %v2457 = vld [vmem:[%s445 + $0x64] sm:$0xf]
        %v2458 = vld [vmem:[%s445 + $0x68] sm:$0xf]
        %v2459 = vld [vmem:[%s445 + $0x6c] sm:$0x1]
        %v2460 = vld [vmem:[%s445 + $0x74] sm:$0xf]
        %v2461 = vld [vmem:[%s445 + $0x78] sm:$0xf]
        %v2462 = vld [vmem:[%s445 + $0x7c] sm:$0x1]
        %v2463 = vld [vmem:[%s445 + $0xa4] sm:$0xf]
        %v2464 = vld [vmem:[%s445 + $0xa8] sm:$0xf]
        %v2465 = vld [vmem:[%s445 + $0xac] sm:$0x1]
        %v2466 = vld [vmem:[%s445 + $0xb4] sm:$0xf]
        %v2467 = vld [vmem:[%s445 + $0xb8] sm:$0xf]
        %v2468 = vld [vmem:[%s445 + $0xbc] sm:$0x1]
        %v2469 = vld [vmem:[%s445 + $0xc4] sm:$0xf]
        %v2470 = vld [vmem:[%s445 + $0xc8] sm:$0xf]
        %v2471 = vld [vmem:[%s445 + $0xcc] sm:$0x1]
        %v2472 = vld [vmem:[%s445 + $0xd4] sm:$0xf]
        %v2473 = vld [vmem:[%s445 + $0xd8] sm:$0xf]
        %v2474 = vld [vmem:[%s445 + $0xdc] sm:$0x1]
        %v2475 = vld [vmem:[%s445 + $0xe4] sm:$0xf]
        %v2476 = vld [vmem:[%s445 + $0xe8] sm:$0xf]
        %v2477 = vld [vmem:[%s445 + $0xec] sm:$0x1]
        %v2478 = vld [vmem:[%s445 + $0xf4] sm:$0xf]
        %v2479 = vld [vmem:[%s445 + $0xf8] sm:$0xf]
        %v2480 = vld [vmem:[%s445 + $0xfc] sm:$0x1]
        %v2481 = vld [vmem:[%s445 + $0x104] sm:$0xf]
        %v2482 = vld [vmem:[%s445 + $0x108] sm:$0xf]
        %v2483 = vld [vmem:[%s445 + $0x10c] sm:$0x1]
        %v2484 = vld [vmem:[%s445 + $0x114] sm:$0xf]
        %v2485 = vld [vmem:[%s445 + $0x118] sm:$0xf]
        %v2486 = vld [vmem:[%s445 + $0x11c] sm:$0x1]
        %v2488 = vshrl.u32 %v2439, 16
        %v2490 = vrot.slane %v2488, 4
        %v2491 = vshll.u32 %v2439, 16
        %v2493 = vrot.slane %v2491, 5
        %v2494 = vor.u32 %v2490, %v2493
        %v2495 = vrot.slane %v2494, 4
        %v2497 = vshll.u32 %v2440, 16
        %v2499 = vrot.slane %v2497, 5
        %v2500 = vsel %vm1251, %v2495, %v2499
        %v2501 = vshrl.u32 %v2440, 16
        %v2503 = vrot.slane %v2501, 4
        %v2504 = vor.u32 %v2503, %v2499
        %v2505 = vrot.slane %v2504, 4
        %v2507 = vshll.u32 %v2441, 16
        %v2509 = vrot.slane %v2507, 5
        %v2510 = vsel %vm1251, %v2505, %v2509
        %v2512 = vshrl.u32 %v2442, 16
        %v2514 = vrot.slane %v2512, 4
        %v2515 = vshll.u32 %v2442, 16
        %v2517 = vrot.slane %v2515, 5
        %v2518 = vor.u32 %v2514, %v2517
        %v2519 = vrot.slane %v2518, 4
        %v2521 = vshll.u32 %v2443, 16
        %v2523 = vrot.slane %v2521, 5
        %v2524 = vsel %vm1251, %v2519, %v2523
        %v2525 = vshrl.u32 %v2443, 16
        %v2527 = vrot.slane %v2525, 4
        %v2528 = vor.u32 %v2527, %v2523
        %v2529 = vrot.slane %v2528, 4
        %v2531 = vshll.u32 %v2444, 16
        %v2533 = vrot.slane %v2531, 5
        %v2534 = vsel %vm1251, %v2529, %v2533
        %v2536 = vshrl.u32 %v2445, 16
        %v2538 = vrot.slane %v2536, 4
        %v2539 = vshll.u32 %v2445, 16
        %v2541 = vrot.slane %v2539, 5
        %v2542 = vor.u32 %v2538, %v2541
        %v2543 = vrot.slane %v2542, 4
        %v2545 = vshll.u32 %v2446, 16
        %v2547 = vrot.slane %v2545, 5
        %v2548 = vsel %vm1251, %v2543, %v2547
        %v2549 = vshrl.u32 %v2446, 16
        %v2551 = vrot.slane %v2549, 4
        %v2552 = vor.u32 %v2551, %v2547
        %v2553 = vrot.slane %v2552, 4
        %v2555 = vshll.u32 %v2447, 16
        %v2557 = vrot.slane %v2555, 5
        %v2558 = vsel %vm1251, %v2553, %v2557
        %v2560 = vshrl.u32 %v2448, 16
        %v2562 = vrot.slane %v2560, 4
        %v2563 = vshll.u32 %v2448, 16
        %v2565 = vrot.slane %v2563, 5
        %v2566 = vor.u32 %v2562, %v2565
        %v2567 = vrot.slane %v2566, 4
        %v2569 = vshll.u32 %v2449, 16
        %v2571 = vrot.slane %v2569, 5
        %v2572 = vsel %vm1251, %v2567, %v2571
        %v2573 = vshrl.u32 %v2449, 16
        %v2575 = vrot.slane %v2573, 4
        %v2576 = vor.u32 %v2575, %v2571
        %v2577 = vrot.slane %v2576, 4
        %v2579 = vshll.u32 %v2450, 16
        %v2581 = vrot.slane %v2579, 5
        %v2582 = vsel %vm1251, %v2577, %v2581
        %v2584 = vshrl.u32 %v2451, 16
        %v2586 = vrot.slane %v2584, 4
        %v2587 = vshll.u32 %v2451, 16
        %v2589 = vrot.slane %v2587, 5
        %v2590 = vor.u32 %v2586, %v2589
        %v2591 = vrot.slane %v2590, 4
        %v2593 = vshll.u32 %v2452, 16
        %v2595 = vrot.slane %v2593, 5
        %v2596 = vsel %vm1251, %v2591, %v2595
        %v2597 = vshrl.u32 %v2452, 16
        %v2599 = vrot.slane %v2597, 4
        %v2600 = vor.u32 %v2599, %v2595
        %v2601 = vrot.slane %v2600, 4
        %v2603 = vshll.u32 %v2453, 16
        %v2605 = vrot.slane %v2603, 5
        %v2606 = vsel %vm1251, %v2601, %v2605
        %v2608 = vshrl.u32 %v2454, 16
        %v2610 = vrot.slane %v2608, 4
        %v2611 = vshll.u32 %v2454, 16
        %v2613 = vrot.slane %v2611, 5
        %v2614 = vor.u32 %v2610, %v2613
        %v2615 = vrot.slane %v2614, 4
        %v2617 = vshll.u32 %v2455, 16
        %v2619 = vrot.slane %v2617, 5
        %v2620 = vsel %vm1251, %v2615, %v2619
        %v2621 = vshrl.u32 %v2455, 16
        %v2623 = vrot.slane %v2621, 4
        %v2624 = vor.u32 %v2623, %v2619
        %v2625 = vrot.slane %v2624, 4
        %v2627 = vshll.u32 %v2456, 16
        %v2629 = vrot.slane %v2627, 5
        %v2630 = vsel %vm1251, %v2625, %v2629
        %v2632 = vshrl.u32 %v2457, 16
        %v2634 = vrot.slane %v2632, 4
        %v2635 = vshll.u32 %v2457, 16
        %v2637 = vrot.slane %v2635, 5
        %v2638 = vor.u32 %v2634, %v2637
        %v2639 = vrot.slane %v2638, 4
        %v2641 = vshll.u32 %v2458, 16
        %v2643 = vrot.slane %v2641, 5
        %v2644 = vsel %vm1251, %v2639, %v2643
        %v2645 = vshrl.u32 %v2458, 16
        %v2647 = vrot.slane %v2645, 4
        %v2648 = vor.u32 %v2647, %v2643
        %v2649 = vrot.slane %v2648, 4
        %v2651 = vshll.u32 %v2459, 16
        %v2653 = vrot.slane %v2651, 5
        %v2654 = vsel %vm1251, %v2649, %v2653
        %v2656 = vshrl.u32 %v2460, 16
        %v2658 = vrot.slane %v2656, 4
        %v2659 = vshll.u32 %v2460, 16
        %v2661 = vrot.slane %v2659, 5
        %v2662 = vor.u32 %v2658, %v2661
        %v2663 = vrot.slane %v2662, 4
        %v2665 = vshll.u32 %v2461, 16
        %v2667 = vrot.slane %v2665, 5
        %v2668 = vsel %vm1251, %v2663, %v2667
        %v2669 = vshrl.u32 %v2461, 16
        %v2671 = vrot.slane %v2669, 4
        %v2672 = vor.u32 %v2671, %v2667
        %v2673 = vrot.slane %v2672, 4
        %v2675 = vshll.u32 %v2462, 16
        %v2677 = vrot.slane %v2675, 5
        %v2678 = vsel %vm1251, %v2673, %v2677
        %v2680 = vshrl.u32 %v2463, 16
        %v2682 = vrot.slane %v2680, 4
        %v2683 = vshll.u32 %v2463, 16
        %v2685 = vrot.slane %v2683, 5
        %v2686 = vor.u32 %v2682, %v2685
        %v2687 = vrot.slane %v2686, 4
        %v2689 = vshll.u32 %v2464, 16
        %v2691 = vrot.slane %v2689, 5
        %v2692 = vsel %vm1251, %v2687, %v2691
        %v2693 = vshrl.u32 %v2464, 16
        %v2695 = vrot.slane %v2693, 4
        %v2696 = vor.u32 %v2695, %v2691
        %v2697 = vrot.slane %v2696, 4
        %v2699 = vshll.u32 %v2465, 16
        %v2701 = vrot.slane %v2699, 5
        %v2702 = vsel %vm1251, %v2697, %v2701
        %v2704 = vshrl.u32 %v2466, 16
        %v2706 = vrot.slane %v2704, 4
        %v2707 = vshll.u32 %v2466, 16
        %v2709 = vrot.slane %v2707, 5
        %v2710 = vor.u32 %v2706, %v2709
        %v2711 = vrot.slane %v2710, 4
        %v2713 = vshll.u32 %v2467, 16
        %v2715 = vrot.slane %v2713, 5
        %v2716 = vsel %vm1251, %v2711, %v2715
        %v2717 = vshrl.u32 %v2467, 16
        %v2719 = vrot.slane %v2717, 4
        %v2720 = vor.u32 %v2719, %v2715
        %v2721 = vrot.slane %v2720, 4
        %v2723 = vshll.u32 %v2468, 16
        %v2725 = vrot.slane %v2723, 5
        %v2726 = vsel %vm1251, %v2721, %v2725
        %v2728 = vshrl.u32 %v2469, 16
        %v2730 = vrot.slane %v2728, 4
        %v2731 = vshll.u32 %v2469, 16
        %v2733 = vrot.slane %v2731, 5
        %v2734 = vor.u32 %v2730, %v2733
        %v2735 = vrot.slane %v2734, 4
        %v2737 = vshll.u32 %v2470, 16
        %v2739 = vrot.slane %v2737, 5
        %v2740 = vsel %vm1251, %v2735, %v2739
        %v2741 = vshrl.u32 %v2470, 16
        %v2743 = vrot.slane %v2741, 4
        %v2744 = vor.u32 %v2743, %v2739
        %v2745 = vrot.slane %v2744, 4
        %v2747 = vshll.u32 %v2471, 16
        %v2749 = vrot.slane %v2747, 5
        %v2750 = vsel %vm1251, %v2745, %v2749
        %v2752 = vshrl.u32 %v2472, 16
        %v2754 = vrot.slane %v2752, 4
        %v2755 = vshll.u32 %v2472, 16
        %v2757 = vrot.slane %v2755, 5
        %v2758 = vor.u32 %v2754, %v2757
        %v2759 = vrot.slane %v2758, 4
        %v2761 = vshll.u32 %v2473, 16
        %v2763 = vrot.slane %v2761, 5
        %v2764 = vsel %vm1251, %v2759, %v2763
        %v2765 = vshrl.u32 %v2473, 16
        %v2767 = vrot.slane %v2765, 4
        %v2768 = vor.u32 %v2767, %v2763
        %v2769 = vrot.slane %v2768, 4
        %v2771 = vshll.u32 %v2474, 16
        %v2773 = vrot.slane %v2771, 5
        %v2774 = vsel %vm1251, %v2769, %v2773
        %v2776 = vshrl.u32 %v2475, 16
        %v2778 = vrot.slane %v2776, 4
        %v2779 = vshll.u32 %v2475, 16
        %v2781 = vrot.slane %v2779, 5
        %v2782 = vor.u32 %v2778, %v2781
        %v2783 = vrot.slane %v2782, 4
        %v2785 = vshll.u32 %v2476, 16
        %v2787 = vrot.slane %v2785, 5
        %v2788 = vsel %vm1251, %v2783, %v2787
        %v2789 = vshrl.u32 %v2476, 16
        %v2791 = vrot.slane %v2789, 4
        %v2792 = vor.u32 %v2791, %v2787
        %v2793 = vrot.slane %v2792, 4
        %v2795 = vshll.u32 %v2477, 16
        %v2797 = vrot.slane %v2795, 5
        %v2798 = vsel %vm1251, %v2793, %v2797
        %v2800 = vshrl.u32 %v2478, 16
        %v2802 = vrot.slane %v2800, 4
        %v2803 = vshll.u32 %v2478, 16
        %v2805 = vrot.slane %v2803, 5
        %v2806 = vor.u32 %v2802, %v2805
        %v2807 = vrot.slane %v2806, 4
        %v2809 = vshll.u32 %v2479, 16
        %v2811 = vrot.slane %v2809, 5
        %v2812 = vsel %vm1251, %v2807, %v2811
        %v2813 = vshrl.u32 %v2479, 16
        %v2815 = vrot.slane %v2813, 4
        %v2816 = vor.u32 %v2815, %v2811
        %v2817 = vrot.slane %v2816, 4
        %v2819 = vshll.u32 %v2480, 16
        %v2821 = vrot.slane %v2819, 5
        %v2822 = vsel %vm1251, %v2817, %v2821
        %v2824 = vshrl.u32 %v2481, 16
        %v2826 = vrot.slane %v2824, 4
        %v2827 = vshll.u32 %v2481, 16
        %v2829 = vrot.slane %v2827, 5
        %v2830 = vor.u32 %v2826, %v2829
        %v2831 = vrot.slane %v2830, 4
        %v2833 = vshll.u32 %v2482, 16
        %v2835 = vrot.slane %v2833, 5
        %v2836 = vsel %vm1251, %v2831, %v2835
        %v2837 = vshrl.u32 %v2482, 16
        %v2839 = vrot.slane %v2837, 4
        %v2840 = vor.u32 %v2839, %v2835
        %v2841 = vrot.slane %v2840, 4
        %v2843 = vshll.u32 %v2483, 16
        %v2845 = vrot.slane %v2843, 5
        %v2846 = vsel %vm1251, %v2841, %v2845
        %v2848 = vshrl.u32 %v2484, 16
        %v2850 = vrot.slane %v2848, 4
        %v2851 = vshll.u32 %v2484, 16
        %v2853 = vrot.slane %v2851, 5
        %v2854 = vor.u32 %v2850, %v2853
        %v2855 = vrot.slane %v2854, 4
        %v2857 = vshll.u32 %v2485, 16
        %v2859 = vrot.slane %v2857, 5
        %v2860 = vsel %vm1251, %v2855, %v2859
        %v2861 = vshrl.u32 %v2485, 16
        %v2863 = vrot.slane %v2861, 4
        %v2864 = vor.u32 %v2863, %v2859
        %v2865 = vrot.slane %v2864, 4
        %v2867 = vshll.u32 %v2486, 16
        %v2869 = vrot.slane %v2867, 5
        %v2870 = vsel %vm1251, %v2865, %v2869
        %v2871 = vunpack.c.l.b16 %v2500
        %v2872 = vunpack.c.l.b16 %v2510
        %v2873 = vunpack.c.l.b16 %v2524
        %v2874 = vunpack.c.l.b16 %v2534
        %v2875 = vunpack.c.l.b16 %v2548
        %v2876 = vunpack.c.l.b16 %v2558
        %v2877 = vunpack.c.l.b16 %v2572
        %v2878 = vunpack.c.l.b16 %v2582
        %v2879 = vunpack.c.l.b16 %v2596
        %v2880 = vunpack.c.l.b16 %v2606
        %v2881 = vunpack.c.l.b16 %v2620
        %v2882 = vunpack.c.l.b16 %v2630
        %v2883 = vunpack.c.l.b16 %v2644
        %v2884 = vunpack.c.l.b16 %v2654
        %v2885 = vunpack.c.l.b16 %v2668
        %v2886 = vunpack.c.l.b16 %v2678
        %v2887 = vunpack.c.l.b16 %v2692
        %v2888 = vunpack.c.l.b16 %v2702
        %v2889 = vunpack.c.l.b16 %v2716
        %v2890 = vunpack.c.l.b16 %v2726
        %v2891 = vunpack.c.l.b16 %v2740
        %v2892 = vunpack.c.l.b16 %v2750
        %v2893 = vunpack.c.l.b16 %v2764
        %v2894 = vunpack.c.l.b16 %v2774
        %v2895 = vunpack.c.l.b16 %v2788
        %v2896 = vunpack.c.l.b16 %v2798
        %v2897 = vunpack.c.l.b16 %v2812
        %v2898 = vunpack.c.l.b16 %v2822
        %v2899 = vunpack.c.l.b16 %v2836
        %v2900 = vunpack.c.l.b16 %v2846
        %v2901 = vunpack.c.l.b16 %v2860
        %v2902 = vunpack.c.l.b16 %v2870
        %v2903 = vpack.c.b16 %v2872, %v2871
        %v2904 = vpack.c.b16 %v2874, %v2873
        %v2905 = vpack.c.b16 %v2876, %v2875
        %v2906 = vpack.c.b16 %v2878, %v2877
        %v2907 = vpack.c.b16 %v2880, %v2879
        %v2908 = vpack.c.b16 %v2882, %v2881
        %v2909 = vpack.c.b16 %v2884, %v2883
        %v2910 = vpack.c.b16 %v2886, %v2885
        %v2911 = vpack.c.b16 %v2888, %v2887
        %v2912 = vpack.c.b16 %v2890, %v2889
        %v2913 = vpack.c.b16 %v2892, %v2891
        %v2914 = vpack.c.b16 %v2894, %v2893
        %v2915 = vpack.c.b16 %v2896, %v2895
        %v2916 = vpack.c.b16 %v2898, %v2897
        %v2917 = vpack.c.b16 %v2900, %v2899
        %v2918 = vpack.c.b16 %v2902, %v2901
        %2919 = vrot.lane.b32.xlu0 %v2903, 20
        %v2920 = vpop.permute.xlu0 %2919
        %2921 = vrot.lane.b32.xlu0 %v2904, 20
        %v2922 = vpop.permute.xlu0 %2921
        %2923 = vrot.lane.b32.xlu0 %v2905, 20
        %v2924 = vpop.permute.xlu0 %2923
        %2925 = vrot.lane.b32.xlu0 %v2906, 20
        %v2926 = vpop.permute.xlu0 %2925
        %2927 = vrot.lane.b32.xlu0 %v2907, 20
        %v2928 = vpop.permute.xlu0 %2927
        %2929 = vrot.lane.b32.xlu0 %v2908, 20
        %v2930 = vpop.permute.xlu0 %2929
        %2931 = vrot.lane.b32.xlu0 %v2909, 20
        %v2932 = vpop.permute.xlu0 %2931
        %2933 = vrot.lane.b32.xlu0 %v2910, 20
        %v2934 = vpop.permute.xlu0 %2933
        %2935 = vrot.lane.b32.xlu0 %v2911, 20
        %v2936 = vpop.permute.xlu0 %2935
        %2937 = vrot.lane.b32.xlu0 %v2912, 20
        %v2938 = vpop.permute.xlu0 %2937
        %2939 = vrot.lane.b32.xlu0 %v2913, 20
        %v2940 = vpop.permute.xlu0 %2939
        %2941 = vrot.lane.b32.xlu0 %v2914, 20
        %v2942 = vpop.permute.xlu0 %2941
        %2943 = vrot.lane.b32.xlu0 %v2915, 20
        %v2944 = vpop.permute.xlu0 %2943
        %2945 = vrot.lane.b32.xlu0 %v2916, 20
        %v2946 = vpop.permute.xlu0 %2945
        %2947 = vrot.lane.b32.xlu0 %v2917, 20
        %v2948 = vpop.permute.xlu0 %2947
        %2949 = vrot.lane.b32.xlu0 %v2918, 20
        %v2950 = vpop.permute.xlu0 %2949
        %vm2967 = vcmask 195744
        %2968 = vst.msk [vmem:[#allocation3] sm:$0xff] %vm2967, %v2920
        %2969 = vst.msk [vmem:[#allocation3 + $0x8] sm:$0xff] %vm2967, %v2922
        %2970 = vst.msk [vmem:[#allocation3 + $0x10] sm:$0xff] %vm2967, %v2924
        %2971 = vst.msk [vmem:[#allocation3 + $0x18] sm:$0xff] %vm2967, %v2926
        %2972 = vst.msk [vmem:[#allocation3 + $0x20] sm:$0xff] %vm2967, %v2928
        %2973 = vst.msk [vmem:[#allocation3 + $0x28] sm:$0xff] %vm2967, %v2930
        %2974 = vst.msk [vmem:[#allocation3 + $0x30] sm:$0xff] %vm2967, %v2932
        %2975 = vst.msk [vmem:[#allocation3 + $0x38] sm:$0xff] %vm2967, %v2934
        %2976 = vst.msk [vmem:[#allocation3 + $0x40] sm:$0xff] %vm2967, %v2936
        %2977 = vst.msk [vmem:[#allocation3 + $0x48] sm:$0xff] %vm2967, %v2938
        %2978 = vst.msk [vmem:[#allocation3 + $0x50] sm:$0xff] %vm2967, %v2940
        %2979 = vst.msk [vmem:[#allocation3 + $0x58] sm:$0xff] %vm2967, %v2942
        %2980 = vst.msk [vmem:[#allocation3 + $0x60] sm:$0xff] %vm2967, %v2944
        %2981 = vst.msk [vmem:[#allocation3 + $0x68] sm:$0xff] %vm2967, %v2946
        %2982 = vst.msk [vmem:[#allocation3 + $0x70] sm:$0xff] %vm2967, %v2948
        %2983 = vst.msk [vmem:[#allocation3 + $0x78] sm:$0xff] %vm2967, %v2950
        %s2984 = scalar_lea.vmem [#allocation2], 32
        %v2985 = vld [vmem:[%s2984] sm:$0x8]
        %v2986 = vld [vmem:[%s2984 + $0x4] sm:$0xf]
        %v2987 = vld [vmem:[%s2984 + $0x8] sm:$0xf]
        %v2988 = vld [vmem:[%s2984 + $0x10] sm:$0x8]
        %v2989 = vld [vmem:[%s2984 + $0x14] sm:$0xf]
        %v2990 = vld [vmem:[%s2984 + $0x18] sm:$0xf]
        %v2991 = vld [vmem:[%s2984 + $0x20] sm:$0x8]
        %v2992 = vld [vmem:[%s2984 + $0x24] sm:$0xf]
        %v2993 = vld [vmem:[%s2984 + $0x28] sm:$0xf]
        %v2994 = vld [vmem:[%s2984 + $0x30] sm:$0x8]
        %v2995 = vld [vmem:[%s2984 + $0x34] sm:$0xf]
        %v2996 = vld [vmem:[%s2984 + $0x38] sm:$0xf]
        %v2997 = vld [vmem:[%s2984 + $0x40] sm:$0x8]
        %v2998 = vld [vmem:[%s2984 + $0x44] sm:$0xf]
        %v2999 = vld [vmem:[%s2984 + $0x48] sm:$0xf]
        %v3000 = vld [vmem:[%s2984 + $0x50] sm:$0x8]
        %v3001 = vld [vmem:[%s2984 + $0x54] sm:$0xf]
        %v3002 = vld [vmem:[%s2984 + $0x58] sm:$0xf]
        %v3003 = vld [vmem:[%s2984 + $0x60] sm:$0x8]
        %v3004 = vld [vmem:[%s2984 + $0x64] sm:$0xf]
        %v3005 = vld [vmem:[%s2984 + $0x68] sm:$0xf]
        %v3006 = vld [vmem:[%s2984 + $0x70] sm:$0x8]
        %v3007 = vld [vmem:[%s2984 + $0x74] sm:$0xf]
        %v3008 = vld [vmem:[%s2984 + $0x78] sm:$0xf]
        %v3009 = vld [vmem:[%s2984 + $0xa0] sm:$0x8]
        %v3010 = vld [vmem:[%s2984 + $0xa4] sm:$0xf]
        %v3011 = vld [vmem:[%s2984 + $0xa8] sm:$0xf]
        %v3012 = vld [vmem:[%s2984 + $0xb0] sm:$0x8]
        %v3013 = vld [vmem:[%s2984 + $0xb4] sm:$0xf]
        %v3014 = vld [vmem:[%s2984 + $0xb8] sm:$0xf]
        %v3015 = vld [vmem:[%s2984 + $0xc0] sm:$0x8]
        %v3016 = vld [vmem:[%s2984 + $0xc4] sm:$0xf]
        %v3017 = vld [vmem:[%s2984 + $0xc8] sm:$0xf]
        %v3018 = vld [vmem:[%s2984 + $0xd0] sm:$0x8]
        %v3019 = vld [vmem:[%s2984 + $0xd4] sm:$0xf]
        %v3020 = vld [vmem:[%s2984 + $0xd8] sm:$0xf]
        %v3021 = vld [vmem:[%s2984 + $0xe0] sm:$0x8]
        %v3022 = vld [vmem:[%s2984 + $0xe4] sm:$0xf]
        %v3023 = vld [vmem:[%s2984 + $0xe8] sm:$0xf]
        %v3024 = vld [vmem:[%s2984 + $0xf0] sm:$0x8]
        %v3025 = vld [vmem:[%s2984 + $0xf4] sm:$0xf]
        %v3026 = vld [vmem:[%s2984 + $0xf8] sm:$0xf]
        %v3027 = vld [vmem:[%s2984 + $0x100] sm:$0x8]
        %v3028 = vld [vmem:[%s2984 + $0x104] sm:$0xf]
        %v3029 = vld [vmem:[%s2984 + $0x108] sm:$0xf]
        %v3030 = vld [vmem:[%s2984 + $0x110] sm:$0x8]
        %v3031 = vld [vmem:[%s2984 + $0x114] sm:$0xf]
        %v3032 = vld [vmem:[%s2984 + $0x118] sm:$0xf]
        %v3034 = vshrl.u32 %v2985, 16
        %v3036 = vrot.slane %v3034, 7
        %v3037 = vrot.slane %v3036, 4
        %v3039 = vshrl.u32 %v2986, 16
        %v3041 = vrot.slane %v3039, 7
        %v3042 = vshll.u32 %v2986, 16
        %v3044 = vor.u32 %v3041, %v3042
        %v3045 = vsel %vm590, %v3037, %v3044
        %v3046 = vrot.slane %v3041, 4
        %v3048 = vshrl.u32 %v2987, 16
        %v3050 = vrot.slane %v3048, 7
        %v3051 = vshll.u32 %v2987, 16
        %v3053 = vor.u32 %v3050, %v3051
        %v3054 = vsel %vm590, %v3046, %v3053
        %v3056 = vshrl.u32 %v2988, 16
        %v3058 = vrot.slane %v3056, 7
        %v3059 = vrot.slane %v3058, 4
        %v3061 = vshrl.u32 %v2989, 16
        %v3063 = vrot.slane %v3061, 7
        %v3064 = vshll.u32 %v2989, 16
        %v3066 = vor.u32 %v3063, %v3064
        %v3067 = vsel %vm590, %v3059, %v3066
        %v3068 = vrot.slane %v3063, 4
        %v3070 = vshrl.u32 %v2990, 16
        %v3072 = vrot.slane %v3070, 7
        %v3073 = vshll.u32 %v2990, 16
        %v3075 = vor.u32 %v3072, %v3073
        %v3076 = vsel %vm590, %v3068, %v3075
        %v3078 = vshrl.u32 %v2991, 16
        %v3080 = vrot.slane %v3078, 7
        %v3081 = vrot.slane %v3080, 4
        %v3083 = vshrl.u32 %v2992, 16
        %v3085 = vrot.slane %v3083, 7
        %v3086 = vshll.u32 %v2992, 16
        %v3088 = vor.u32 %v3085, %v3086
        %v3089 = vsel %vm590, %v3081, %v3088
        %v3090 = vrot.slane %v3085, 4
        %v3092 = vshrl.u32 %v2993, 16
        %v3094 = vrot.slane %v3092, 7
        %v3095 = vshll.u32 %v2993, 16
        %v3097 = vor.u32 %v3094, %v3095
        %v3098 = vsel %vm590, %v3090, %v3097
        %v3100 = vshrl.u32 %v2994, 16
        %v3102 = vrot.slane %v3100, 7
        %v3103 = vrot.slane %v3102, 4
        %v3105 = vshrl.u32 %v2995, 16
        %v3107 = vrot.slane %v3105, 7
        %v3108 = vshll.u32 %v2995, 16
        %v3110 = vor.u32 %v3107, %v3108
        %v3111 = vsel %vm590, %v3103, %v3110
        %v3112 = vrot.slane %v3107, 4
        %v3114 = vshrl.u32 %v2996, 16
        %v3116 = vrot.slane %v3114, 7
        %v3117 = vshll.u32 %v2996, 16
        %v3119 = vor.u32 %v3116, %v3117
        %v3120 = vsel %vm590, %v3112, %v3119
        %v3122 = vshrl.u32 %v2997, 16
        %v3124 = vrot.slane %v3122, 7
        %v3125 = vrot.slane %v3124, 4
        %v3127 = vshrl.u32 %v2998, 16
        %v3129 = vrot.slane %v3127, 7
        %v3130 = vshll.u32 %v2998, 16
        %v3132 = vor.u32 %v3129, %v3130
        %v3133 = vsel %vm590, %v3125, %v3132
        %v3134 = vrot.slane %v3129, 4
        %v3136 = vshrl.u32 %v2999, 16
        %v3138 = vrot.slane %v3136, 7
        %v3139 = vshll.u32 %v2999, 16
        %v3141 = vor.u32 %v3138, %v3139
        %v3142 = vsel %vm590, %v3134, %v3141
        %v3144 = vshrl.u32 %v3000, 16
        %v3146 = vrot.slane %v3144, 7
        %v3147 = vrot.slane %v3146, 4
        %v3149 = vshrl.u32 %v3001, 16
        %v3151 = vrot.slane %v3149, 7
        %v3152 = vshll.u32 %v3001, 16
        %v3154 = vor.u32 %v3151, %v3152
        %v3155 = vsel %vm590, %v3147, %v3154
        %v3156 = vrot.slane %v3151, 4
        %v3158 = vshrl.u32 %v3002, 16
        %v3160 = vrot.slane %v3158, 7
        %v3161 = vshll.u32 %v3002, 16
        %v3163 = vor.u32 %v3160, %v3161
        %v3164 = vsel %vm590, %v3156, %v3163
        %v3166 = vshrl.u32 %v3003, 16
        %v3168 = vrot.slane %v3166, 7
        %v3169 = vrot.slane %v3168, 4
        %v3171 = vshrl.u32 %v3004, 16
        %v3173 = vrot.slane %v3171, 7
        %v3174 = vshll.u32 %v3004, 16
        %v3176 = vor.u32 %v3173, %v3174
        %v3177 = vsel %vm590, %v3169, %v3176
        %v3178 = vrot.slane %v3173, 4
        %v3180 = vshrl.u32 %v3005, 16
        %v3182 = vrot.slane %v3180, 7
        %v3183 = vshll.u32 %v3005, 16
        %v3185 = vor.u32 %v3182, %v3183
        %v3186 = vsel %vm590, %v3178, %v3185
        %v3188 = vshrl.u32 %v3006, 16
        %v3190 = vrot.slane %v3188, 7
        %v3191 = vrot.slane %v3190, 4
        %v3193 = vshrl.u32 %v3007, 16
        %v3195 = vrot.slane %v3193, 7
        %v3196 = vshll.u32 %v3007, 16
        %v3198 = vor.u32 %v3195, %v3196
        %v3199 = vsel %vm590, %v3191, %v3198
        %v3200 = vrot.slane %v3195, 4
        %v3202 = vshrl.u32 %v3008, 16
        %v3204 = vrot.slane %v3202, 7
        %v3205 = vshll.u32 %v3008, 16
        %v3207 = vor.u32 %v3204, %v3205
        %v3208 = vsel %vm590, %v3200, %v3207
        %v3210 = vshrl.u32 %v3009, 16
        %v3212 = vrot.slane %v3210, 7
        %v3213 = vrot.slane %v3212, 4
        %v3215 = vshrl.u32 %v3010, 16
        %v3217 = vrot.slane %v3215, 7
        %v3218 = vshll.u32 %v3010, 16
        %v3220 = vor.u32 %v3217, %v3218
        %v3221 = vsel %vm590, %v3213, %v3220
        %v3222 = vrot.slane %v3217, 4
        %v3224 = vshrl.u32 %v3011, 16
        %v3226 = vrot.slane %v3224, 7
        %v3227 = vshll.u32 %v3011, 16
        %v3229 = vor.u32 %v3226, %v3227
        %v3230 = vsel %vm590, %v3222, %v3229
        %v3232 = vshrl.u32 %v3012, 16
        %v3234 = vrot.slane %v3232, 7
        %v3235 = vrot.slane %v3234, 4
        %v3237 = vshrl.u32 %v3013, 16
        %v3239 = vrot.slane %v3237, 7
        %v3240 = vshll.u32 %v3013, 16
        %v3242 = vor.u32 %v3239, %v3240
        %v3243 = vsel %vm590, %v3235, %v3242
        %v3244 = vrot.slane %v3239, 4
        %v3246 = vshrl.u32 %v3014, 16
        %v3248 = vrot.slane %v3246, 7
        %v3249 = vshll.u32 %v3014, 16
        %v3251 = vor.u32 %v3248, %v3249
        %v3252 = vsel %vm590, %v3244, %v3251
        %v3254 = vshrl.u32 %v3015, 16
        %v3256 = vrot.slane %v3254, 7
        %v3257 = vrot.slane %v3256, 4
        %v3259 = vshrl.u32 %v3016, 16
        %v3261 = vrot.slane %v3259, 7
        %v3262 = vshll.u32 %v3016, 16
        %v3264 = vor.u32 %v3261, %v3262
        %v3265 = vsel %vm590, %v3257, %v3264
        %v3266 = vrot.slane %v3261, 4
        %v3268 = vshrl.u32 %v3017, 16
        %v3270 = vrot.slane %v3268, 7
        %v3271 = vshll.u32 %v3017, 16
        %v3273 = vor.u32 %v3270, %v3271
        %v3274 = vsel %vm590, %v3266, %v3273
        %v3276 = vshrl.u32 %v3018, 16
        %v3278 = vrot.slane %v3276, 7
        %v3279 = vrot.slane %v3278, 4
        %v3281 = vshrl.u32 %v3019, 16
        %v3283 = vrot.slane %v3281, 7
        %v3284 = vshll.u32 %v3019, 16
        %v3286 = vor.u32 %v3283, %v3284
        %v3287 = vsel %vm590, %v3279, %v3286
        %v3288 = vrot.slane %v3283, 4
        %v3290 = vshrl.u32 %v3020, 16
        %v3292 = vrot.slane %v3290, 7
        %v3293 = vshll.u32 %v3020, 16
        %v3295 = vor.u32 %v3292, %v3293
        %v3296 = vsel %vm590, %v3288, %v3295
        %v3298 = vshrl.u32 %v3021, 16
        %v3300 = vrot.slane %v3298, 7
        %v3301 = vrot.slane %v3300, 4
        %v3303 = vshrl.u32 %v3022, 16
        %v3305 = vrot.slane %v3303, 7
        %v3306 = vshll.u32 %v3022, 16
        %v3308 = vor.u32 %v3305, %v3306
        %v3309 = vsel %vm590, %v3301, %v3308
        %v3310 = vrot.slane %v3305, 4
        %v3312 = vshrl.u32 %v3023, 16
        %v3314 = vrot.slane %v3312, 7
        %v3315 = vshll.u32 %v3023, 16
        %v3317 = vor.u32 %v3314, %v3315
        %v3318 = vsel %vm590, %v3310, %v3317
        %v3320 = vshrl.u32 %v3024, 16
        %v3322 = vrot.slane %v3320, 7
        %v3323 = vrot.slane %v3322, 4
        %v3325 = vshrl.u32 %v3025, 16
        %v3327 = vrot.slane %v3325, 7
        %v3328 = vshll.u32 %v3025, 16
        %v3330 = vor.u32 %v3327, %v3328
        %v3331 = vsel %vm590, %v3323, %v3330
        %v3332 = vrot.slane %v3327, 4
        %v3334 = vshrl.u32 %v3026, 16
        %v3336 = vrot.slane %v3334, 7
        %v3337 = vshll.u32 %v3026, 16
        %v3339 = vor.u32 %v3336, %v3337
        %v3340 = vsel %vm590, %v3332, %v3339
        %v3342 = vshrl.u32 %v3027, 16
        %v3344 = vrot.slane %v3342, 7
        %v3345 = vrot.slane %v3344, 4
        %v3347 = vshrl.u32 %v3028, 16
        %v3349 = vrot.slane %v3347, 7
        %v3350 = vshll.u32 %v3028, 16
        %v3352 = vor.u32 %v3349, %v3350
        %v3353 = vsel %vm590, %v3345, %v3352
        %v3354 = vrot.slane %v3349, 4
        %v3356 = vshrl.u32 %v3029, 16
        %v3358 = vrot.slane %v3356, 7
        %v3359 = vshll.u32 %v3029, 16
        %v3361 = vor.u32 %v3358, %v3359
        %v3362 = vsel %vm590, %v3354, %v3361
        %v3364 = vshrl.u32 %v3030, 16
        %v3366 = vrot.slane %v3364, 7
        %v3367 = vrot.slane %v3366, 4
        %v3369 = vshrl.u32 %v3031, 16
        %v3371 = vrot.slane %v3369, 7
        %v3372 = vshll.u32 %v3031, 16
        %v3374 = vor.u32 %v3371, %v3372
        %v3375 = vsel %vm590, %v3367, %v3374
        %v3376 = vrot.slane %v3371, 4
        %v3378 = vshrl.u32 %v3032, 16
        %v3380 = vrot.slane %v3378, 7
        %v3381 = vshll.u32 %v3032, 16
        %v3383 = vor.u32 %v3380, %v3381
        %v3384 = vsel %vm590, %v3376, %v3383
        %v3385 = vunpack.c.l.b16 %v3045
        %v3386 = vunpack.c.l.b16 %v3054
        %v3387 = vunpack.c.l.b16 %v3067
        %v3388 = vunpack.c.l.b16 %v3076
        %v3389 = vunpack.c.l.b16 %v3089
        %v3390 = vunpack.c.l.b16 %v3098
        %v3391 = vunpack.c.l.b16 %v3111
        %v3392 = vunpack.c.l.b16 %v3120
        %v3393 = vunpack.c.l.b16 %v3133
        %v3394 = vunpack.c.l.b16 %v3142
        %v3395 = vunpack.c.l.b16 %v3155
        %v3396 = vunpack.c.l.b16 %v3164
        %v3397 = vunpack.c.l.b16 %v3177
        %v3398 = vunpack.c.l.b16 %v3186
        %v3399 = vunpack.c.l.b16 %v3199
        %v3400 = vunpack.c.l.b16 %v3208
        %v3401 = vunpack.c.l.b16 %v3221
        %v3402 = vunpack.c.l.b16 %v3230
        %v3403 = vunpack.c.l.b16 %v3243
        %v3404 = vunpack.c.l.b16 %v3252
        %v3405 = vunpack.c.l.b16 %v3265
        %v3406 = vunpack.c.l.b16 %v3274
        %v3407 = vunpack.c.l.b16 %v3287
        %v3408 = vunpack.c.l.b16 %v3296
        %v3409 = vunpack.c.l.b16 %v3309
        %v3410 = vunpack.c.l.b16 %v3318
        %v3411 = vunpack.c.l.b16 %v3331
        %v3412 = vunpack.c.l.b16 %v3340
        %v3413 = vunpack.c.l.b16 %v3353
        %v3414 = vunpack.c.l.b16 %v3362
        %v3415 = vunpack.c.l.b16 %v3375
        %v3416 = vunpack.c.l.b16 %v3384
        %v3417 = vpack.c.b16 %v3386, %v3385
        %v3418 = vpack.c.b16 %v3388, %v3387
        %v3419 = vpack.c.b16 %v3390, %v3389
        %v3420 = vpack.c.b16 %v3392, %v3391
        %v3421 = vpack.c.b16 %v3394, %v3393
        %v3422 = vpack.c.b16 %v3396, %v3395
        %v3423 = vpack.c.b16 %v3398, %v3397
        %v3424 = vpack.c.b16 %v3400, %v3399
        %v3425 = vpack.c.b16 %v3402, %v3401
        %v3426 = vpack.c.b16 %v3404, %v3403
        %v3427 = vpack.c.b16 %v3406, %v3405
        %v3428 = vpack.c.b16 %v3408, %v3407
        %v3429 = vpack.c.b16 %v3410, %v3409
        %v3430 = vpack.c.b16 %v3412, %v3411
        %v3431 = vpack.c.b16 %v3414, %v3413
        %v3432 = vpack.c.b16 %v3416, %v3415
        %3433 = vrot.lane.b32.xlu0 %v3417, 24
        %v3434 = vpop.permute.xlu0 %3433
        %3435 = vrot.lane.b32.xlu0 %v3418, 24
        %v3436 = vpop.permute.xlu0 %3435
        %3437 = vrot.lane.b32.xlu0 %v3419, 24
        %v3438 = vpop.permute.xlu0 %3437
        %3439 = vrot.lane.b32.xlu0 %v3420, 24
        %v3440 = vpop.permute.xlu0 %3439
        %3441 = vrot.lane.b32.xlu0 %v3421, 24
        %v3442 = vpop.permute.xlu0 %3441
        %3443 = vrot.lane.b32.xlu0 %v3422, 24
        %v3444 = vpop.permute.xlu0 %3443
        %3445 = vrot.lane.b32.xlu0 %v3423, 24
        %v3446 = vpop.permute.xlu0 %3445
        %3447 = vrot.lane.b32.xlu0 %v3424, 24
        %v3448 = vpop.permute.xlu0 %3447
        %3449 = vrot.lane.b32.xlu0 %v3425, 24
        %v3450 = vpop.permute.xlu0 %3449
        %3451 = vrot.lane.b32.xlu0 %v3426, 24
        %v3452 = vpop.permute.xlu0 %3451
        %3453 = vrot.lane.b32.xlu0 %v3427, 24
        %v3454 = vpop.permute.xlu0 %3453
        %3455 = vrot.lane.b32.xlu0 %v3428, 24
        %v3456 = vpop.permute.xlu0 %3455
        %3457 = vrot.lane.b32.xlu0 %v3429, 24
        %v3458 = vpop.permute.xlu0 %3457
        %3459 = vrot.lane.b32.xlu0 %v3430, 24
        %v3460 = vpop.permute.xlu0 %3459
        %3461 = vrot.lane.b32.xlu0 %v3431, 24
        %v3462 = vpop.permute.xlu0 %3461
        %3463 = vrot.lane.b32.xlu0 %v3432, 24
        %v3464 = vpop.permute.xlu0 %3463
        %vm3481 = vcmask 228544
        %3482 = vst.msk [vmem:[#allocation3] sm:$0xff] %vm3481, %v3434
        %3483 = vst.msk [vmem:[#allocation3 + $0x8] sm:$0xff] %vm3481, %v3436
        %3484 = vst.msk [vmem:[#allocation3 + $0x10] sm:$0xff] %vm3481, %v3438
        %3485 = vst.msk [vmem:[#allocation3 + $0x18] sm:$0xff] %vm3481, %v3440
        %3486 = vst.msk [vmem:[#allocation3 + $0x20] sm:$0xff] %vm3481, %v3442
        %3487 = vst.msk [vmem:[#allocation3 + $0x28] sm:$0xff] %vm3481, %v3444
        %3488 = vst.msk [vmem:[#allocation3 + $0x30] sm:$0xff] %vm3481, %v3446
        %3489 = vst.msk [vmem:[#allocation3 + $0x38] sm:$0xff] %vm3481, %v3448
        %3490 = vst.msk [vmem:[#allocation3 + $0x40] sm:$0xff] %vm3481, %v3450
        %3491 = vst.msk [vmem:[#allocation3 + $0x48] sm:$0xff] %vm3481, %v3452
        %3492 = vst.msk [vmem:[#allocation3 + $0x50] sm:$0xff] %vm3481, %v3454
        %3493 = vst.msk [vmem:[#allocation3 + $0x58] sm:$0xff] %vm3481, %v3456
        %3494 = vst.msk [vmem:[#allocation3 + $0x60] sm:$0xff] %vm3481, %v3458
        %3495 = vst.msk [vmem:[#allocation3 + $0x68] sm:$0xff] %vm3481, %v3460
        %3496 = vst.msk [vmem:[#allocation3 + $0x70] sm:$0xff] %vm3481, %v3462
        %3497 = vst.msk [vmem:[#allocation3 + $0x78] sm:$0xff] %vm3481, %v3464
        %v3498 = vld [vmem:[%s2984 + $0x4] sm:$0xf]
        %v3499 = vld [vmem:[%s2984 + $0x8] sm:$0xf]
        %v3500 = vld [vmem:[%s2984 + $0x14] sm:$0xf]
        %v3501 = vld [vmem:[%s2984 + $0x18] sm:$0xf]
        %v3502 = vld [vmem:[%s2984 + $0x24] sm:$0xf]
        %v3503 = vld [vmem:[%s2984 + $0x28] sm:$0xf]
        %v3504 = vld [vmem:[%s2984 + $0x34] sm:$0xf]
        %v3505 = vld [vmem:[%s2984 + $0x38] sm:$0xf]
        %v3506 = vld [vmem:[%s2984 + $0x44] sm:$0xf]
        %v3507 = vld [vmem:[%s2984 + $0x48] sm:$0xf]
        %v3508 = vld [vmem:[%s2984 + $0x54] sm:$0xf]
        %v3509 = vld [vmem:[%s2984 + $0x58] sm:$0xf]
        %v3510 = vld [vmem:[%s2984 + $0x64] sm:$0xf]
        %v3511 = vld [vmem:[%s2984 + $0x68] sm:$0xf]
        %v3512 = vld [vmem:[%s2984 + $0x74] sm:$0xf]
        %v3513 = vld [vmem:[%s2984 + $0x78] sm:$0xf]
        %v3514 = vld [vmem:[%s2984 + $0xa4] sm:$0xf]
        %v3515 = vld [vmem:[%s2984 + $0xa8] sm:$0xf]
        %v3516 = vld [vmem:[%s2984 + $0xb4] sm:$0xf]
        %v3517 = vld [vmem:[%s2984 + $0xb8] sm:$0xf]
        %v3518 = vld [vmem:[%s2984 + $0xc4] sm:$0xf]
        %v3519 = vld [vmem:[%s2984 + $0xc8] sm:$0xf]
        %v3520 = vld [vmem:[%s2984 + $0xd4] sm:$0xf]
        %v3521 = vld [vmem:[%s2984 + $0xd8] sm:$0xf]
        %v3522 = vld [vmem:[%s2984 + $0xe4] sm:$0xf]
        %v3523 = vld [vmem:[%s2984 + $0xe8] sm:$0xf]
        %v3524 = vld [vmem:[%s2984 + $0xf4] sm:$0xf]
        %v3525 = vld [vmem:[%s2984 + $0xf8] sm:$0xf]
        %v3526 = vld [vmem:[%s2984 + $0x104] sm:$0xf]
        %v3527 = vld [vmem:[%s2984 + $0x108] sm:$0xf]
        %v3528 = vld [vmem:[%s2984 + $0x114] sm:$0xf]
        %v3529 = vld [vmem:[%s2984 + $0x118] sm:$0xf]
        %v3562 = vunpack.c.l.b16 %v3498
        %v3563 = vunpack.c.l.b16 %v3499
        %v3564 = vunpack.c.l.b16 %v3500
        %v3565 = vunpack.c.l.b16 %v3501
        %v3566 = vunpack.c.l.b16 %v3502
        %v3567 = vunpack.c.l.b16 %v3503
        %v3568 = vunpack.c.l.b16 %v3504
        %v3569 = vunpack.c.l.b16 %v3505
        %v3570 = vunpack.c.l.b16 %v3506
        %v3571 = vunpack.c.l.b16 %v3507
        %v3572 = vunpack.c.l.b16 %v3508
        %v3573 = vunpack.c.l.b16 %v3509
        %v3574 = vunpack.c.l.b16 %v3510
        %v3575 = vunpack.c.l.b16 %v3511
        %v3576 = vunpack.c.l.b16 %v3512
        %v3577 = vunpack.c.l.b16 %v3513
        %v3578 = vunpack.c.l.b16 %v3514
        %v3579 = vunpack.c.l.b16 %v3515
        %v3580 = vunpack.c.l.b16 %v3516
        %v3581 = vunpack.c.l.b16 %v3517
        %v3582 = vunpack.c.l.b16 %v3518
        %v3583 = vunpack.c.l.b16 %v3519
        %v3584 = vunpack.c.l.b16 %v3520
        %v3585 = vunpack.c.l.b16 %v3521
        %v3586 = vunpack.c.l.b16 %v3522
        %v3587 = vunpack.c.l.b16 %v3523
        %v3588 = vunpack.c.l.b16 %v3524
        %v3589 = vunpack.c.l.b16 %v3525
        %v3590 = vunpack.c.l.b16 %v3526
        %v3591 = vunpack.c.l.b16 %v3527
        %v3592 = vunpack.c.l.b16 %v3528
        %v3593 = vunpack.c.l.b16 %v3529
        %v3594 = vpack.c.b16 %v3563, %v3562
        %v3595 = vpack.c.b16 %v3565, %v3564
        %v3596 = vpack.c.b16 %v3567, %v3566
        %v3597 = vpack.c.b16 %v3569, %v3568
        %v3598 = vpack.c.b16 %v3571, %v3570
        %v3599 = vpack.c.b16 %v3573, %v3572
        %v3600 = vpack.c.b16 %v3575, %v3574
        %v3601 = vpack.c.b16 %v3577, %v3576
        %v3602 = vpack.c.b16 %v3579, %v3578
        %v3603 = vpack.c.b16 %v3581, %v3580
        %v3604 = vpack.c.b16 %v3583, %v3582
        %v3605 = vpack.c.b16 %v3585, %v3584
        %v3606 = vpack.c.b16 %v3587, %v3586
        %v3607 = vpack.c.b16 %v3589, %v3588
        %v3608 = vpack.c.b16 %v3591, %v3590
        %v3609 = vpack.c.b16 %v3593, %v3592
        %3610 = vrot.lane.b32.xlu0 %v3594, 28
        %v3611 = vpop.permute.xlu0 %3610
        %3612 = vrot.lane.b32.xlu0 %v3595, 28
        %v3613 = vpop.permute.xlu0 %3612
        %3614 = vrot.lane.b32.xlu0 %v3596, 28
        %v3615 = vpop.permute.xlu0 %3614
        %3616 = vrot.lane.b32.xlu0 %v3597, 28
        %v3617 = vpop.permute.xlu0 %3616
        %3618 = vrot.lane.b32.xlu0 %v3598, 28
        %v3619 = vpop.permute.xlu0 %3618
        %3620 = vrot.lane.b32.xlu0 %v3599, 28
        %v3621 = vpop.permute.xlu0 %3620
        %3622 = vrot.lane.b32.xlu0 %v3600, 28
        %v3623 = vpop.permute.xlu0 %3622
        %3624 = vrot.lane.b32.xlu0 %v3601, 28
        %v3625 = vpop.permute.xlu0 %3624
        %3626 = vrot.lane.b32.xlu0 %v3602, 28
        %v3627 = vpop.permute.xlu0 %3626
        %3628 = vrot.lane.b32.xlu0 %v3603, 28
        %v3629 = vpop.permute.xlu0 %3628
        %3630 = vrot.lane.b32.xlu0 %v3604, 28
        %v3631 = vpop.permute.xlu0 %3630
        %3632 = vrot.lane.b32.xlu0 %v3605, 28
        %v3633 = vpop.permute.xlu0 %3632
        %3634 = vrot.lane.b32.xlu0 %v3606, 28
        %v3635 = vpop.permute.xlu0 %3634
        %3636 = vrot.lane.b32.xlu0 %v3607, 28
        %v3637 = vpop.permute.xlu0 %3636
        %3638 = vrot.lane.b32.xlu0 %v3608, 28
        %v3639 = vpop.permute.xlu0 %3638
        %3640 = vrot.lane.b32.xlu0 %v3609, 28
        %v3641 = vpop.permute.xlu0 %3640
        %vm3658 = vcmask 261344
        %3659 = vst.msk [vmem:[#allocation3] sm:$0xff] %vm3658, %v3611
        %3660 = vst.msk [vmem:[#allocation3 + $0x8] sm:$0xff] %vm3658, %v3613
        %3661 = vst.msk [vmem:[#allocation3 + $0x10] sm:$0xff] %vm3658, %v3615
        %3662 = vst.msk [vmem:[#allocation3 + $0x18] sm:$0xff] %vm3658, %v3617
        %3663 = vst.msk [vmem:[#allocation3 + $0x20] sm:$0xff] %vm3658, %v3619
        %3664 = vst.msk [vmem:[#allocation3 + $0x28] sm:$0xff] %vm3658, %v3621
        %3665 = vst.msk [vmem:[#allocation3 + $0x30] sm:$0xff] %vm3658, %v3623
        %3666 = vst.msk [vmem:[#allocation3 + $0x38] sm:$0xff] %vm3658, %v3625
        %3667 = vst.msk [vmem:[#allocation3 + $0x40] sm:$0xff] %vm3658, %v3627
        %3668 = vst.msk [vmem:[#allocation3 + $0x48] sm:$0xff] %vm3658, %v3629
        %3669 = vst.msk [vmem:[#allocation3 + $0x50] sm:$0xff] %vm3658, %v3631
        %3670 = vst.msk [vmem:[#allocation3 + $0x58] sm:$0xff] %vm3658, %v3633
        %3671 = vst.msk [vmem:[#allocation3 + $0x60] sm:$0xff] %vm3658, %v3635
        %3672 = vst.msk [vmem:[#allocation3 + $0x68] sm:$0xff] %vm3658, %v3637
        %3673 = vst.msk [vmem:[#allocation3 + $0x70] sm:$0xff] %vm3658, %v3639
        %3674 = vst.msk [vmem:[#allocation3 + $0x78] sm:$0xff] %vm3658, %v3641
        %v3675 = vld [vmem:[%s2984 + $0x4] sm:$0xf]
        %v3676 = vld [vmem:[%s2984 + $0x8] sm:$0xf]
        %v3677 = vld [vmem:[%s2984 + $0xc] sm:$0x1]
        %v3678 = vld [vmem:[%s2984 + $0x14] sm:$0xf]
        %v3679 = vld [vmem:[%s2984 + $0x18] sm:$0xf]
        %v3680 = vld [vmem:[%s2984 + $0x1c] sm:$0x1]
        %v3681 = vld [vmem:[%s2984 + $0x24] sm:$0xf]
        %v3682 = vld [vmem:[%s2984 + $0x28] sm:$0xf]
        %v3683 = vld [vmem:[%s2984 + $0x2c] sm:$0x1]
        %v3684 = vld [vmem:[%s2984 + $0x34] sm:$0xf]
        %v3685 = vld [vmem:[%s2984 + $0x38] sm:$0xf]
        %v3686 = vld [vmem:[%s2984 + $0x3c] sm:$0x1]
        %v3687 = vld [vmem:[%s2984 + $0x44] sm:$0xf]
        %v3688 = vld [vmem:[%s2984 + $0x48] sm:$0xf]
        %v3689 = vld [vmem:[%s2984 + $0x4c] sm:$0x1]
        %v3690 = vld [vmem:[%s2984 + $0x54] sm:$0xf]
        %v3691 = vld [vmem:[%s2984 + $0x58] sm:$0xf]
        %v3692 = vld [vmem:[%s2984 + $0x5c] sm:$0x1]
        %v3693 = vld [vmem:[%s2984 + $0x64] sm:$0xf]
        %v3694 = vld [vmem:[%s2984 + $0x68] sm:$0xf]
        %v3695 = vld [vmem:[%s2984 + $0x6c] sm:$0x1]
        %v3696 = vld [vmem:[%s2984 + $0x74] sm:$0xf]
        %v3697 = vld [vmem:[%s2984 + $0x78] sm:$0xf]
        %v3698 = vld [vmem:[%s2984 + $0x7c] sm:$0x1]
        %v3699 = vld [vmem:[%s2984 + $0xa4] sm:$0xf]
        %v3700 = vld [vmem:[%s2984 + $0xa8] sm:$0xf]
        %v3701 = vld [vmem:[%s2984 + $0xac] sm:$0x1]
        %v3702 = vld [vmem:[%s2984 + $0xb4] sm:$0xf]
        %v3703 = vld [vmem:[%s2984 + $0xb8] sm:$0xf]
        %v3704 = vld [vmem:[%s2984 + $0xbc] sm:$0x1]
        %v3705 = vld [vmem:[%s2984 + $0xc4] sm:$0xf]
        %v3706 = vld [vmem:[%s2984 + $0xc8] sm:$0xf]
        %v3707 = vld [vmem:[%s2984 + $0xcc] sm:$0x1]
        %v3708 = vld [vmem:[%s2984 + $0xd4] sm:$0xf]
        %v3709 = vld [vmem:[%s2984 + $0xd8] sm:$0xf]
        %v3710 = vld [vmem:[%s2984 + $0xdc] sm:$0x1]
        %v3711 = vld [vmem:[%s2984 + $0xe4] sm:$0xf]
        %v3712 = vld [vmem:[%s2984 + $0xe8] sm:$0xf]
        %v3713 = vld [vmem:[%s2984 + $0xec] sm:$0x1]
        %v3714 = vld [vmem:[%s2984 + $0xf4] sm:$0xf]
        %v3715 = vld [vmem:[%s2984 + $0xf8] sm:$0xf]
        %v3716 = vld [vmem:[%s2984 + $0xfc] sm:$0x1]
        %v3717 = vld [vmem:[%s2984 + $0x104] sm:$0xf]
        %v3718 = vld [vmem:[%s2984 + $0x108] sm:$0xf]
        %v3719 = vld [vmem:[%s2984 + $0x10c] sm:$0x1]
        %v3720 = vld [vmem:[%s2984 + $0x114] sm:$0xf]
        %v3721 = vld [vmem:[%s2984 + $0x118] sm:$0xf]
        %v3722 = vld [vmem:[%s2984 + $0x11c] sm:$0x1]
        %v3724 = vshrl.u32 %v3675, 16
        %v3726 = vrot.slane %v3724, 4
        %v3727 = vshll.u32 %v3675, 16
        %v3729 = vrot.slane %v3727, 5
        %v3730 = vor.u32 %v3726, %v3729
        %v3731 = vrot.slane %v3730, 4
        %v3733 = vshll.u32 %v3676, 16
        %v3735 = vrot.slane %v3733, 5
        %v3736 = vsel %vm1251, %v3731, %v3735
        %v3737 = vshrl.u32 %v3676, 16
        %v3739 = vrot.slane %v3737, 4
        %v3740 = vor.u32 %v3739, %v3735
        %v3741 = vrot.slane %v3740, 4
        %v3743 = vshll.u32 %v3677, 16
        %v3745 = vrot.slane %v3743, 5
        %v3746 = vsel %vm1251, %v3741, %v3745
        %v3748 = vshrl.u32 %v3678, 16
        %v3750 = vrot.slane %v3748, 4
        %v3751 = vshll.u32 %v3678, 16
        %v3753 = vrot.slane %v3751, 5
        %v3754 = vor.u32 %v3750, %v3753
        %v3755 = vrot.slane %v3754, 4
        %v3757 = vshll.u32 %v3679, 16
        %v3759 = vrot.slane %v3757, 5
        %v3760 = vsel %vm1251, %v3755, %v3759
        %v3761 = vshrl.u32 %v3679, 16
        %v3763 = vrot.slane %v3761, 4
        %v3764 = vor.u32 %v3763, %v3759
        %v3765 = vrot.slane %v3764, 4
        %v3767 = vshll.u32 %v3680, 16
        %v3769 = vrot.slane %v3767, 5
        %v3770 = vsel %vm1251, %v3765, %v3769
        %v3772 = vshrl.u32 %v3681, 16
        %v3774 = vrot.slane %v3772, 4
        %v3775 = vshll.u32 %v3681, 16
        %v3777 = vrot.slane %v3775, 5
        %v3778 = vor.u32 %v3774, %v3777
        %v3779 = vrot.slane %v3778, 4
        %v3781 = vshll.u32 %v3682, 16
        %v3783 = vrot.slane %v3781, 5
        %v3784 = vsel %vm1251, %v3779, %v3783
        %v3785 = vshrl.u32 %v3682, 16
        %v3787 = vrot.slane %v3785, 4
        %v3788 = vor.u32 %v3787, %v3783
        %v3789 = vrot.slane %v3788, 4
        %v3791 = vshll.u32 %v3683, 16
        %v3793 = vrot.slane %v3791, 5
        %v3794 = vsel %vm1251, %v3789, %v3793
        %v3796 = vshrl.u32 %v3684, 16
        %v3798 = vrot.slane %v3796, 4
        %v3799 = vshll.u32 %v3684, 16
        %v3801 = vrot.slane %v3799, 5
        %v3802 = vor.u32 %v3798, %v3801
        %v3803 = vrot.slane %v3802, 4
        %v3805 = vshll.u32 %v3685, 16
        %v3807 = vrot.slane %v3805, 5
        %v3808 = vsel %vm1251, %v3803, %v3807
        %v3809 = vshrl.u32 %v3685, 16
        %v3811 = vrot.slane %v3809, 4
        %v3812 = vor.u32 %v3811, %v3807
        %v3813 = vrot.slane %v3812, 4
        %v3815 = vshll.u32 %v3686, 16
        %v3817 = vrot.slane %v3815, 5
        %v3818 = vsel %vm1251, %v3813, %v3817
        %v3820 = vshrl.u32 %v3687, 16
        %v3822 = vrot.slane %v3820, 4
        %v3823 = vshll.u32 %v3687, 16
        %v3825 = vrot.slane %v3823, 5
        %v3826 = vor.u32 %v3822, %v3825
        %v3827 = vrot.slane %v3826, 4
        %v3829 = vshll.u32 %v3688, 16
        %v3831 = vrot.slane %v3829, 5
        %v3832 = vsel %vm1251, %v3827, %v3831
        %v3833 = vshrl.u32 %v3688, 16
        %v3835 = vrot.slane %v3833, 4
        %v3836 = vor.u32 %v3835, %v3831
        %v3837 = vrot.slane %v3836, 4
        %v3839 = vshll.u32 %v3689, 16
        %v3841 = vrot.slane %v3839, 5
        %v3842 = vsel %vm1251, %v3837, %v3841
        %v3844 = vshrl.u32 %v3690, 16
        %v3846 = vrot.slane %v3844, 4
        %v3847 = vshll.u32 %v3690, 16
        %v3849 = vrot.slane %v3847, 5
        %v3850 = vor.u32 %v3846, %v3849
        %v3851 = vrot.slane %v3850, 4
        %v3853 = vshll.u32 %v3691, 16
        %v3855 = vrot.slane %v3853, 5
        %v3856 = vsel %vm1251, %v3851, %v3855
        %v3857 = vshrl.u32 %v3691, 16
        %v3859 = vrot.slane %v3857, 4
        %v3860 = vor.u32 %v3859, %v3855
        %v3861 = vrot.slane %v3860, 4
        %v3863 = vshll.u32 %v3692, 16
        %v3865 = vrot.slane %v3863, 5
        %v3866 = vsel %vm1251, %v3861, %v3865
        %v3868 = vshrl.u32 %v3693, 16
        %v3870 = vrot.slane %v3868, 4
        %v3871 = vshll.u32 %v3693, 16
        %v3873 = vrot.slane %v3871, 5
        %v3874 = vor.u32 %v3870, %v3873
        %v3875 = vrot.slane %v3874, 4
        %v3877 = vshll.u32 %v3694, 16
        %v3879 = vrot.slane %v3877, 5
        %v3880 = vsel %vm1251, %v3875, %v3879
        %v3881 = vshrl.u32 %v3694, 16
        %v3883 = vrot.slane %v3881, 4
        %v3884 = vor.u32 %v3883, %v3879
        %v3885 = vrot.slane %v3884, 4
        %v3887 = vshll.u32 %v3695, 16
        %v3889 = vrot.slane %v3887, 5
        %v3890 = vsel %vm1251, %v3885, %v3889
        %v3892 = vshrl.u32 %v3696, 16
        %v3894 = vrot.slane %v3892, 4
        %v3895 = vshll.u32 %v3696, 16
        %v3897 = vrot.slane %v3895, 5
        %v3898 = vor.u32 %v3894, %v3897
        %v3899 = vrot.slane %v3898, 4
        %v3901 = vshll.u32 %v3697, 16
        %v3903 = vrot.slane %v3901, 5
        %v3904 = vsel %vm1251, %v3899, %v3903
        %v3905 = vshrl.u32 %v3697, 16
        %v3907 = vrot.slane %v3905, 4
        %v3908 = vor.u32 %v3907, %v3903
        %v3909 = vrot.slane %v3908, 4
        %v3911 = vshll.u32 %v3698, 16
        %v3913 = vrot.slane %v3911, 5
        %v3914 = vsel %vm1251, %v3909, %v3913
        %v3916 = vshrl.u32 %v3699, 16
        %v3918 = vrot.slane %v3916, 4
        %v3919 = vshll.u32 %v3699, 16
        %v3921 = vrot.slane %v3919, 5
        %v3922 = vor.u32 %v3918, %v3921
        %v3923 = vrot.slane %v3922, 4
        %v3925 = vshll.u32 %v3700, 16
        %v3927 = vrot.slane %v3925, 5
        %v3928 = vsel %vm1251, %v3923, %v3927
        %v3929 = vshrl.u32 %v3700, 16
        %v3931 = vrot.slane %v3929, 4
        %v3932 = vor.u32 %v3931, %v3927
        %v3933 = vrot.slane %v3932, 4
        %v3935 = vshll.u32 %v3701, 16
        %v3937 = vrot.slane %v3935, 5
        %v3938 = vsel %vm1251, %v3933, %v3937
        %v3940 = vshrl.u32 %v3702, 16
        %v3942 = vrot.slane %v3940, 4
        %v3943 = vshll.u32 %v3702, 16
        %v3945 = vrot.slane %v3943, 5
        %v3946 = vor.u32 %v3942, %v3945
        %v3947 = vrot.slane %v3946, 4
        %v3949 = vshll.u32 %v3703, 16
        %v3951 = vrot.slane %v3949, 5
        %v3952 = vsel %vm1251, %v3947, %v3951
        %v3953 = vshrl.u32 %v3703, 16
        %v3955 = vrot.slane %v3953, 4
        %v3956 = vor.u32 %v3955, %v3951
        %v3957 = vrot.slane %v3956, 4
        %v3959 = vshll.u32 %v3704, 16
        %v3961 = vrot.slane %v3959, 5
        %v3962 = vsel %vm1251, %v3957, %v3961
        %v3964 = vshrl.u32 %v3705, 16
        %v3966 = vrot.slane %v3964, 4
        %v3967 = vshll.u32 %v3705, 16
        %v3969 = vrot.slane %v3967, 5
        %v3970 = vor.u32 %v3966, %v3969
        %v3971 = vrot.slane %v3970, 4
        %v3973 = vshll.u32 %v3706, 16
        %v3975 = vrot.slane %v3973, 5
        %v3976 = vsel %vm1251, %v3971, %v3975
        %v3977 = vshrl.u32 %v3706, 16
        %v3979 = vrot.slane %v3977, 4
        %v3980 = vor.u32 %v3979, %v3975
        %v3981 = vrot.slane %v3980, 4
        %v3983 = vshll.u32 %v3707, 16
        %v3985 = vrot.slane %v3983, 5
        %v3986 = vsel %vm1251, %v3981, %v3985
        %v3988 = vshrl.u32 %v3708, 16
        %v3990 = vrot.slane %v3988, 4
        %v3991 = vshll.u32 %v3708, 16
        %v3993 = vrot.slane %v3991, 5
        %v3994 = vor.u32 %v3990, %v3993
        %v3995 = vrot.slane %v3994, 4
        %v3997 = vshll.u32 %v3709, 16
        %v3999 = vrot.slane %v3997, 5
        %v4000 = vsel %vm1251, %v3995, %v3999
        %v4001 = vshrl.u32 %v3709, 16
        %v4003 = vrot.slane %v4001, 4
        %v4004 = vor.u32 %v4003, %v3999
        %v4005 = vrot.slane %v4004, 4
        %v4007 = vshll.u32 %v3710, 16
        %v4009 = vrot.slane %v4007, 5
        %v4010 = vsel %vm1251, %v4005, %v4009
        %v4012 = vshrl.u32 %v3711, 16
        %v4014 = vrot.slane %v4012, 4
        %v4015 = vshll.u32 %v3711, 16
        %v4017 = vrot.slane %v4015, 5
        %v4018 = vor.u32 %v4014, %v4017
        %v4019 = vrot.slane %v4018, 4
        %v4021 = vshll.u32 %v3712, 16
        %v4023 = vrot.slane %v4021, 5
        %v4024 = vsel %vm1251, %v4019, %v4023
        %v4025 = vshrl.u32 %v3712, 16
        %v4027 = vrot.slane %v4025, 4
        %v4028 = vor.u32 %v4027, %v4023
        %v4029 = vrot.slane %v4028, 4
        %v4031 = vshll.u32 %v3713, 16
        %v4033 = vrot.slane %v4031, 5
        %v4034 = vsel %vm1251, %v4029, %v4033
        %v4036 = vshrl.u32 %v3714, 16
        %v4038 = vrot.slane %v4036, 4
        %v4039 = vshll.u32 %v3714, 16
        %v4041 = vrot.slane %v4039, 5
        %v4042 = vor.u32 %v4038, %v4041
        %v4043 = vrot.slane %v4042, 4
        %v4045 = vshll.u32 %v3715, 16
        %v4047 = vrot.slane %v4045, 5
        %v4048 = vsel %vm1251, %v4043, %v4047
        %v4049 = vshrl.u32 %v3715, 16
        %v4051 = vrot.slane %v4049, 4
        %v4052 = vor.u32 %v4051, %v4047
        %v4053 = vrot.slane %v4052, 4
        %v4055 = vshll.u32 %v3716, 16
        %v4057 = vrot.slane %v4055, 5
        %v4058 = vsel %vm1251, %v4053, %v4057
        %v4060 = vshrl.u32 %v3717, 16
        %v4062 = vrot.slane %v4060, 4
        %v4063 = vshll.u32 %v3717, 16
        %v4065 = vrot.slane %v4063, 5
        %v4066 = vor.u32 %v4062, %v4065
        %v4067 = vrot.slane %v4066, 4
        %v4069 = vshll.u32 %v3718, 16
        %v4071 = vrot.slane %v4069, 5
        %v4072 = vsel %vm1251, %v4067, %v4071
        %v4073 = vshrl.u32 %v3718, 16
        %v4075 = vrot.slane %v4073, 4
        %v4076 = vor.u32 %v4075, %v4071
        %v4077 = vrot.slane %v4076, 4
        %v4079 = vshll.u32 %v3719, 16
        %v4081 = vrot.slane %v4079, 5
        %v4082 = vsel %vm1251, %v4077, %v4081
        %v4084 = vshrl.u32 %v3720, 16
        %v4086 = vrot.slane %v4084, 4
        %v4087 = vshll.u32 %v3720, 16
        %v4089 = vrot.slane %v4087, 5
        %v4090 = vor.u32 %v4086, %v4089
        %v4091 = vrot.slane %v4090, 4
        %v4093 = vshll.u32 %v3721, 16
        %v4095 = vrot.slane %v4093, 5
        %v4096 = vsel %vm1251, %v4091, %v4095
        %v4097 = vshrl.u32 %v3721, 16
        %v4099 = vrot.slane %v4097, 4
        %v4100 = vor.u32 %v4099, %v4095
        %v4101 = vrot.slane %v4100, 4
        %v4103 = vshll.u32 %v3722, 16
        %v4105 = vrot.slane %v4103, 5
        %v4106 = vsel %vm1251, %v4101, %v4105
        %v4107 = vunpack.c.l.b16 %v3736
        %v4108 = vunpack.c.l.b16 %v3746
        %v4109 = vunpack.c.l.b16 %v3760
        %v4110 = vunpack.c.l.b16 %v3770
        %v4111 = vunpack.c.l.b16 %v3784
        %v4112 = vunpack.c.l.b16 %v3794
        %v4113 = vunpack.c.l.b16 %v3808
        %v4114 = vunpack.c.l.b16 %v3818
        %v4115 = vunpack.c.l.b16 %v3832
        %v4116 = vunpack.c.l.b16 %v3842
        %v4117 = vunpack.c.l.b16 %v3856
        %v4118 = vunpack.c.l.b16 %v3866
        %v4119 = vunpack.c.l.b16 %v3880
        %v4120 = vunpack.c.l.b16 %v3890
        %v4121 = vunpack.c.l.b16 %v3904
        %v4122 = vunpack.c.l.b16 %v3914
        %v4123 = vunpack.c.l.b16 %v3928
        %v4124 = vunpack.c.l.b16 %v3938
        %v4125 = vunpack.c.l.b16 %v3952
        %v4126 = vunpack.c.l.b16 %v3962
        %v4127 = vunpack.c.l.b16 %v3976
        %v4128 = vunpack.c.l.b16 %v3986
        %v4129 = vunpack.c.l.b16 %v4000
        %v4130 = vunpack.c.l.b16 %v4010
        %v4131 = vunpack.c.l.b16 %v4024
        %v4132 = vunpack.c.l.b16 %v4034
        %v4133 = vunpack.c.l.b16 %v4048
        %v4134 = vunpack.c.l.b16 %v4058
        %v4135 = vunpack.c.l.b16 %v4072
        %v4136 = vunpack.c.l.b16 %v4082
        %v4137 = vunpack.c.l.b16 %v4096
        %v4138 = vunpack.c.l.b16 %v4106
        %v4139 = vpack.c.b16 %v4108, %v4107
        %v4140 = vpack.c.b16 %v4110, %v4109
        %v4141 = vpack.c.b16 %v4112, %v4111
        %v4142 = vpack.c.b16 %v4114, %v4113
        %v4143 = vpack.c.b16 %v4116, %v4115
        %v4144 = vpack.c.b16 %v4118, %v4117
        %v4145 = vpack.c.b16 %v4120, %v4119
        %v4146 = vpack.c.b16 %v4122, %v4121
        %v4147 = vpack.c.b16 %v4124, %v4123
        %v4148 = vpack.c.b16 %v4126, %v4125
        %v4149 = vpack.c.b16 %v4128, %v4127
        %v4150 = vpack.c.b16 %v4130, %v4129
        %v4151 = vpack.c.b16 %v4132, %v4131
        %v4152 = vpack.c.b16 %v4134, %v4133
        %v4153 = vpack.c.b16 %v4136, %v4135
        %v4154 = vpack.c.b16 %v4138, %v4137
        %4155 = vrot.lane.b32.xlu0 %v4139, 32
        %v4156 = vpop.permute.xlu0 %4155
        %4157 = vrot.lane.b32.xlu0 %v4140, 32
        %v4158 = vpop.permute.xlu0 %4157
        %4159 = vrot.lane.b32.xlu0 %v4141, 32
        %v4160 = vpop.permute.xlu0 %4159
        %4161 = vrot.lane.b32.xlu0 %v4142, 32
        %v4162 = vpop.permute.xlu0 %4161
        %4163 = vrot.lane.b32.xlu0 %v4143, 32
        %v4164 = vpop.permute.xlu0 %4163
        %4165 = vrot.lane.b32.xlu0 %v4144, 32
        %v4166 = vpop.permute.xlu0 %4165
        %4167 = vrot.lane.b32.xlu0 %v4145, 32
        %v4168 = vpop.permute.xlu0 %4167
        %4169 = vrot.lane.b32.xlu0 %v4146, 32
        %v4170 = vpop.permute.xlu0 %4169
        %4171 = vrot.lane.b32.xlu0 %v4147, 32
        %v4172 = vpop.permute.xlu0 %4171
        %4173 = vrot.lane.b32.xlu0 %v4148, 32
        %v4174 = vpop.permute.xlu0 %4173
        %4175 = vrot.lane.b32.xlu0 %v4149, 32
        %v4176 = vpop.permute.xlu0 %4175
        %4177 = vrot.lane.b32.xlu0 %v4150, 32
        %v4178 = vpop.permute.xlu0 %4177
        %4179 = vrot.lane.b32.xlu0 %v4151, 32
        %v4180 = vpop.permute.xlu0 %4179
        %4181 = vrot.lane.b32.xlu0 %v4152, 32
        %v4182 = vpop.permute.xlu0 %4181
        %4183 = vrot.lane.b32.xlu0 %v4153, 32
        %v4184 = vpop.permute.xlu0 %4183
        %4185 = vrot.lane.b32.xlu0 %v4154, 32
        %v4186 = vpop.permute.xlu0 %4185
        %vm4203 = vcmask 294144
        %4204 = vst.msk [vmem:[#allocation3] sm:$0xff] %vm4203, %v4156
        %4205 = vst.msk [vmem:[#allocation3 + $0x8] sm:$0xff] %vm4203, %v4158
        %4206 = vst.msk [vmem:[#allocation3 + $0x10] sm:$0xff] %vm4203, %v4160
        %4207 = vst.msk [vmem:[#allocation3 + $0x18] sm:$0xff] %vm4203, %v4162
        %4208 = vst.msk [vmem:[#allocation3 + $0x20] sm:$0xff] %vm4203, %v4164
        %4209 = vst.msk [vmem:[#allocation3 + $0x28] sm:$0xff] %vm4203, %v4166
        %4210 = vst.msk [vmem:[#allocation3 + $0x30] sm:$0xff] %vm4203, %v4168
        %4211 = vst.msk [vmem:[#allocation3 + $0x38] sm:$0xff] %vm4203, %v4170
        %4212 = vst.msk [vmem:[#allocation3 + $0x40] sm:$0xff] %vm4203, %v4172
        %4213 = vst.msk [vmem:[#allocation3 + $0x48] sm:$0xff] %vm4203, %v4174
        %4214 = vst.msk [vmem:[#allocation3 + $0x50] sm:$0xff] %vm4203, %v4176
        %4215 = vst.msk [vmem:[#allocation3 + $0x58] sm:$0xff] %vm4203, %v4178
        %4216 = vst.msk [vmem:[#allocation3 + $0x60] sm:$0xff] %vm4203, %v4180
        %4217 = vst.msk [vmem:[#allocation3 + $0x68] sm:$0xff] %vm4203, %v4182
        %4218 = vst.msk [vmem:[#allocation3 + $0x70] sm:$0xff] %vm4203, %v4184
        %4219 = vst.msk [vmem:[#allocation3 + $0x78] sm:$0xff] %vm4203, %v4186
        %v4220 = vld [vmem:[#allocation3] sm:$0xff]
        %v4221 = vld [vmem:[#allocation3 + $0x8] sm:$0xff]
        %v4222 = vld [vmem:[#allocation3 + $0x10] sm:$0xff]
        %v4223 = vld [vmem:[#allocation3 + $0x18] sm:$0xff]
        %v4224 = vld [vmem:[#allocation3 + $0x20] sm:$0xff]
        %v4225 = vld [vmem:[#allocation3 + $0x28] sm:$0xff]
        %v4226 = vld [vmem:[#allocation3 + $0x30] sm:$0xff]
        %v4227 = vld [vmem:[#allocation3 + $0x38] sm:$0xff]
        %v4228 = vld [vmem:[#allocation3 + $0x40] sm:$0xff]
        %v4229 = vld [vmem:[#allocation3 + $0x48] sm:$0xff]
        %v4230 = vld [vmem:[#allocation3 + $0x50] sm:$0xff]
        %v4231 = vld [vmem:[#allocation3 + $0x58] sm:$0xff]
        %v4232 = vld [vmem:[#allocation3 + $0x60] sm:$0xff]
        %v4233 = vld [vmem:[#allocation3 + $0x68] sm:$0xff]
        %v4234 = vld [vmem:[#allocation3 + $0x70] sm:$0xff]
        %v4235 = vld [vmem:[#allocation3 + $0x78] sm:$0xff]
        %v4236 = vld [vmem:[%s1] sm:$0xf]
        %v4237 = vld [vmem:[%s1 + $0x4] sm:$0xf]
        %v4238 = vld [vmem:[%s1 + $0x8] sm:$0xf]
        %v4239 = vld [vmem:[%s1 + $0xc] sm:$0xf]
        %v4240 = vld [vmem:[%s1 + $0x10] sm:$0x3]
        %v4246 = vunpack.c.l.b16 %v4236
        %v4247 = vunpack.c.l.b16 %v4237
        %v4248 = vunpack.c.l.b16 %v4238
        %v4249 = vunpack.c.l.b16 %v4239
        %v4250 = vunpack.c.l.b16 %v4240
        %v4251 = vpack.c.b16 %v4247, %v4246
        %v4252 = vpack.c.b16 %v4249, %v4248
        %v4253 = vpack.c.b16 %v4250, %v4250
        %vm4256 = vcmask 293888
        %v4258 = vsel %vm4256, %v4220, 0
        %v4261 = vsel %vm4256, %v4221, 0
        %v4264 = vsel %vm4256, %v4222, 0
        %v4267 = vsel %vm4256, %v4223, 0
        %v4270 = vsel %vm4256, %v4224, 0
        %v4273 = vsel %vm4256, %v4225, 0
        %v4276 = vsel %vm4256, %v4226, 0
        %v4279 = vsel %vm4256, %v4227, 0
        %v4282 = vsel %vm4256, %v4228, 0
        %v4285 = vsel %vm4256, %v4229, 0
        %v4288 = vsel %vm4256, %v4230, 0
        %v4291 = vsel %vm4256, %v4231, 0
        %v4294 = vsel %vm4256, %v4232, 0
        %v4297 = vsel %vm4256, %v4233, 0
        %v4300 = vsel %vm4256, %v4234, 0
        %v4303 = vsel %vm4256, %v4235, 0
        %vm4305 = vcmask 1041408
        %v4307 = vsel %vm4305, %v4253, 0
        %4309 = vmatprep.subr.bf16.mxu0 0
        %4310 = vmatpush1.bf16.msra.mxu0 %v4251
        %4311 = vmatprep.subr.bf16.mxu0 0
        %4312 = vmatpush1.bf16.msra.mxu0 %v4252
        %4313 = vmatprep.subr.bf16.mxu0 0
        %4314 = vmatpush1.bf16.msra.mxu0 %v4307
        %4315 = vmatprep.subr.bf16.mxu0 0
        %4316 = vmatpush1.bf16.msra.mxu0 0
        %4317 = vmatprep.subr.bf16.mxu0 0
        %4318 = vmatpush1.bf16.msra.mxu0 0
        %4319 = vmatprep.subr.bf16.mxu0 0
        %4320 = vmatpush1.bf16.msra.mxu0 0
        %4321 = vmatprep.subr.bf16.mxu0 0
        %4322 = vmatpush1.bf16.msra.mxu0 0
        %4323 = vmatprep.subr.bf16.mxu0 0
        %4324 = vmatpush1.bf16.msra.mxu0 0
        %4325 = vmatprep.subr.bf16.mxu0 0
        %4326 = vmatpush1.bf16.msra.mxu0 0
        %4327 = vmatprep.subr.bf16.mxu0 0
        %4328 = vmatpush1.bf16.msra.mxu0 0
        %4329 = vmatprep.subr.bf16.mxu0 0
        %4330 = vmatpush1.bf16.msra.mxu0 0
        %4331 = vmatprep.subr.bf16.mxu0 0
        %4332 = vmatpush1.bf16.msra.mxu0 0
        %4333 = vmatprep.subr.bf16.mxu0 0
        %4334 = vmatpush1.bf16.msra.mxu0 0
        %4335 = vmatprep.subr.bf16.mxu0 0
        %4336 = vmatpush1.bf16.msra.mxu0 0
        %4337 = vmatprep.subr.bf16.mxu0 0
        %4338 = vmatpush1.bf16.msra.mxu0 0
        %4339 = vmatprep.subr.bf16.mxu0 0
        %4340 = vmatpush1.bf16.msra.mxu0 0
        %4341 = vmatprep.mubr.bf16.mxu0 0
        %4342 = vmatmul.mubr.bf16.gmra.mrb[0].mxu0 %v4258
        %v4343 = vpop.f32.mrb[0].mxu0
        %v4344 = vadd.f32 0.0, %v4343
        %v4345 = vpop.f32.mrb[0].mxu0
        %v4346 = vpop.f32.mrb[0].mxu0
        %v4347 = vadd.f32 0.0, %v4346
        %v4348 = vpop.f32.mrb[0].mxu0
        %4349 = vmatprep.mubr.bf16.mxu0 0
        %4350 = vmatmul.mubr.bf16.gmra.mrb[0].mxu0 %v4261
        %v4351 = vpop.f32.mrb[0].mxu0
        %v4352 = vadd.f32 0.0, %v4351
        %v4353 = vpop.f32.mrb[0].mxu0
        %v4354 = vpop.f32.mrb[0].mxu0
        %v4355 = vadd.f32 0.0, %v4354
        %v4356 = vpop.f32.mrb[0].mxu0
        %4357 = vmatprep.mubr.bf16.mxu0 0
        %4358 = vmatmul.mubr.bf16.gmra.mrb[0].mxu0 %v4264
        %v4359 = vpop.f32.mrb[0].mxu0
        %v4360 = vadd.f32 0.0, %v4359
        %v4361 = vpop.f32.mrb[0].mxu0
        %v4362 = vpop.f32.mrb[0].mxu0
        %v4363 = vadd.f32 0.0, %v4362
        %v4364 = vpop.f32.mrb[0].mxu0
        %4365 = vmatprep.mubr.bf16.mxu0 0
        %4366 = vmatmul.mubr.bf16.gmra.mrb[0].mxu0 %v4267
        %v4367 = vpop.f32.mrb[0].mxu0
        %v4368 = vadd.f32 0.0, %v4367
        %v4369 = vpop.f32.mrb[0].mxu0
        %v4370 = vpop.f32.mrb[0].mxu0
        %v4371 = vadd.f32 0.0, %v4370
        %v4372 = vpop.f32.mrb[0].mxu0
        %4373 = vmatprep.mubr.bf16.mxu0 0
        %4374 = vmatmul.mubr.bf16.gmra.mrb[0].mxu0 %v4270
        %v4375 = vpop.f32.mrb[0].mxu0
        %v4376 = vadd.f32 0.0, %v4375
        %v4377 = vpop.f32.mrb[0].mxu0
        %v4378 = vpop.f32.mrb[0].mxu0
        %v4379 = vadd.f32 0.0, %v4378
        %v4380 = vpop.f32.mrb[0].mxu0
        %4381 = vmatprep.mubr.bf16.mxu0 0
        %4382 = vmatmul.mubr.bf16.gmra.mrb[0].mxu0 %v4273
        %v4383 = vpop.f32.mrb[0].mxu0
        %v4384 = vadd.f32 0.0, %v4383
        %v4385 = vpop.f32.mrb[0].mxu0
        %v4386 = vpop.f32.mrb[0].mxu0
        %v4387 = vadd.f32 0.0, %v4386
        %v4388 = vpop.f32.mrb[0].mxu0
        %4389 = vmatprep.mubr.bf16.mxu0 0
        %4390 = vmatmul.mubr.bf16.gmra.mrb[0].mxu0 %v4276
        %v4391 = vpop.f32.mrb[0].mxu0
        %v4392 = vadd.f32 0.0, %v4391
        %v4393 = vpop.f32.mrb[0].mxu0
        %v4394 = vpop.f32.mrb[0].mxu0
        %v4395 = vadd.f32 0.0, %v4394
        %v4396 = vpop.f32.mrb[0].mxu0
        %4397 = vmatprep.mubr.bf16.mxu0 0
        %4398 = vmatmul.mubr.bf16.gmra.mrb[0].mxu0 %v4279
        %v4399 = vpop.f32.mrb[0].mxu0
        %v4400 = vadd.f32 0.0, %v4399
        %v4401 = vpop.f32.mrb[0].mxu0
        %v4402 = vpop.f32.mrb[0].mxu0
        %v4403 = vadd.f32 0.0, %v4402
        %v4404 = vpop.f32.mrb[0].mxu0
        %4405 = vmatprep.mubr.bf16.mxu0 0
        %4406 = vmatmul.mubr.bf16.gmra.mrb[0].mxu0 %v4282
        %v4407 = vpop.f32.mrb[0].mxu0
        %v4408 = vadd.f32 0.0, %v4407
        %v4409 = vpop.f32.mrb[0].mxu0
        %v4410 = vpop.f32.mrb[0].mxu0
        %v4411 = vadd.f32 0.0, %v4410
        %v4412 = vpop.f32.mrb[0].mxu0
        %4413 = vmatprep.mubr.bf16.mxu0 0
        %4414 = vmatmul.mubr.bf16.gmra.mrb[0].mxu0 %v4285
        %v4415 = vpop.f32.mrb[0].mxu0
        %v4416 = vadd.f32 0.0, %v4415
        %v4417 = vpop.f32.mrb[0].mxu0
        %v4418 = vpop.f32.mrb[0].mxu0
        %v4419 = vadd.f32 0.0, %v4418
        %v4420 = vpop.f32.mrb[0].mxu0
        %4421 = vmatprep.mubr.bf16.mxu0 0
        %4422 = vmatmul.mubr.bf16.gmra.mrb[0].mxu0 %v4288
        %v4423 = vpop.f32.mrb[0].mxu0
        %v4424 = vadd.f32 0.0, %v4423
        %v4425 = vpop.f32.mrb[0].mxu0
        %v4426 = vpop.f32.mrb[0].mxu0
        %v4427 = vadd.f32 0.0, %v4426
        %v4428 = vpop.f32.mrb[0].mxu0
        %4429 = vmatprep.mubr.bf16.mxu0 0
        %4430 = vmatmul.mubr.bf16.gmra.mrb[0].mxu0 %v4291
        %v4431 = vpop.f32.mrb[0].mxu0
        %v4432 = vadd.f32 0.0, %v4431
        %v4433 = vpop.f32.mrb[0].mxu0
        %v4434 = vpop.f32.mrb[0].mxu0
        %v4435 = vadd.f32 0.0, %v4434
        %v4436 = vpop.f32.mrb[0].mxu0
        %4437 = vmatprep.mubr.bf16.mxu0 0
        %4438 = vmatmul.mubr.bf16.gmra.mrb[0].mxu0 %v4294
        %v4439 = vpop.f32.mrb[0].mxu0
        %v4440 = vadd.f32 0.0, %v4439
        %v4441 = vpop.f32.mrb[0].mxu0
        %v4442 = vpop.f32.mrb[0].mxu0
        %v4443 = vadd.f32 0.0, %v4442
        %v4444 = vpop.f32.mrb[0].mxu0
        %4445 = vmatprep.mubr.bf16.mxu0 0
        %4446 = vmatmul.mubr.bf16.gmra.mrb[0].mxu0 %v4297
        %v4447 = vpop.f32.mrb[0].mxu0
        %v4448 = vadd.f32 0.0, %v4447
        %v4449 = vpop.f32.mrb[0].mxu0
        %v4450 = vpop.f32.mrb[0].mxu0
        %v4451 = vadd.f32 0.0, %v4450
        %v4452 = vpop.f32.mrb[0].mxu0
        %4453 = vmatprep.mubr.bf16.mxu0 0
        %4454 = vmatmul.mubr.bf16.gmra.mrb[0].mxu0 %v4300
        %v4455 = vpop.f32.mrb[0].mxu0
        %v4456 = vadd.f32 0.0, %v4455
        %v4457 = vpop.f32.mrb[0].mxu0
        %v4458 = vpop.f32.mrb[0].mxu0
        %v4459 = vadd.f32 0.0, %v4458
        %v4460 = vpop.f32.mrb[0].mxu0
        %4461 = vmatprep.mubr.bf16.mxu0 0
        %4462 = vmatmul.mubr.bf16.gmra.mrb[0].mxu0 %v4303
        %v4463 = vpop.f32.mrb[0].mxu0
        %v4464 = vadd.f32 0.0, %v4463
        %v4465 = vpop.f32.mrb[0].mxu0
        %v4466 = vpop.f32.mrb[0].mxu0
        %v4467 = vadd.f32 0.0, %v4466
        %v4468 = vpop.f32.mrb[0].mxu0
        %4469 = vdwg.mxu0
        %vm4470 = vcmask 64512
        %v4471 = vsel %vm4470, %v4344, 0.0
        %v4472 = vsel %vm4470, %v4347, 0.0
        %v4473 = vadd.f32 %v4471, %v4472
        %v4474 = vsel %vm4470, %v4352, 0.0
        %v4475 = vadd.f32 %v4473, %v4474
        %v4476 = vsel %vm4470, %v4355, 0.0
        %v4477 = vadd.f32 %v4475, %v4476
        %v4478 = vsel %vm4470, %v4360, 0.0
        %v4479 = vadd.f32 %v4477, %v4478
        %v4480 = vsel %vm4470, %v4363, 0.0
        %v4481 = vadd.f32 %v4479, %v4480
        %v4482 = vsel %vm4470, %v4368, 0.0
        %v4483 = vadd.f32 %v4481, %v4482
        %v4484 = vsel %vm4470, %v4371, 0.0
        %v4485 = vadd.f32 %v4483, %v4484
        %v4486 = vsel %vm4470, %v4376, 0.0
        %v4487 = vadd.f32 %v4485, %v4486
        %v4488 = vsel %vm4470, %v4379, 0.0
        %v4489 = vadd.f32 %v4487, %v4488
        %v4490 = vsel %vm4470, %v4384, 0.0
        %v4491 = vadd.f32 %v4489, %v4490
        %v4492 = vsel %vm4470, %v4387, 0.0
        %v4493 = vadd.f32 %v4491, %v4492
        %v4494 = vsel %vm4470, %v4392, 0.0
        %v4495 = vadd.f32 %v4493, %v4494
        %v4496 = vsel %vm4470, %v4395, 0.0
        %v4497 = vadd.f32 %v4495, %v4496
        %v4498 = vsel %vm4470, %v4400, 0.0
        %v4499 = vadd.f32 %v4497, %v4498
        %v4500 = vsel %vm4470, %v4403, 0.0
        %v4501 = vadd.f32 %v4499, %v4500
        %v4502 = vsel %vm4470, %v4408, 0.0
        %v4503 = vadd.f32 %v4501, %v4502
        %v4504 = vsel %vm4470, %v4411, 0.0
        %v4505 = vadd.f32 %v4503, %v4504
        %v4506 = vsel %vm4470, %v4416, 0.0
        %v4507 = vadd.f32 %v4505, %v4506
        %v4508 = vsel %vm4470, %v4419, 0.0
        %v4509 = vadd.f32 %v4507, %v4508
        %v4510 = vsel %vm4470, %v4424, 0.0
        %v4511 = vadd.f32 %v4509, %v4510
        %v4512 = vsel %vm4470, %v4427, 0.0
        %v4513 = vadd.f32 %v4511, %v4512
        %v4514 = vsel %vm4470, %v4432, 0.0
        %v4515 = vadd.f32 %v4513, %v4514
        %v4516 = vsel %vm4470, %v4435, 0.0
        %v4517 = vadd.f32 %v4515, %v4516
        %v4518 = vsel %vm4470, %v4440, 0.0
        %v4519 = vadd.f32 %v4517, %v4518
        %v4520 = vsel %vm4470, %v4443, 0.0
        %v4521 = vadd.f32 %v4519, %v4520
        %v4522 = vsel %vm4470, %v4448, 0.0
        %v4523 = vadd.f32 %v4521, %v4522
        %v4524 = vsel %vm4470, %v4451, 0.0
        %v4525 = vadd.f32 %v4523, %v4524
        %v4526 = vsel %vm4470, %v4456, 0.0
        %v4527 = vadd.f32 %v4525, %v4526
        %v4528 = vsel %vm4470, %v4459, 0.0
        %v4529 = vadd.f32 %v4527, %v4528
        %v4530 = vsel %vm4470, %v4464, 0.0
        %v4531 = vadd.f32 %v4529, %v4530
        %v4532 = vsel %vm4470, %v4467, 0.0
        %v4533 = vadd.f32 %v4531, %v4532
        %v4534 = vrot.slane %v4533, 4
        %v4535 = vadd.f32 %v4533, %v4534
        %v4536 = vrot.slane %v4535, 2
        %v4537 = vadd.f32 %v4535, %v4536
        %v4538 = vrot.slane %v4537, 1
        %v4539 = vadd.f32 %v4537, %v4538
        %vm4540 = vcmask 57344
        %4541 = vst.msk [vmem:[%s155] sm:$0x1] %vm4540, %v4539
        %v4542 = vmul.f32 %v4344, %v4344
        %v4543 = vmul.f32 %v4347, %v4347
        %v4544 = vmul.f32 %v4352, %v4352
        %v4545 = vmul.f32 %v4355, %v4355
        %v4546 = vmul.f32 %v4360, %v4360
        %v4547 = vmul.f32 %v4363, %v4363
        %v4548 = vmul.f32 %v4368, %v4368
        %v4549 = vmul.f32 %v4371, %v4371
        %v4550 = vmul.f32 %v4376, %v4376
        %v4551 = vmul.f32 %v4379, %v4379
        %v4552 = vmul.f32 %v4384, %v4384
        %v4553 = vmul.f32 %v4387, %v4387
        %v4554 = vmul.f32 %v4392, %v4392
        %v4555 = vmul.f32 %v4395, %v4395
        %v4556 = vmul.f32 %v4400, %v4400
        %v4557 = vmul.f32 %v4403, %v4403
        %v4558 = vmul.f32 %v4408, %v4408
        %v4559 = vmul.f32 %v4411, %v4411
        %v4560 = vmul.f32 %v4416, %v4416
        %v4561 = vmul.f32 %v4419, %v4419
        %v4562 = vmul.f32 %v4424, %v4424
        %v4563 = vmul.f32 %v4427, %v4427
        %v4564 = vmul.f32 %v4432, %v4432
        %v4565 = vmul.f32 %v4435, %v4435
        %v4566 = vmul.f32 %v4440, %v4440
        %v4567 = vmul.f32 %v4443, %v4443
        %v4568 = vmul.f32 %v4448, %v4448
        %v4569 = vmul.f32 %v4451, %v4451
        %v4570 = vmul.f32 %v4456, %v4456
        %v4571 = vmul.f32 %v4459, %v4459
        %v4572 = vmul.f32 %v4464, %v4464
        %v4573 = vmul.f32 %v4467, %v4467
        %v4574 = vsel %vm4470, %v4542, 0.0
        %v4575 = vsel %vm4470, %v4543, 0.0
        %v4576 = vadd.f32 %v4574, %v4575
        %v4577 = vsel %vm4470, %v4544, 0.0
        %v4578 = vadd.f32 %v4576, %v4577
        %v4579 = vsel %vm4470, %v4545, 0.0
        %v4580 = vadd.f32 %v4578, %v4579
        %v4581 = vsel %vm4470, %v4546, 0.0
        %v4582 = vadd.f32 %v4580, %v4581
        %v4583 = vsel %vm4470, %v4547, 0.0
        %v4584 = vadd.f32 %v4582, %v4583
        %v4585 = vsel %vm4470, %v4548, 0.0
        %v4586 = vadd.f32 %v4584, %v4585
        %v4587 = vsel %vm4470, %v4549, 0.0
        %v4588 = vadd.f32 %v4586, %v4587
        %v4589 = vsel %vm4470, %v4550, 0.0
        %v4590 = vadd.f32 %v4588, %v4589
        %v4591 = vsel %vm4470, %v4551, 0.0
        %v4592 = vadd.f32 %v4590, %v4591
        %v4593 = vsel %vm4470, %v4552, 0.0
        %v4594 = vadd.f32 %v4592, %v4593
        %v4595 = vsel %vm4470, %v4553, 0.0
        %v4596 = vadd.f32 %v4594, %v4595
        %v4597 = vsel %vm4470, %v4554, 0.0
        %v4598 = vadd.f32 %v4596, %v4597
        %v4599 = vsel %vm4470, %v4555, 0.0
        %v4600 = vadd.f32 %v4598, %v4599
        %v4601 = vsel %vm4470, %v4556, 0.0
        %v4602 = vadd.f32 %v4600, %v4601
        %v4603 = vsel %vm4470, %v4557, 0.0
        %v4604 = vadd.f32 %v4602, %v4603
        %v4605 = vsel %vm4470, %v4558, 0.0
        %v4606 = vadd.f32 %v4604, %v4605
        %v4607 = vsel %vm4470, %v4559, 0.0
        %v4608 = vadd.f32 %v4606, %v4607
        %v4609 = vsel %vm4470, %v4560, 0.0
        %v4610 = vadd.f32 %v4608, %v4609
        %v4611 = vsel %vm4470, %v4561, 0.0
        %v4612 = vadd.f32 %v4610, %v4611
        %v4613 = vsel %vm4470, %v4562, 0.0
        %v4614 = vadd.f32 %v4612, %v4613
        %v4615 = vsel %vm4470, %v4563, 0.0
        %v4616 = vadd.f32 %v4614, %v4615
        %v4617 = vsel %vm4470, %v4564, 0.0
        %v4618 = vadd.f32 %v4616, %v4617
        %v4619 = vsel %vm4470, %v4565, 0.0
        %v4620 = vadd.f32 %v4618, %v4619
        %v4621 = vsel %vm4470, %v4566, 0.0
        %v4622 = vadd.f32 %v4620, %v4621
        %v4623 = vsel %vm4470, %v4567, 0.0
        %v4624 = vadd.f32 %v4622, %v4623
        %v4625 = vsel %vm4470, %v4568, 0.0
        %v4626 = vadd.f32 %v4624, %v4625
        %v4627 = vsel %vm4470, %v4569, 0.0
        %v4628 = vadd.f32 %v4626, %v4627
        %v4629 = vsel %vm4470, %v4570, 0.0
        %v4630 = vadd.f32 %v4628, %v4629
        %v4631 = vsel %vm4470, %v4571, 0.0
        %v4632 = vadd.f32 %v4630, %v4631
        %v4633 = vsel %vm4470, %v4572, 0.0
        %v4634 = vadd.f32 %v4632, %v4633
        %v4635 = vsel %vm4470, %v4573, 0.0
        %v4636 = vadd.f32 %v4634, %v4635
        %v4637 = vrot.slane %v4636, 4
        %v4638 = vadd.f32 %v4636, %v4637
        %v4639 = vrot.slane %v4638, 2
        %v4640 = vadd.f32 %v4638, %v4639
        %v4641 = vrot.slane %v4640, 1
        %v4642 = vadd.f32 %v4640, %v4641
        %4643 = vst.msk [vmem:[%s155 + $0x1] sm:$0x1] %vm4540, %v4642
        %v4644 = vpack.c.bf16 %v4347, %v4344
        %v4645 = vpack.c.bf16 %v4355, %v4352
        %v4646 = vpack.c.bf16 %v4363, %v4360
        %v4647 = vpack.c.bf16 %v4371, %v4368
        %v4648 = vpack.c.bf16 %v4379, %v4376
        %v4649 = vpack.c.bf16 %v4387, %v4384
        %v4650 = vpack.c.bf16 %v4395, %v4392
        %v4651 = vpack.c.bf16 %v4403, %v4400
        %v4652 = vpack.c.bf16 %v4411, %v4408
        %v4653 = vpack.c.bf16 %v4419, %v4416
        %v4654 = vpack.c.bf16 %v4427, %v4424
        %v4655 = vpack.c.bf16 %v4435, %v4432
        %v4656 = vpack.c.bf16 %v4443, %v4440
        %v4657 = vpack.c.bf16 %v4451, %v4448
        %v4658 = vpack.c.bf16 %v4459, %v4456
        %v4659 = vpack.c.bf16 %v4467, %v4464
        %v4676 = vunpack.c.l.b16 %v4644
        %v4677 = vunpack.c.h.b16 %v4644
        %v4678 = vunpack.c.l.b16 %v4645
        %v4679 = vunpack.c.h.b16 %v4645
        %v4680 = vunpack.c.l.b16 %v4646
        %v4681 = vunpack.c.h.b16 %v4646
        %v4682 = vunpack.c.l.b16 %v4647
        %v4683 = vunpack.c.h.b16 %v4647
        %v4684 = vunpack.c.l.b16 %v4648
        %v4685 = vunpack.c.h.b16 %v4648
        %v4686 = vunpack.c.l.b16 %v4649
        %v4687 = vunpack.c.h.b16 %v4649
        %v4688 = vunpack.c.l.b16 %v4650
        %v4689 = vunpack.c.h.b16 %v4650
        %v4690 = vunpack.c.l.b16 %v4651
        %v4691 = vunpack.c.h.b16 %v4651
        %v4692 = vunpack.c.l.b16 %v4652
        %v4693 = vunpack.c.h.b16 %v4652
        %v4694 = vunpack.c.l.b16 %v4653
        %v4695 = vunpack.c.h.b16 %v4653
        %v4696 = vunpack.c.l.b16 %v4654
        %v4697 = vunpack.c.h.b16 %v4654
        %v4698 = vunpack.c.l.b16 %v4655
        %v4699 = vunpack.c.h.b16 %v4655
        %v4700 = vunpack.c.l.b16 %v4656
        %v4701 = vunpack.c.h.b16 %v4656
        %v4702 = vunpack.c.l.b16 %v4657
        %v4703 = vunpack.c.h.b16 %v4657
        %v4704 = vunpack.c.l.b16 %v4658
        %v4705 = vunpack.c.h.b16 %v4658
        %v4706 = vunpack.c.l.b16 %v4659
        %v4707 = vunpack.c.h.b16 %v4659
        %v4708 = vpack.c.b16 %v4676, %v4676
        %v4709 = vpack.c.b16 %v4677, %v4677
        %v4710 = vpack.c.b16 %v4678, %v4678
        %v4711 = vpack.c.b16 %v4679, %v4679
        %v4712 = vpack.c.b16 %v4680, %v4680
        %v4713 = vpack.c.b16 %v4681, %v4681
        %v4714 = vpack.c.b16 %v4682, %v4682
        %v4715 = vpack.c.b16 %v4683, %v4683
        %v4716 = vpack.c.b16 %v4684, %v4684
        %v4717 = vpack.c.b16 %v4685, %v4685
        %v4718 = vpack.c.b16 %v4686, %v4686
        %v4719 = vpack.c.b16 %v4687, %v4687
        %v4720 = vpack.c.b16 %v4688, %v4688
        %v4721 = vpack.c.b16 %v4689, %v4689
        %v4722 = vpack.c.b16 %v4690, %v4690
        %v4723 = vpack.c.b16 %v4691, %v4691
        %v4724 = vpack.c.b16 %v4692, %v4692
        %v4725 = vpack.c.b16 %v4693, %v4693
        %v4726 = vpack.c.b16 %v4694, %v4694
        %v4727 = vpack.c.b16 %v4695, %v4695
        %v4728 = vpack.c.b16 %v4696, %v4696
        %v4729 = vpack.c.b16 %v4697, %v4697
        %v4730 = vpack.c.b16 %v4698, %v4698
        %v4731 = vpack.c.b16 %v4699, %v4699
        %v4732 = vpack.c.b16 %v4700, %v4700
        %v4733 = vpack.c.b16 %v4701, %v4701
        %v4734 = vpack.c.b16 %v4702, %v4702
        %v4735 = vpack.c.b16 %v4703, %v4703
        %v4736 = vpack.c.b16 %v4704, %v4704
        %v4737 = vpack.c.b16 %v4705, %v4705
        %v4738 = vpack.c.b16 %v4706, %v4706
        %v4739 = vpack.c.b16 %v4707, %v4707
        %vm4772 = vcmask 60416
        %4773 = vst.msk [vmem:[%s148] sm:$0xf] %vm4772, %v4708
        %4774 = vst.msk [vmem:[%s148 + $0x4] sm:$0xf] %vm4772, %v4709
        %4775 = vst.msk [vmem:[%s148 + $0x8] sm:$0xf] %vm4772, %v4710
        %4776 = vst.msk [vmem:[%s148 + $0xc] sm:$0xf] %vm4772, %v4711
        %4777 = vst.msk [vmem:[%s148 + $0x10] sm:$0xf] %vm4772, %v4712
        %4778 = vst.msk [vmem:[%s148 + $0x14] sm:$0xf] %vm4772, %v4713
        %4779 = vst.msk [vmem:[%s148 + $0x18] sm:$0xf] %vm4772, %v4714
        %4780 = vst.msk [vmem:[%s148 + $0x1c] sm:$0xf] %vm4772, %v4715
        %4781 = vst.msk [vmem:[%s148 + $0x20] sm:$0xf] %vm4772, %v4716
        %4782 = vst.msk [vmem:[%s148 + $0x24] sm:$0xf] %vm4772, %v4717
        %4783 = vst.msk [vmem:[%s148 + $0x28] sm:$0xf] %vm4772, %v4718
        %4784 = vst.msk [vmem:[%s148 + $0x2c] sm:$0xf] %vm4772, %v4719
        %4785 = vst.msk [vmem:[%s148 + $0x30] sm:$0xf] %vm4772, %v4720
        %4786 = vst.msk [vmem:[%s148 + $0x34] sm:$0xf] %vm4772, %v4721
        %4787 = vst.msk [vmem:[%s148 + $0x38] sm:$0xf] %vm4772, %v4722
        %4788 = vst.msk [vmem:[%s148 + $0x3c] sm:$0xf] %vm4772, %v4723
        %4789 = vst.msk [vmem:[%s148 + $0x40] sm:$0xf] %vm4772, %v4724
        %4790 = vst.msk [vmem:[%s148 + $0x44] sm:$0xf] %vm4772, %v4725
        %4791 = vst.msk [vmem:[%s148 + $0x48] sm:$0xf] %vm4772, %v4726
        %4792 = vst.msk [vmem:[%s148 + $0x4c] sm:$0xf] %vm4772, %v4727
        %4793 = vst.msk [vmem:[%s148 + $0x50] sm:$0xf] %vm4772, %v4728
        %4794 = vst.msk [vmem:[%s148 + $0x54] sm:$0xf] %vm4772, %v4729
        %4795 = vst.msk [vmem:[%s148 + $0x58] sm:$0xf] %vm4772, %v4730
        %4796 = vst.msk [vmem:[%s148 + $0x5c] sm:$0xf] %vm4772, %v4731
        %4797 = vst.msk [vmem:[%s148 + $0x60] sm:$0xf] %vm4772, %v4732
        %4798 = vst.msk [vmem:[%s148 + $0x64] sm:$0xf] %vm4772, %v4733
        %4799 = vst.msk [vmem:[%s148 + $0x68] sm:$0xf] %vm4772, %v4734
        %4800 = vst.msk [vmem:[%s148 + $0x6c] sm:$0xf] %vm4772, %v4735
        %4801 = vst.msk [vmem:[%s148 + $0x70] sm:$0xf] %vm4772, %v4736
        %4802 = vst.msk [vmem:[%s148 + $0x74] sm:$0xf] %vm4772, %v4737
        %4803 = vst.msk [vmem:[%s148 + $0x78] sm:$0xf] %vm4772, %v4738
        %4804 = vst.msk [vmem:[%s148 + $0x7c] sm:$0xf] %vm4772, %v4739
        %s4805 = sand.u32 %s68, 1
        %s4806 = sand.u32 %s68, 1
        %s4807 = smul.addr %s4806, 128
        %s4808 = scalar_lea.vmem [#allocation4], %s4807
        %s4809 = sand.u32 %s94, 1
        %s4810 = scalar_lea.sflag [#allocation6], %s4809
        %s4811 = sand.u32 %s94, 1
        %s4812 = smul.addr %s4811, 2
        %s4813 = scalar_lea.vmem [#allocation5], %s4812
        // Predicated region
        $region37: #{tpu_custom_call.1} parent=27 // pred_check
          %p4814 = pneg %p78
        $region38: #{tpu_custom_call.1} parent=27 // pred_check_branch
          %4816 = sbr.rel (%p4814) target = $region40
        $region39: #{tpu_custom_call.1} parent=27 // pred_region
          %s4817 = smul.u32 8, %s18
          %s4818 = smul.addr %s4817, 2
          %s4819 = smul.addr %s4818, 4
          %s4820 = scalar_lea.vmem %s2, %s4819
          // Predicated region
          $region41: #{tpu_custom_call.1} parent=39 // pred_check
            _
          $region42: #{tpu_custom_call.1} parent=39 // pred_check_branch
            %4822 = sbr.rel (0) target = $region44
          $region43: #{tpu_custom_call.1} parent=39 // pred_region
            // Predicated region
            $region45: #{tpu_custom_call.1} parent=43 // pred_check
              _
            $region46: #{tpu_custom_call.1} parent=43 // pred_check_branch
              %4824 = sbr.rel target = $region48
            $region47: #{tpu_custom_call.1} parent=43 // pred_region
              // Predicated region
              $region60: #{tpu_custom_call.1} parent=47 // pred_check
                _
              $region61: #{tpu_custom_call.1} parent=47 // pred_check_branch
                %4901 = sbr.rel (0) target = $region63
              $region62: #{tpu_custom_call.1} parent=47 // pred_region
                loop: start=0, step=1, limit=1
                $region64: #{tpu_custom_call.1} parent=62 // loop_pre_header
                  _
                $region65: #{tpu_custom_call.1} parent=62 // loop_header
                  %s4903 = sphi 0, %s4907
                  %p4904 = scmp.ge.s32.totalorder %s4903, 1
                  %s4908 = sphi %s4808, %s4808
                  %s4909 = sphi %s4820, %s4820
                $region66: #{tpu_custom_call.1} parent=62 // loop_header_branch
                  %4906 = sbr.rel (%p4904) target = $region70
                $region67: #{tpu_custom_call.1} parent=62 // loop_body
                  _
                $region68: #{tpu_custom_call.1} parent=62 // loop_footer
                  %s4907 = sadd.s32 1, %s4903
                $region69: #{tpu_custom_call.1} parent=62 // loop_footer_branch
                  %4902 = sbr.rel target = $region65
                $region70: #{tpu_custom_call.1} parent=62 // loop_exit
                  _
                loop: start=0, step=1, limit=1
                $region71: #{tpu_custom_call.1} parent=62 // loop_pre_header
                  _
                $region72: #{tpu_custom_call.1} parent=62 // loop_header
                  %s4912 = sphi 0, %s4916
                  %p4913 = scmp.ge.s32.totalorder %s4912, 1
                  %s4917 = sphi %s4808, %s4808
                  %s4918 = sphi %s4820, %s4820
                $region73: #{tpu_custom_call.1} parent=62 // loop_header_branch
                  %4915 = sbr.rel (%p4913) target = $region77
                $region74: #{tpu_custom_call.1} parent=62 // loop_body
                  %v4919 = vld [vmem:[%s4917] sm:$0xf]
                  %4920 = vst [vmem:[%s4918] sm:$0xf] %v4919
                  %v4921 = vld [vmem:[%s4917 + $0x4] sm:$0xf]
                  %4922 = vst [vmem:[%s4918 + $0x4] sm:$0xf] %v4921
                  %v4923 = vld [vmem:[%s4917 + $0x8] sm:$0xf]
                  %4924 = vst [vmem:[%s4918 + $0x8] sm:$0xf] %v4923
                  %v4925 = vld [vmem:[%s4917 + $0xc] sm:$0xf]
                  %4926 = vst [vmem:[%s4918 + $0xc] sm:$0xf] %v4925
                  %v4927 = vld [vmem:[%s4917 + $0x10] sm:$0xf]
                  %4928 = vst [vmem:[%s4918 + $0x10] sm:$0xf] %v4927
                  %v4929 = vld [vmem:[%s4917 + $0x14] sm:$0xf]
                  %4930 = vst [vmem:[%s4918 + $0x14] sm:$0xf] %v4929
                  %v4931 = vld [vmem:[%s4917 + $0x18] sm:$0xf]
                  %4932 = vst [vmem:[%s4918 + $0x18] sm:$0xf] %v4931
                  %v4933 = vld [vmem:[%s4917 + $0x1c] sm:$0xf]
                  %4934 = vst [vmem:[%s4918 + $0x1c] sm:$0xf] %v4933
                  %v4935 = vld [vmem:[%s4917 + $0x20] sm:$0xf]
                  %4936 = vst [vmem:[%s4918 + $0x20] sm:$0xf] %v4935
                  %v4937 = vld [vmem:[%s4917 + $0x24] sm:$0xf]
                  %4938 = vst [vmem:[%s4918 + $0x24] sm:$0xf] %v4937
                  %v4939 = vld [vmem:[%s4917 + $0x28] sm:$0xf]
                  %4940 = vst [vmem:[%s4918 + $0x28] sm:$0xf] %v4939
                  %v4941 = vld [vmem:[%s4917 + $0x2c] sm:$0xf]
                  %4942 = vst [vmem:[%s4918 + $0x2c] sm:$0xf] %v4941
                  %v4943 = vld [vmem:[%s4917 + $0x30] sm:$0xf]
                  %4944 = vst [vmem:[%s4918 + $0x30] sm:$0xf] %v4943
                  %v4945 = vld [vmem:[%s4917 + $0x34] sm:$0xf]
                  %4946 = vst [vmem:[%s4918 + $0x34] sm:$0xf] %v4945
                  %v4947 = vld [vmem:[%s4917 + $0x38] sm:$0xf]
                  %4948 = vst [vmem:[%s4918 + $0x38] sm:$0xf] %v4947
                  %v4949 = vld [vmem:[%s4917 + $0x3c] sm:$0xf]
                  %4950 = vst [vmem:[%s4918 + $0x3c] sm:$0xf] %v4949
                  %v4951 = vld [vmem:[%s4917 + $0x40] sm:$0xf]
                  %4952 = vst [vmem:[%s4918 + $0x80] sm:$0xf] %v4951
                  %v4953 = vld [vmem:[%s4917 + $0x44] sm:$0xf]
                  %4954 = vst [vmem:[%s4918 + $0x84] sm:$0xf] %v4953
                  %v4955 = vld [vmem:[%s4917 + $0x48] sm:$0xf]
                  %4956 = vst [vmem:[%s4918 + $0x88] sm:$0xf] %v4955
                  %v4957 = vld [vmem:[%s4917 + $0x4c] sm:$0xf]
                  %4958 = vst [vmem:[%s4918 + $0x8c] sm:$0xf] %v4957
                  %v4959 = vld [vmem:[%s4917 + $0x50] sm:$0xf]
                  %4960 = vst [vmem:[%s4918 + $0x90] sm:$0xf] %v4959
                  %v4961 = vld [vmem:[%s4917 + $0x54] sm:$0xf]
                  %4962 = vst [vmem:[%s4918 + $0x94] sm:$0xf] %v4961
                  %v4963 = vld [vmem:[%s4917 + $0x58] sm:$0xf]
                  %4964 = vst [vmem:[%s4918 + $0x98] sm:$0xf] %v4963
                  %v4965 = vld [vmem:[%s4917 + $0x5c] sm:$0xf]
                  %4966 = vst [vmem:[%s4918 + $0x9c] sm:$0xf] %v4965
                  %v4967 = vld [vmem:[%s4917 + $0x60] sm:$0xf]
                  %4968 = vst [vmem:[%s4918 + $0xa0] sm:$0xf] %v4967
                  %v4969 = vld [vmem:[%s4917 + $0x64] sm:$0xf]
                  %4970 = vst [vmem:[%s4918 + $0xa4] sm:$0xf] %v4969
                  %v4971 = vld [vmem:[%s4917 + $0x68] sm:$0xf]
                  %4972 = vst [vmem:[%s4918 + $0xa8] sm:$0xf] %v4971
                  %v4973 = vld [vmem:[%s4917 + $0x6c] sm:$0xf]
                  %4974 = vst [vmem:[%s4918 + $0xac] sm:$0xf] %v4973
                  %v4975 = vld [vmem:[%s4917 + $0x70] sm:$0xf]
                  %4976 = vst [vmem:[%s4918 + $0xb0] sm:$0xf] %v4975
                  %v4977 = vld [vmem:[%s4917 + $0x74] sm:$0xf]
                  %4978 = vst [vmem:[%s4918 + $0xb4] sm:$0xf] %v4977
                  %v4979 = vld [vmem:[%s4917 + $0x78] sm:$0xf]
                  %4980 = vst [vmem:[%s4918 + $0xb8] sm:$0xf] %v4979
                  %v4981 = vld [vmem:[%s4917 + $0x7c] sm:$0xf]
                  %4982 = vst [vmem:[%s4918 + $0xbc] sm:$0xf] %v4981
                $region75: #{tpu_custom_call.1} parent=62 // loop_footer
                  %s4916 = sadd.s32 1, %s4912
                $region76: #{tpu_custom_call.1} parent=62 // loop_footer_branch
                  %4911 = sbr.rel target = $region72
                $region77: #{tpu_custom_call.1} parent=62 // loop_exit
                  _
              $region63: #{tpu_custom_call.1} parent=47 // pred_fallthru
                _
            $region48: #{tpu_custom_call.1} parent=43 // pred_fallthru
              _
            // Predicated region
            $region49: #{tpu_custom_call.1} parent=43 // pred_check
              _
            $region50: #{tpu_custom_call.1} parent=43 // pred_check_branch
              %4826 = sbr.rel (0) target = $region52
            $region51: #{tpu_custom_call.1} parent=43 // pred_region
              loop: start=0, step=1, limit=1
              $region53: #{tpu_custom_call.1} parent=51 // loop_pre_header
                _
              $region54: #{tpu_custom_call.1} parent=51 // loop_header
                %s4829 = sphi 0, %s4833
                %p4830 = scmp.ge.s32.totalorder %s4829, 1
                %s4834 = sphi %s4808, %s4808
                %s4835 = sphi %s4820, %s4820
              $region55: #{tpu_custom_call.1} parent=51 // loop_header_branch
                %4832 = sbr.rel (%p4830) target = $region59
              $region56: #{tpu_custom_call.1} parent=51 // loop_body
                %v4836 = vld [vmem:[%s4834] sm:$0xf]
                %4837 = vst [vmem:[%s4835] sm:$0xf] %v4836
                %v4838 = vld [vmem:[%s4834 + $0x4] sm:$0xf]
                %4839 = vst [vmem:[%s4835 + $0x4] sm:$0xf] %v4838
                %v4840 = vld [vmem:[%s4834 + $0x8] sm:$0xf]
                %4841 = vst [vmem:[%s4835 + $0x8] sm:$0xf] %v4840
                %v4842 = vld [vmem:[%s4834 + $0xc] sm:$0xf]
                %4843 = vst [vmem:[%s4835 + $0xc] sm:$0xf] %v4842
                %v4844 = vld [vmem:[%s4834 + $0x10] sm:$0xf]
                %4845 = vst [vmem:[%s4835 + $0x10] sm:$0xf] %v4844
                %v4846 = vld [vmem:[%s4834 + $0x14] sm:$0xf]
                %4847 = vst [vmem:[%s4835 + $0x14] sm:$0xf] %v4846
                %v4848 = vld [vmem:[%s4834 + $0x18] sm:$0xf]
                %4849 = vst [vmem:[%s4835 + $0x18] sm:$0xf] %v4848
                %v4850 = vld [vmem:[%s4834 + $0x1c] sm:$0xf]
                %4851 = vst [vmem:[%s4835 + $0x1c] sm:$0xf] %v4850
                %v4852 = vld [vmem:[%s4834 + $0x20] sm:$0xf]
                %4853 = vst [vmem:[%s4835 + $0x20] sm:$0xf] %v4852
                %v4854 = vld [vmem:[%s4834 + $0x24] sm:$0xf]
                %4855 = vst [vmem:[%s4835 + $0x24] sm:$0xf] %v4854
                %v4856 = vld [vmem:[%s4834 + $0x28] sm:$0xf]
                %4857 = vst [vmem:[%s4835 + $0x28] sm:$0xf] %v4856
                %v4858 = vld [vmem:[%s4834 + $0x2c] sm:$0xf]
                %4859 = vst [vmem:[%s4835 + $0x2c] sm:$0xf] %v4858
                %v4860 = vld [vmem:[%s4834 + $0x30] sm:$0xf]
                %4861 = vst [vmem:[%s4835 + $0x30] sm:$0xf] %v4860
                %v4862 = vld [vmem:[%s4834 + $0x34] sm:$0xf]
                %4863 = vst [vmem:[%s4835 + $0x34] sm:$0xf] %v4862
                %v4864 = vld [vmem:[%s4834 + $0x38] sm:$0xf]
                %4865 = vst [vmem:[%s4835 + $0x38] sm:$0xf] %v4864
                %v4866 = vld [vmem:[%s4834 + $0x3c] sm:$0xf]
                %4867 = vst [vmem:[%s4835 + $0x3c] sm:$0xf] %v4866
                %v4868 = vld [vmem:[%s4834 + $0x40] sm:$0xf]
                %4869 = vst [vmem:[%s4835 + $0x80] sm:$0xf] %v4868
                %v4870 = vld [vmem:[%s4834 + $0x44] sm:$0xf]
                %4871 = vst [vmem:[%s4835 + $0x84] sm:$0xf] %v4870
                %v4872 = vld [vmem:[%s4834 + $0x48] sm:$0xf]
                %4873 = vst [vmem:[%s4835 + $0x88] sm:$0xf] %v4872
                %v4874 = vld [vmem:[%s4834 + $0x4c] sm:$0xf]
                %4875 = vst [vmem:[%s4835 + $0x8c] sm:$0xf] %v4874
                %v4876 = vld [vmem:[%s4834 + $0x50] sm:$0xf]
                %4877 = vst [vmem:[%s4835 + $0x90] sm:$0xf] %v4876
                %v4878 = vld [vmem:[%s4834 + $0x54] sm:$0xf]
                %4879 = vst [vmem:[%s4835 + $0x94] sm:$0xf] %v4878
                %v4880 = vld [vmem:[%s4834 + $0x58] sm:$0xf]
                %4881 = vst [vmem:[%s4835 + $0x98] sm:$0xf] %v4880
                %v4882 = vld [vmem:[%s4834 + $0x5c] sm:$0xf]
                %4883 = vst [vmem:[%s4835 + $0x9c] sm:$0xf] %v4882
                %v4884 = vld [vmem:[%s4834 + $0x60] sm:$0xf]
                %4885 = vst [vmem:[%s4835 + $0xa0] sm:$0xf] %v4884
                %v4886 = vld [vmem:[%s4834 + $0x64] sm:$0xf]
                %4887 = vst [vmem:[%s4835 + $0xa4] sm:$0xf] %v4886
                %v4888 = vld [vmem:[%s4834 + $0x68] sm:$0xf]
                %4889 = vst [vmem:[%s4835 + $0xa8] sm:$0xf] %v4888
                %v4890 = vld [vmem:[%s4834 + $0x6c] sm:$0xf]
                %4891 = vst [vmem:[%s4835 + $0xac] sm:$0xf] %v4890
                %v4892 = vld [vmem:[%s4834 + $0x70] sm:$0xf]
                %4893 = vst [vmem:[%s4835 + $0xb0] sm:$0xf] %v4892
                %v4894 = vld [vmem:[%s4834 + $0x74] sm:$0xf]
                %4895 = vst [vmem:[%s4835 + $0xb4] sm:$0xf] %v4894
                %v4896 = vld [vmem:[%s4834 + $0x78] sm:$0xf]
                %4897 = vst [vmem:[%s4835 + $0xb8] sm:$0xf] %v4896
                %v4898 = vld [vmem:[%s4834 + $0x7c] sm:$0xf]
                %4899 = vst [vmem:[%s4835 + $0xbc] sm:$0xf] %v4898
              $region57: #{tpu_custom_call.1} parent=51 // loop_footer
                %s4833 = sadd.s32 1, %s4829
              $region58: #{tpu_custom_call.1} parent=51 // loop_footer_branch
                %4828 = sbr.rel target = $region54
              $region59: #{tpu_custom_call.1} parent=51 // loop_exit
                _
            $region52: #{tpu_custom_call.1} parent=43 // pred_fallthru
              _
          $region44: #{tpu_custom_call.1} parent=39 // pred_fallthru
            _
          %4983 = vnop
        $region40: #{tpu_custom_call.1} parent=27 // pred_fallthru
          _
        // Predicated region
        $region78: #{tpu_custom_call.1} parent=27 // pred_check
          %p4984 = pneg %p104
        $region79: #{tpu_custom_call.1} parent=27 // pred_check_branch
          %4986 = sbr.rel (%p4984) target = $region81
        $region80: #{tpu_custom_call.1} parent=27 // pred_region
          %s4988 = ssub.s32 32, 32
          %4989 = vsyncadd %s4810, %s4988
          %s4990 = smul.addr %s18, 32
          %s4991 = scalar_lea.hbm %s3, %s4990
          %s4993 = sshll.u32 %s4813, 4
          %s4994 = int_to_ptr.vmem [resolvable:$true] %s4993
          %4996 = dma.vmem_to_hbm [thread:$0]  %s4994, 32, %s4991, %s4810
        $region81: #{tpu_custom_call.1} parent=27 // pred_fallthru
          _
      $region28: #{tpu_custom_call.1} parent=5 // pred_fallthru
        _
      %p4997 = scmp.le.s32.totalorder 2, %s13
      // Predicated region
      $region82: #{tpu_custom_call.1} parent=5 // pred_check
        %p4998 = pneg %p4997
      $region83: #{tpu_custom_call.1} parent=5 // pred_check_branch
        %5000 = sbr.rel (%p4998) target = $region85
      $region84: #{tpu_custom_call.1} parent=5 // pred_region
        %s5001 = ssub.s32 %s13, 2
        // Predicated region
        $region86: #{tpu_custom_call.1} parent=84 // pred_check
          %p5002 = pneg %p84
        $region87: #{tpu_custom_call.1} parent=84 // pred_check_branch
          %5004 = sbr.rel (%p5002) target = $region89
        $region88: #{tpu_custom_call.1} parent=84 // pred_region
          %s5005 = sand.u32 %s69, 1
          %s5006 = sand.u32 %s69, 1
          %s5007 = smul.addr %s5006, 128
          %s5008 = scalar_lea.vmem [#allocation4], %s5007
        $region89: #{tpu_custom_call.1} parent=84 // pred_fallthru
          _
        // Predicated region
        $region90: #{tpu_custom_call.1} parent=84 // pred_check
          %p5009 = pneg %p110
        $region91: #{tpu_custom_call.1} parent=84 // pred_check_branch
          %5011 = sbr.rel (%p5009) target = $region93
        $region92: #{tpu_custom_call.1} parent=84 // pred_region
          %s5012 = sand.u32 %s95, 1
          %s5013 = scalar_lea.sflag [#allocation6], %s5012
          %s5014 = sand.u32 %s95, 1
          %s5015 = smul.addr %s5014, 2
          %s5016 = scalar_lea.vmem [#allocation5], %s5015
          %5017 = dma.done %s5013, 32
        $region93: #{tpu_custom_call.1} parent=84 // pred_fallthru
          _
      $region85: #{tpu_custom_call.1} parent=5 // pred_fallthru
        _
    $region6: #{tpu_custom_call.1} parent=1 // loop_footer
      %s17 = sadd.s32 1, %s13
    $region7: #{tpu_custom_call.1} parent=1 // loop_footer_branch
      %12 = sbr.rel target = $region3
    $region8: #{tpu_custom_call.1} parent=1 // loop_exit
      _
    %5018 = vsyncpa [#allocation6], 1
    %s5019 = scalar_lea.sflag [#allocation6], 1
    %5020 = vsyncpa %s5019, 1

</llo_original>
